<compile_context>
chip_gen: v5e
topology: v5e:2x2
jax: 0.10.0
libtpu: 0.0.40
codegen_flags: <defaults>
</compile_context>

<pallas_src>
import numpy as np

import jax
import jax.numpy as jnp
from jax.experimental import pallas as pl
from jax.experimental.pallas import tpu as pltpu


# ----------------------------------------------------------------------------
# The fused kernel: whole LeNet forward for one batch element per grid step.
# ----------------------------------------------------------------------------
def _lenet_kernel(x_ref, m1_ref, bc1_ref, p1r_ref, p1c_ref,
                  m2_ref, bc2_ref, p2r_ref, p2c_ref,
                  w1_ref, b1_ref, w2_ref, b2_ref, w3_ref, b3_ref, w4_ref, b4_ref,
                  o_ref, p1s):
    f32 = jnp.float32

    def mm(a, b):
        return jnp.dot(a, b, preferred_element_type=f32)

    def sigmoid(y):
        # exp runs on the EUP; the divide is a handful of vregs, negligible here.
        return 1.0 / (1.0 + jnp.exp(-y))

    # ---- conv1 (1->6, 5x5, pad=2) + sigmoid + 2x2 avg-pool --------------------
    # acc1[i, c*28 + j] = conv1 pre-activation of channel c at pixel (i, j).
    acc1 = mm(x_ref[0, 0:28, :], m1_ref[0])
    for di in range(1, 5):
        acc1 = acc1 + mm(x_ref[0, di:di + 28, :], m1_ref[di])
    s1 = sigmoid(acc1 + bc1_ref[...])                       # (28, 168)
    # Pool rows with (14,28) matrix, pool columns per channel with block-diag (168,84).
    p1s[...] = mm(mm(p1r_ref[...], s1), p1c_ref[...])       # (14, 84): [ii, c*14+jj]

    # ---- conv2 (6->16, 5x5, valid) + sigmoid + 2x2 avg-pool --------------------
    # acc2[i, co*10 + j] = conv2 pre-activation of channel co at pixel (i, j).
    acc2 = jnp.zeros((10, 160), f32)
    for ci in range(6):
        for di in range(5):
            patch = p1s[di:di + 10, ci * 14:(ci + 1) * 14]  # (10, 14)
            acc2 = acc2 + mm(patch, m2_ref[ci, di])
    s2 = sigmoid(acc2 + bc2_ref[...])                       # (10, 160)
    h2 = mm(mm(p2r_ref[...], s2), p2c_ref[...])             # (5, 80): [ii, co*5+jj]

    # ---- fused FC stack (flatten folded into fc1; lanes padded to 128) --------
    y = mm(h2[0:1, :], w1_ref[0])
    for ii in range(1, 5):
        y = y + mm(h2[ii:ii + 1, :], w1_ref[ii])
    h = sigmoid(y + b1_ref[...])                            # (1, 128)
    h = sigmoid(mm(h, w2_ref[...]) + b2_ref[...])           # (1, 128)
    h = sigmoid(mm(h, w3_ref[...]) + b3_ref[...])           # (1, 128)
    logits = mm(h, w4_ref[...]) + b4_ref[...]               # (1, 128)
    o_ref[0, :, :] = logits[:, 0:10]


# ----------------------------------------------------------------------------
# One-time parameter reorganization (done outside the jitted forward).
# ----------------------------------------------------------------------------
def prepare_params(params):
    f32 = jnp.float32

    # conv1 as 5 shifted matmuls: m1[di, v, co*28+j] = w1[co,0,di,v-j] (0<=v-j<5)
    w1 = params["conv1_w"][:, 0]                           # (6, 5, 5) [co, di, dj]
    v = np.arange(32)[:, None]
    j = np.arange(28)[None, :]
    d = v - j
    mask1 = jnp.asarray((d >= 0) & (d < 5), f32)           # (32, 28)
    t1 = w1[:, :, np.clip(d, 0, 4)] * mask1                # (6, 5, 32, 28) [co,di,v,j]
    m1 = jnp.transpose(t1, (1, 2, 0, 3)).reshape(5, 32, 6 * 28)
    bc1 = jnp.repeat(params["conv1_b"], 28).reshape(1, 6 * 28).astype(f32)

    # 2x2 average pooling as matmuls.
    def pool_rows(n):
        a = np.zeros((n // 2, n), np.float32)
        a[np.arange(n // 2), 2 * np.arange(n // 2)] = 0.5
        a[np.arange(n // 2), 2 * np.arange(n // 2) + 1] = 0.5
        return a

    a28 = pool_rows(28)                                     # (14, 28)
    p1c = np.kron(np.eye(6, dtype=np.float32), a28.T)       # (168, 84) block-diag
    a10 = pool_rows(10)                                     # (5, 10)
    p2c = np.kron(np.eye(16, dtype=np.float32), a10.T)      # (160, 80) block-diag

    # conv2 as 30 shifted matmuls: m2[ci,di,v,co*10+j] = w2[co,ci,di,v-j]
    w2 = params["conv2_w"]                                  # (16, 6, 5, 5)
    v2 = np.arange(14)[:, None]
    j2 = np.arange(10)[None, :]
    d2 = v2 - j2
    mask2 = jnp.asarray((d2 >= 0) & (d2 < 5), f32)          # (14, 10)
    t2 = w2[:, :, :, np.clip(d2, 0, 4)] * mask2             # (16,6,5,14,10) [co,ci,di,v,j]
    m2 = jnp.transpose(t2, (1, 2, 3, 0, 4)).reshape(6, 5, 14, 16 * 10)
    bc2 = jnp.repeat(params["conv2_b"], 10).reshape(1, 16 * 10).astype(f32)

    # FC weights: fold the channel-major Flatten into fc1, pad lanes/rows to 128.
    # (Zero-padded *rows* guarantee padded activation lanes never leak forward.)
    w1e = params["fc1_w"].reshape(16, 5, 5, 120)            # [co, ii, jj, n]
    w1e = jnp.transpose(w1e, (1, 0, 2, 3)).reshape(5, 80, 120)
    w1e = jnp.pad(w1e, ((0, 0), (0, 0), (0, 8)))            # (5, 80, 128)
    b1 = jnp.pad(params["fc1_b"], (0, 8)).reshape(1, 128)
    w2f = jnp.pad(params["fc2_w"], ((0, 8), (0, 44)))       # (128, 128)
    b2 = jnp.pad(params["fc2_b"], (0, 44)).reshape(1, 128)
    w3f = jnp.pad(params["fc3_w"], ((0, 44), (0, 88)))      # (128, 128)
    b3 = jnp.pad(params["fc3_b"], (0, 88)).reshape(1, 128)
    w4f = jnp.pad(params["fc4_w"], ((0, 88), (0, 118)))     # (128, 128)
    b4 = jnp.pad(params["fc4_b"], (0, 118)).reshape(1, 128)

    return dict(
        m1=m1, bc1=bc1, a28=jnp.asarray(a28), p1c=jnp.asarray(p1c),
        m2=m2, bc2=bc2, a10=jnp.asarray(a10), p2c=jnp.asarray(p2c),
        w1=w1e, b1=b1, w2=w2f, b2=b2, w3=w3f, b3=b3, w4=w4f, b4=b4)


# ----------------------------------------------------------------------------
# Forward pass: pad the input, run the single fused kernel.
# ----------------------------------------------------------------------------
def lenet_forward(prep, x):
    B = x.shape[0]
    xp = jnp.pad(x[:, 0, :, :], ((0, 0), (2, 2), (2, 2)))   # conv1 padding=2 -> (B,32,32)

    out = pl.pallas_call(
        _lenet_kernel,
        out_shape=jax.ShapeDtypeStruct((B, 1, 10), jnp.float32),
        grid=(B,),
        in_specs=[
            pl.BlockSpec((1, 32, 32), lambda i: (i, 0, 0)),          # padded image
            pl.BlockSpec((5, 32, 168), lambda i: (0, 0, 0)),         # conv1 Toeplitz weights
            pl.BlockSpec((1, 168), lambda i: (0, 0)),                # conv1 bias per column
            pl.BlockSpec((14, 28), lambda i: (0, 0)),                # pool1 row matrix
            pl.BlockSpec((168, 84), lambda i: (0, 0)),               # pool1 column matrix
            pl.BlockSpec((6, 5, 14, 160), lambda i: (0, 0, 0, 0)),   # conv2 Toeplitz weights
            pl.BlockSpec((1, 160), lambda i: (0, 0)),                # conv2 bias per column
            pl.BlockSpec((5, 10), lambda i: (0, 0)),                 # pool2 row matrix
            pl.BlockSpec((160, 80), lambda i: (0, 0)),               # pool2 column matrix
            pl.BlockSpec((5, 80, 128), lambda i: (0, 0, 0)),         # fc1 (flatten folded in)
            pl.BlockSpec((1, 128), lambda i: (0, 0)),                # fc1 bias
            pl.BlockSpec((128, 128), lambda i: (0, 0)),              # fc2
            pl.BlockSpec((1, 128), lambda i: (0, 0)),                # fc2 bias
            pl.BlockSpec((128, 128), lambda i: (0, 0)),              # fc3
            pl.BlockSpec((1, 128), lambda i: (0, 0)),                # fc3 bias
            pl.BlockSpec((128, 128), lambda i: (0, 0)),              # fc4
            pl.BlockSpec((1, 128), lambda i: (0, 0)),                # fc4 bias
        ],
        out_specs=pl.BlockSpec((1, 1, 10), lambda i: (i, 0, 0)),
        scratch_shapes=[pltpu.VMEM((14, 84), jnp.float32)],          # pooled conv1 features
        compiler_params=pltpu.CompilerParams(
            dimension_semantics=("parallel",)),                      # v7x: batch over 2 TCs
    )(xp, prep["m1"], prep["bc1"], prep["a28"], prep["p1c"],
      prep["m2"], prep["bc2"], prep["a10"], prep["p2c"],
      prep["w1"], prep["b1"], prep["w2"], prep["b2"],
      prep["w3"], prep["b3"], prep["w4"], prep["b4"])
    return out.reshape(B, 10)


# ----------------------------------------------------------------------------
# Deterministic parameters + pure-JAX reference for self-verification.
# ----------------------------------------------------------------------------
def init_params(key):
    keys = jax.random.split(key, 12)
    scale = 0.1

    def w(k, shape):
        return scale * jax.random.normal(k, shape, dtype=jnp.float32)

    return {
        "conv1_w": w(keys[0], (6, 1, 5, 5)), "conv1_b": w(keys[1], (6,)),
        "conv2_w": w(keys[2], (16, 6, 5, 5)), "conv2_b": w(keys[3], (16,)),
        "fc1_w": w(keys[4], (16 * 5 * 5, 120)), "fc1_b": w(keys[5], (120,)),
        "fc2_w": w(keys[6], (120, 84)), "fc2_b": w(keys[7], (84,)),
        "fc3_w": w(keys[8], (84, 40)), "fc3_b": w(keys[9], (40,)),
        "fc4_w": w(keys[10], (40, 10)), "fc4_b": w(keys[11], (10,)),
    }


def reference_forward(params, x):
    hi = jax.lax.Precision.HIGHEST

    def conv(x, w, b, pad):
        y = jax.lax.conv_general_dilated(
            x, w, window_strides=(1, 1), padding=[(pad, pad), (pad, pad)],
            dimension_numbers=("NCHW", "OIHW", "NCHW"), precision=hi)
        return jax.nn.sigmoid(y + b[None, :, None, None])

    def pool(x):
        return 0.25 * jax.lax.reduce_window(
            x, 0.0, jax.lax.add, (1, 1, 2, 2), (1, 1, 2, 2), "VALID")

    h = pool(conv(x, params["conv1_w"], params["conv1_b"], 2))
    h = pool(conv(h, params["conv2_w"], params["conv2_b"], 0))
    h = h.reshape(x.shape[0], -1)
    h = jax.nn.sigmoid(jnp.dot(h, params["fc1_w"], precision=hi) + params["fc1_b"])
    h = jax.nn.sigmoid(jnp.dot(h, params["fc2_w"], precision=hi) + params["fc2_b"])
    h = jax.nn.sigmoid(jnp.dot(h, params["fc3_w"], precision=hi) + params["fc3_b"])
    return jnp.dot(h, params["fc4_w"], precision=hi) + params["fc4_b"]


if __name__ == "__main__":
    key = jax.random.PRNGKey(0)
    pkey, xkey = jax.random.split(key)
    params = init_params(pkey)
    prep = prepare_params(params)
    # The 16*5*5 flatten implies a 28x28 single-channel (MNIST-like) input.
    x = jax.random.normal(xkey, (2, 1, 28, 28), dtype=jnp.float32)

    out = jax.block_until_ready(jax.jit(lenet_forward)(prep, x))
    assert out.shape == (2, 10), out.shape
    assert out.dtype == jnp.float32

    ref = reference_forward(params, x)
    max_err = float(jnp.max(jnp.abs(out - ref)))
    assert max_err < 1e-2, f"mismatch vs reference: {max_err}"
    print("KERNEL_OK")
</pallas_src>

<mosaic_0001>
module attributes {stable_mosaic.version = 11 : i64} {
  func.func @_lenet_kernel(%arg0: i32, %arg1: memref<1x32x32xf32, #tpu.memory_space<vmem>>, %arg2: memref<5x32x168xf32, #tpu.memory_space<vmem>>, %arg3: memref<1x168xf32, #tpu.memory_space<vmem>>, %arg4: memref<14x28xf32, #tpu.memory_space<vmem>>, %arg5: memref<168x84xf32, #tpu.memory_space<vmem>>, %arg6: memref<6x5x14x160xf32, #tpu.memory_space<vmem>>, %arg7: memref<1x160xf32, #tpu.memory_space<vmem>>, %arg8: memref<5x10xf32, #tpu.memory_space<vmem>>, %arg9: memref<160x80xf32, #tpu.memory_space<vmem>>, %arg10: memref<5x80x128xf32, #tpu.memory_space<vmem>>, %arg11: memref<1x128xf32, #tpu.memory_space<vmem>>, %arg12: memref<128x128xf32, #tpu.memory_space<vmem>>, %arg13: memref<1x128xf32, #tpu.memory_space<vmem>>, %arg14: memref<128x128xf32, #tpu.memory_space<vmem>>, %arg15: memref<1x128xf32, #tpu.memory_space<vmem>>, %arg16: memref<128x128xf32, #tpu.memory_space<vmem>>, %arg17: memref<1x128xf32, #tpu.memory_space<vmem>>, %arg18: memref<1x1x10xf32, #tpu.memory_space<vmem>>, %arg19: memref<14x84xf32, #tpu.memory_space<vmem>>) attributes {dimension_semantics = [#tpu.dimension_semantics<parallel>], iteration_bounds = array<i64: 2>, scalar_prefetch = 0 : i64, scratch_operands = 1 : i64, tpu.core_type = #tpu.core_type<tc>, window_params = [{transform_indices = @transform_0, window_bounds = array<i64: 1, 32, 32>}, {pipeline_mode = #tpu.pipeline_mode<synchronous>, transform_indices = @transform_1, window_bounds = array<i64: 5, 32, 168>}, {pipeline_mode = #tpu.pipeline_mode<synchronous>, transform_indices = @transform_2, window_bounds = array<i64: 1, 168>}, {pipeline_mode = #tpu.pipeline_mode<synchronous>, transform_indices = @transform_3, window_bounds = array<i64: 14, 28>}, {pipeline_mode = #tpu.pipeline_mode<synchronous>, transform_indices = @transform_4, window_bounds = array<i64: 168, 84>}, {pipeline_mode = #tpu.pipeline_mode<synchronous>, transform_indices = @transform_5, window_bounds = array<i64: 6, 5, 14, 160>}, {pipeline_mode = #tpu.pipeline_mode<synchronous>, transform_indices = @transform_6, window_bounds = array<i64: 1, 160>}, {pipeline_mode = #tpu.pipeline_mode<synchronous>, transform_indices = @transform_7, window_bounds = array<i64: 5, 10>}, {pipeline_mode = #tpu.pipeline_mode<synchronous>, transform_indices = @transform_8, window_bounds = array<i64: 160, 80>}, {pipeline_mode = #tpu.pipeline_mode<synchronous>, transform_indices = @transform_9, window_bounds = array<i64: 5, 80, 128>}, {pipeline_mode = #tpu.pipeline_mode<synchronous>, transform_indices = @transform_10, window_bounds = array<i64: 1, 128>}, {pipeline_mode = #tpu.pipeline_mode<synchronous>, transform_indices = @transform_11, window_bounds = array<i64: 128, 128>}, {pipeline_mode = #tpu.pipeline_mode<synchronous>, transform_indices = @transform_12, window_bounds = array<i64: 1, 128>}, {pipeline_mode = #tpu.pipeline_mode<synchronous>, transform_indices = @transform_13, window_bounds = array<i64: 128, 128>}, {pipeline_mode = #tpu.pipeline_mode<synchronous>, transform_indices = @transform_14, window_bounds = array<i64: 1, 128>}, {pipeline_mode = #tpu.pipeline_mode<synchronous>, transform_indices = @transform_15, window_bounds = array<i64: 128, 128>}, {pipeline_mode = #tpu.pipeline_mode<synchronous>, transform_indices = @transform_16, window_bounds = array<i64: 1, 128>}, {transform_indices = @transform_17, window_bounds = array<i64: 1, 1, 10>}]} {
    %c0 = arith.constant 0 : index
    %c0_0 = arith.constant 0 : index
    %c0_1 = arith.constant 0 : index
    %0 = vector.load %arg1[%c0, %c0_0, %c0_1] : memref<1x32x32xf32, #tpu.memory_space<vmem>>, vector<1x28x32xf32>
    %1 = vector.shape_cast %0 : vector<1x28x32xf32> to vector<28x32xf32>
    %c0_2 = arith.constant 0 : index
    %c0_3 = arith.constant 0 : index
    %c0_4 = arith.constant 0 : index
    %2 = vector.load %arg2[%c0_2, %c0_3, %c0_4] : memref<5x32x168xf32, #tpu.memory_space<vmem>>, vector<1x32x168xf32>
    %3 = vector.shape_cast %2 : vector<1x32x168xf32> to vector<32x168xf32>
    %cst = arith.constant dense<0.000000e+00> : vector<28x168xf32>
    %4 = tpu.matmul %1, %3, %cst {dimension_numbers = #tpu.dot_dimension_numbers<[1], [0], [0], [1], [0, 0, 1, 1], [], []>} : vector<28x32xf32>, vector<32x168xf32>, vector<28x168xf32> -> vector<28x168xf32>
    %c0_5 = arith.constant 0 : index
    %c1 = arith.constant 1 : index
    %c0_6 = arith.constant 0 : index
    %5 = vector.load %arg1[%c0_5, %c1, %c0_6] : memref<1x32x32xf32, #tpu.memory_space<vmem>>, vector<1x28x32xf32>
    %6 = vector.shape_cast %5 : vector<1x28x32xf32> to vector<28x32xf32>
    %c1_7 = arith.constant 1 : index
    %c0_8 = arith.constant 0 : index
    %c0_9 = arith.constant 0 : index
    %7 = vector.load %arg2[%c1_7, %c0_8, %c0_9] : memref<5x32x168xf32, #tpu.memory_space<vmem>>, vector<1x32x168xf32>
    %8 = vector.shape_cast %7 : vector<1x32x168xf32> to vector<32x168xf32>
    %cst_10 = arith.constant dense<0.000000e+00> : vector<28x168xf32>
    %9 = tpu.matmul %6, %8, %cst_10 {dimension_numbers = #tpu.dot_dimension_numbers<[1], [0], [0], [1], [0, 0, 1, 1], [], []>} : vector<28x32xf32>, vector<32x168xf32>, vector<28x168xf32> -> vector<28x168xf32>
    %10 = arith.addf %4, %9 : vector<28x168xf32>
    %c0_11 = arith.constant 0 : index
    %c2 = arith.constant 2 : index
    %c0_12 = arith.constant 0 : index
    %11 = vector.load %arg1[%c0_11, %c2, %c0_12] : memref<1x32x32xf32, #tpu.memory_space<vmem>>, vector<1x28x32xf32>
    %12 = vector.shape_cast %11 : vector<1x28x32xf32> to vector<28x32xf32>
    %c2_13 = arith.constant 2 : index
    %c0_14 = arith.constant 0 : index
    %c0_15 = arith.constant 0 : index
    %13 = vector.load %arg2[%c2_13, %c0_14, %c0_15] : memref<5x32x168xf32, #tpu.memory_space<vmem>>, vector<1x32x168xf32>
    %14 = vector.shape_cast %13 : vector<1x32x168xf32> to vector<32x168xf32>
    %cst_16 = arith.constant dense<0.000000e+00> : vector<28x168xf32>
    %15 = tpu.matmul %12, %14, %cst_16 {dimension_numbers = #tpu.dot_dimension_numbers<[1], [0], [0], [1], [0, 0, 1, 1], [], []>} : vector<28x32xf32>, vector<32x168xf32>, vector<28x168xf32> -> vector<28x168xf32>
    %16 = arith.addf %10, %15 : vector<28x168xf32>
    %c0_17 = arith.constant 0 : index
    %c3 = arith.constant 3 : index
    %c0_18 = arith.constant 0 : index
    %17 = vector.load %arg1[%c0_17, %c3, %c0_18] : memref<1x32x32xf32, #tpu.memory_space<vmem>>, vector<1x28x32xf32>
    %18 = vector.shape_cast %17 : vector<1x28x32xf32> to vector<28x32xf32>
    %c3_19 = arith.constant 3 : index
    %c0_20 = arith.constant 0 : index
    %c0_21 = arith.constant 0 : index
    %19 = vector.load %arg2[%c3_19, %c0_20, %c0_21] : memref<5x32x168xf32, #tpu.memory_space<vmem>>, vector<1x32x168xf32>
    %20 = vector.shape_cast %19 : vector<1x32x168xf32> to vector<32x168xf32>
    %cst_22 = arith.constant dense<0.000000e+00> : vector<28x168xf32>
    %21 = tpu.matmul %18, %20, %cst_22 {dimension_numbers = #tpu.dot_dimension_numbers<[1], [0], [0], [1], [0, 0, 1, 1], [], []>} : vector<28x32xf32>, vector<32x168xf32>, vector<28x168xf32> -> vector<28x168xf32>
    %22 = arith.addf %16, %21 : vector<28x168xf32>
    %c0_23 = arith.constant 0 : index
    %c4 = arith.constant 4 : index
    %c0_24 = arith.constant 0 : index
    %23 = vector.load %arg1[%c0_23, %c4, %c0_24] : memref<1x32x32xf32, #tpu.memory_space<vmem>>, vector<1x28x32xf32>
    %24 = vector.shape_cast %23 : vector<1x28x32xf32> to vector<28x32xf32>
    %c4_25 = arith.constant 4 : index
    %c0_26 = arith.constant 0 : index
    %c0_27 = arith.constant 0 : index
    %25 = vector.load %arg2[%c4_25, %c0_26, %c0_27] : memref<5x32x168xf32, #tpu.memory_space<vmem>>, vector<1x32x168xf32>
    %26 = vector.shape_cast %25 : vector<1x32x168xf32> to vector<32x168xf32>
    %cst_28 = arith.constant dense<0.000000e+00> : vector<28x168xf32>
    %27 = tpu.matmul %24, %26, %cst_28 {dimension_numbers = #tpu.dot_dimension_numbers<[1], [0], [0], [1], [0, 0, 1, 1], [], []>} : vector<28x32xf32>, vector<32x168xf32>, vector<28x168xf32> -> vector<28x168xf32>
    %28 = arith.addf %22, %27 : vector<28x168xf32>
    %c0_29 = arith.constant 0 : index
    %c0_30 = arith.constant 0 : index
    %29 = vector.load %arg3[%c0_29, %c0_30] : memref<1x168xf32, #tpu.memory_space<vmem>>, vector<1x168xf32>
    %30 = vector.broadcast %29 : vector<1x168xf32> to vector<28x168xf32>
    %31 = arith.addf %28, %30 : vector<28x168xf32>
    %cst_31 = arith.constant 0.000000e+00 : f32
    %32 = vector.broadcast %cst_31 : f32 to vector<28x168xf32>
    %33 = arith.subf %32, %31 : vector<28x168xf32>
    %34 = math.exp %33 : vector<28x168xf32>
    %cst_32 = arith.constant 1.000000e+00 : f32
    %35 = vector.broadcast %cst_32 : f32 to vector<28x168xf32>
    %36 = arith.addf %35, %34 : vector<28x168xf32>
    %cst_33 = arith.constant 1.000000e+00 : f32
    %37 = vector.broadcast %cst_33 : f32 to vector<28x168xf32>
    %38 = arith.divf %37, %36 : vector<28x168xf32>
    %c0_34 = arith.constant 0 : index
    %c0_35 = arith.constant 0 : index
    %39 = vector.load %arg4[%c0_34, %c0_35] : memref<14x28xf32, #tpu.memory_space<vmem>>, vector<14x28xf32>
    %cst_36 = arith.constant dense<0.000000e+00> : vector<14x168xf32>
    %40 = tpu.matmul %39, %38, %cst_36 {dimension_numbers = #tpu.dot_dimension_numbers<[1], [0], [0], [1], [0, 0, 1, 1], [], []>} : vector<14x28xf32>, vector<28x168xf32>, vector<14x168xf32> -> vector<14x168xf32>
    %c0_37 = arith.constant 0 : index
    %c0_38 = arith.constant 0 : index
    %41 = vector.load %arg5[%c0_37, %c0_38] : memref<168x84xf32, #tpu.memory_space<vmem>>, vector<168x84xf32>
    %cst_39 = arith.constant dense<0.000000e+00> : vector<14x84xf32>
    %42 = tpu.matmul %40, %41, %cst_39 {dimension_numbers = #tpu.dot_dimension_numbers<[1], [0], [0], [1], [0, 0, 1, 1], [], []>} : vector<14x168xf32>, vector<168x84xf32>, vector<14x84xf32> -> vector<14x84xf32>
    %c0_40 = arith.constant 0 : index
    %c0_41 = arith.constant 0 : index
    %43 = vector.load %arg19[%c0_40, %c0_41] : memref<14x84xf32, #tpu.memory_space<vmem>>, vector<14x84xf32>
    tpu.vector_store %arg19[%c0_40, %c0_41], %42 {strides = array<i32>} : memref<14x84xf32, #tpu.memory_space<vmem>>, vector<14x84xf32>,
    %cst_42 = arith.constant 0.000000e+00 : f32
    %44 = vector.broadcast %cst_42 : f32 to vector<10x160xf32>
    %c0_43 = arith.constant 0 : index
    %c0_44 = arith.constant 0 : index
    %45 = vector.load %arg19[%c0_43, %c0_44] : memref<14x84xf32, #tpu.memory_space<vmem>>, vector<10x14xf32>
    %c0_45 = arith.constant 0 : index
    %c0_46 = arith.constant 0 : index
    %c0_47 = arith.constant 0 : index
    %c0_48 = arith.constant 0 : index
    %46 = vector.load %arg6[%c0_45, %c0_46, %c0_47, %c0_48] : memref<6x5x14x160xf32, #tpu.memory_space<vmem>>, vector<1x1x14x160xf32>
    %47 = vector.shape_cast %46 : vector<1x1x14x160xf32> to vector<14x160xf32>
    %cst_49 = arith.constant dense<0.000000e+00> : vector<10x160xf32>
    %48 = tpu.matmul %45, %47, %cst_49 {dimension_numbers = #tpu.dot_dimension_numbers<[1], [0], [0], [1], [0, 0, 1, 1], [], []>} : vector<10x14xf32>, vector<14x160xf32>, vector<10x160xf32> -> vector<10x160xf32>
    %49 = arith.addf %44, %48 : vector<10x160xf32>
    %c1_50 = arith.constant 1 : index
    %c0_51 = arith.constant 0 : index
    %50 = vector.load %arg19[%c1_50, %c0_51] : memref<14x84xf32, #tpu.memory_space<vmem>>, vector<10x14xf32>
    %c0_52 = arith.constant 0 : index
    %c1_53 = arith.constant 1 : index
    %c0_54 = arith.constant 0 : index
    %c0_55 = arith.constant 0 : index
    %51 = vector.load %arg6[%c0_52, %c1_53, %c0_54, %c0_55] : memref<6x5x14x160xf32, #tpu.memory_space<vmem>>, vector<1x1x14x160xf32>
    %52 = vector.shape_cast %51 : vector<1x1x14x160xf32> to vector<14x160xf32>
    %cst_56 = arith.constant dense<0.000000e+00> : vector<10x160xf32>
    %53 = tpu.matmul %50, %52, %cst_56 {dimension_numbers = #tpu.dot_dimension_numbers<[1], [0], [0], [1], [0, 0, 1, 1], [], []>} : vector<10x14xf32>, vector<14x160xf32>, vector<10x160xf32> -> vector<10x160xf32>
    %54 = arith.addf %49, %53 : vector<10x160xf32>
    %c2_57 = arith.constant 2 : index
    %c0_58 = arith.constant 0 : index
    %55 = vector.load %arg19[%c2_57, %c0_58] : memref<14x84xf32, #tpu.memory_space<vmem>>, vector<10x14xf32>
    %c0_59 = arith.constant 0 : index
    %c2_60 = arith.constant 2 : index
    %c0_61 = arith.constant 0 : index
    %c0_62 = arith.constant 0 : index
    %56 = vector.load %arg6[%c0_59, %c2_60, %c0_61, %c0_62] : memref<6x5x14x160xf32, #tpu.memory_space<vmem>>, vector<1x1x14x160xf32>
    %57 = vector.shape_cast %56 : vector<1x1x14x160xf32> to vector<14x160xf32>
    %cst_63 = arith.constant dense<0.000000e+00> : vector<10x160xf32>
    %58 = tpu.matmul %55, %57, %cst_63 {dimension_numbers = #tpu.dot_dimension_numbers<[1], [0], [0], [1], [0, 0, 1, 1], [], []>} : vector<10x14xf32>, vector<14x160xf32>, vector<10x160xf32> -> vector<10x160xf32>
    %59 = arith.addf %54, %58 : vector<10x160xf32>
    %c3_64 = arith.constant 3 : index
    %c0_65 = arith.constant 0 : index
    %60 = vector.load %arg19[%c3_64, %c0_65] : memref<14x84xf32, #tpu.memory_space<vmem>>, vector<10x14xf32>
    %c0_66 = arith.constant 0 : index
    %c3_67 = arith.constant 3 : index
    %c0_68 = arith.constant 0 : index
    %c0_69 = arith.constant 0 : index
    %61 = vector.load %arg6[%c0_66, %c3_67, %c0_68, %c0_69] : memref<6x5x14x160xf32, #tpu.memory_space<vmem>>, vector<1x1x14x160xf32>
    %62 = vector.shape_cast %61 : vector<1x1x14x160xf32> to vector<14x160xf32>
    %cst_70 = arith.constant dense<0.000000e+00> : vector<10x160xf32>
    %63 = tpu.matmul %60, %62, %cst_70 {dimension_numbers = #tpu.dot_dimension_numbers<[1], [0], [0], [1], [0, 0, 1, 1], [], []>} : vector<10x14xf32>, vector<14x160xf32>, vector<10x160xf32> -> vector<10x160xf32>
    %64 = arith.addf %59, %63 : vector<10x160xf32>
    %c4_71 = arith.constant 4 : index
    %c0_72 = arith.constant 0 : index
    %65 = vector.load %arg19[%c4_71, %c0_72] : memref<14x84xf32, #tpu.memory_space<vmem>>, vector<10x14xf32>
    %c0_73 = arith.constant 0 : index
    %c4_74 = arith.constant 4 : index
    %c0_75 = arith.constant 0 : index
    %c0_76 = arith.constant 0 : index
    %66 = vector.load %arg6[%c0_73, %c4_74, %c0_75, %c0_76] : memref<6x5x14x160xf32, #tpu.memory_space<vmem>>, vector<1x1x14x160xf32>
    %67 = vector.shape_cast %66 : vector<1x1x14x160xf32> to vector<14x160xf32>
    %cst_77 = arith.constant dense<0.000000e+00> : vector<10x160xf32>
    %68 = tpu.matmul %65, %67, %cst_77 {dimension_numbers = #tpu.dot_dimension_numbers<[1], [0], [0], [1], [0, 0, 1, 1], [], []>} : vector<10x14xf32>, vector<14x160xf32>, vector<10x160xf32> -> vector<10x160xf32>
    %69 = arith.addf %64, %68 : vector<10x160xf32>
    %c0_78 = arith.constant 0 : index
    %c14 = arith.constant 14 : index
    %70 = vector.load %arg19[%c0_78, %c14] : memref<14x84xf32, #tpu.memory_space<vmem>>, vector<10x14xf32>
    %c1_79 = arith.constant 1 : index
    %c0_80 = arith.constant 0 : index
    %c0_81 = arith.constant 0 : index
    %c0_82 = arith.constant 0 : index
    %71 = vector.load %arg6[%c1_79, %c0_80, %c0_81, %c0_82] : memref<6x5x14x160xf32, #tpu.memory_space<vmem>>, vector<1x1x14x160xf32>
    %72 = vector.shape_cast %71 : vector<1x1x14x160xf32> to vector<14x160xf32>
    %cst_83 = arith.constant dense<0.000000e+00> : vector<10x160xf32>
    %73 = tpu.matmul %70, %72, %cst_83 {dimension_numbers = #tpu.dot_dimension_numbers<[1], [0], [0], [1], [0, 0, 1, 1], [], []>} : vector<10x14xf32>, vector<14x160xf32>, vector<10x160xf32> -> vector<10x160xf32>
    %74 = arith.addf %69, %73 : vector<10x160xf32>
    %c1_84 = arith.constant 1 : index
    %c14_85 = arith.constant 14 : index
    %75 = vector.load %arg19[%c1_84, %c14_85] : memref<14x84xf32, #tpu.memory_space<vmem>>, vector<10x14xf32>
    %c1_86 = arith.constant 1 : index
    %c1_87 = arith.constant 1 : index
    %c0_88 = arith.constant 0 : index
    %c0_89 = arith.constant 0 : index
    %76 = vector.load %arg6[%c1_86, %c1_87, %c0_88, %c0_89] : memref<6x5x14x160xf32, #tpu.memory_space<vmem>>, vector<1x1x14x160xf32>
    %77 = vector.shape_cast %76 : vector<1x1x14x160xf32> to vector<14x160xf32>
    %cst_90 = arith.constant dense<0.000000e+00> : vector<10x160xf32>
    %78 = tpu.matmul %75, %77, %cst_90 {dimension_numbers = #tpu.dot_dimension_numbers<[1], [0], [0], [1], [0, 0, 1, 1], [], []>} : vector<10x14xf32>, vector<14x160xf32>, vector<10x160xf32> -> vector<10x160xf32>
    %79 = arith.addf %74, %78 : vector<10x160xf32>
    %c2_91 = arith.constant 2 : index
    %c14_92 = arith.constant 14 : index
    %80 = vector.load %arg19[%c2_91, %c14_92] : memref<14x84xf32, #tpu.memory_space<vmem>>, vector<10x14xf32>
    %c1_93 = arith.constant 1 : index
    %c2_94 = arith.constant 2 : index
    %c0_95 = arith.constant 0 : index
    %c0_96 = arith.constant 0 : index
    %81 = vector.load %arg6[%c1_93, %c2_94, %c0_95, %c0_96] : memref<6x5x14x160xf32, #tpu.memory_space<vmem>>, vector<1x1x14x160xf32>
    %82 = vector.shape_cast %81 : vector<1x1x14x160xf32> to vector<14x160xf32>
    %cst_97 = arith.constant dense<0.000000e+00> : vector<10x160xf32>
    %83 = tpu.matmul %80, %82, %cst_97 {dimension_numbers = #tpu.dot_dimension_numbers<[1], [0], [0], [1], [0, 0, 1, 1], [], []>} : vector<10x14xf32>, vector<14x160xf32>, vector<10x160xf32> -> vector<10x160xf32>
    %84 = arith.addf %79, %83 : vector<10x160xf32>
    %c3_98 = arith.constant 3 : index
    %c14_99 = arith.constant 14 : index
    %85 = vector.load %arg19[%c3_98, %c14_99] : memref<14x84xf32, #tpu.memory_space<vmem>>, vector<10x14xf32>
    %c1_100 = arith.constant 1 : index
    %c3_101 = arith.constant 3 : index
    %c0_102 = arith.constant 0 : index
    %c0_103 = arith.constant 0 : index
    %86 = vector.load %arg6[%c1_100, %c3_101, %c0_102, %c0_103] : memref<6x5x14x160xf32, #tpu.memory_space<vmem>>, vector<1x1x14x160xf32>
    %87 = vector.shape_cast %86 : vector<1x1x14x160xf32> to vector<14x160xf32>
    %cst_104 = arith.constant dense<0.000000e+00> : vector<10x160xf32>
    %88 = tpu.matmul %85, %87, %cst_104 {dimension_numbers = #tpu.dot_dimension_numbers<[1], [0], [0], [1], [0, 0, 1, 1], [], []>} : vector<10x14xf32>, vector<14x160xf32>, vector<10x160xf32> -> vector<10x160xf32>
    %89 = arith.addf %84, %88 : vector<10x160xf32>
    %c4_105 = arith.constant 4 : index
    %c14_106 = arith.constant 14 : index
    %90 = vector.load %arg19[%c4_105, %c14_106] : memref<14x84xf32, #tpu.memory_space<vmem>>, vector<10x14xf32>
    %c1_107 = arith.constant 1 : index
    %c4_108 = arith.constant 4 : index
    %c0_109 = arith.constant 0 : index
    %c0_110 = arith.constant 0 : index
    %91 = vector.load %arg6[%c1_107, %c4_108, %c0_109, %c0_110] : memref<6x5x14x160xf32, #tpu.memory_space<vmem>>, vector<1x1x14x160xf32>
    %92 = vector.shape_cast %91 : vector<1x1x14x160xf32> to vector<14x160xf32>
    %cst_111 = arith.constant dense<0.000000e+00> : vector<10x160xf32>
    %93 = tpu.matmul %90, %92, %cst_111 {dimension_numbers = #tpu.dot_dimension_numbers<[1], [0], [0], [1], [0, 0, 1, 1], [], []>} : vector<10x14xf32>, vector<14x160xf32>, vector<10x160xf32> -> vector<10x160xf32>
    %94 = arith.addf %89, %93 : vector<10x160xf32>
    %c0_112 = arith.constant 0 : index
    %c28 = arith.constant 28 : index
    %95 = vector.load %arg19[%c0_112, %c28] : memref<14x84xf32, #tpu.memory_space<vmem>>, vector<10x14xf32>
    %c2_113 = arith.constant 2 : index
    %c0_114 = arith.constant 0 : index
    %c0_115 = arith.constant 0 : index
    %c0_116 = arith.constant 0 : index
    %96 = vector.load %arg6[%c2_113, %c0_114, %c0_115, %c0_116] : memref<6x5x14x160xf32, #tpu.memory_space<vmem>>, vector<1x1x14x160xf32>
    %97 = vector.shape_cast %96 : vector<1x1x14x160xf32> to vector<14x160xf32>
    %cst_117 = arith.constant dense<0.000000e+00> : vector<10x160xf32>
    %98 = tpu.matmul %95, %97, %cst_117 {dimension_numbers = #tpu.dot_dimension_numbers<[1], [0], [0], [1], [0, 0, 1, 1], [], []>} : vector<10x14xf32>, vector<14x160xf32>, vector<10x160xf32> -> vector<10x160xf32>
    %99 = arith.addf %94, %98 : vector<10x160xf32>
    %c1_118 = arith.constant 1 : index
    %c28_119 = arith.constant 28 : index
    %100 = vector.load %arg19[%c1_118, %c28_119] : memref<14x84xf32, #tpu.memory_space<vmem>>, vector<10x14xf32>
    %c2_120 = arith.constant 2 : index
    %c1_121 = arith.constant 1 : index
    %c0_122 = arith.constant 0 : index
    %c0_123 = arith.constant 0 : index
    %101 = vector.load %arg6[%c2_120, %c1_121, %c0_122, %c0_123] : memref<6x5x14x160xf32, #tpu.memory_space<vmem>>, vector<1x1x14x160xf32>
    %102 = vector.shape_cast %101 : vector<1x1x14x160xf32> to vector<14x160xf32>
    %cst_124 = arith.constant dense<0.000000e+00> : vector<10x160xf32>
    %103 = tpu.matmul %100, %102, %cst_124 {dimension_numbers = #tpu.dot_dimension_numbers<[1], [0], [0], [1], [0, 0, 1, 1], [], []>} : vector<10x14xf32>, vector<14x160xf32>, vector<10x160xf32> -> vector<10x160xf32>
    %104 = arith.addf %99, %103 : vector<10x160xf32>
    %c2_125 = arith.constant 2 : index
    %c28_126 = arith.constant 28 : index
    %105 = vector.load %arg19[%c2_125, %c28_126] : memref<14x84xf32, #tpu.memory_space<vmem>>, vector<10x14xf32>
    %c2_127 = arith.constant 2 : index
    %c2_128 = arith.constant 2 : index
    %c0_129 = arith.constant 0 : index
    %c0_130 = arith.constant 0 : index
    %106 = vector.load %arg6[%c2_127, %c2_128, %c0_129, %c0_130] : memref<6x5x14x160xf32, #tpu.memory_space<vmem>>, vector<1x1x14x160xf32>
    %107 = vector.shape_cast %106 : vector<1x1x14x160xf32> to vector<14x160xf32>
    %cst_131 = arith.constant dense<0.000000e+00> : vector<10x160xf32>
    %108 = tpu.matmul %105, %107, %cst_131 {dimension_numbers = #tpu.dot_dimension_numbers<[1], [0], [0], [1], [0, 0, 1, 1], [], []>} : vector<10x14xf32>, vector<14x160xf32>, vector<10x160xf32> -> vector<10x160xf32>
    %109 = arith.addf %104, %108 : vector<10x160xf32>
    %c3_132 = arith.constant 3 : index
    %c28_133 = arith.constant 28 : index
    %110 = vector.load %arg19[%c3_132, %c28_133] : memref<14x84xf32, #tpu.memory_space<vmem>>, vector<10x14xf32>
    %c2_134 = arith.constant 2 : index
    %c3_135 = arith.constant 3 : index
    %c0_136 = arith.constant 0 : index
    %c0_137 = arith.constant 0 : index
    %111 = vector.load %arg6[%c2_134, %c3_135, %c0_136, %c0_137] : memref<6x5x14x160xf32, #tpu.memory_space<vmem>>, vector<1x1x14x160xf32>
    %112 = vector.shape_cast %111 : vector<1x1x14x160xf32> to vector<14x160xf32>
    %cst_138 = arith.constant dense<0.000000e+00> : vector<10x160xf32>
    %113 = tpu.matmul %110, %112, %cst_138 {dimension_numbers = #tpu.dot_dimension_numbers<[1], [0], [0], [1], [0, 0, 1, 1], [], []>} : vector<10x14xf32>, vector<14x160xf32>, vector<10x160xf32> -> vector<10x160xf32>
    %114 = arith.addf %109, %113 : vector<10x160xf32>
    %c4_139 = arith.constant 4 : index
    %c28_140 = arith.constant 28 : index
    %115 = vector.load %arg19[%c4_139, %c28_140] : memref<14x84xf32, #tpu.memory_space<vmem>>, vector<10x14xf32>
    %c2_141 = arith.constant 2 : index
    %c4_142 = arith.constant 4 : index
    %c0_143 = arith.constant 0 : index
    %c0_144 = arith.constant 0 : index
    %116 = vector.load %arg6[%c2_141, %c4_142, %c0_143, %c0_144] : memref<6x5x14x160xf32, #tpu.memory_space<vmem>>, vector<1x1x14x160xf32>
    %117 = vector.shape_cast %116 : vector<1x1x14x160xf32> to vector<14x160xf32>
    %cst_145 = arith.constant dense<0.000000e+00> : vector<10x160xf32>
    %118 = tpu.matmul %115, %117, %cst_145 {dimension_numbers = #tpu.dot_dimension_numbers<[1], [0], [0], [1], [0, 0, 1, 1], [], []>} : vector<10x14xf32>, vector<14x160xf32>, vector<10x160xf32> -> vector<10x160xf32>
    %119 = arith.addf %114, %118 : vector<10x160xf32>
    %c0_146 = arith.constant 0 : index
    %c42 = arith.constant 42 : index
    %120 = vector.load %arg19[%c0_146, %c42] : memref<14x84xf32, #tpu.memory_space<vmem>>, vector<10x14xf32>
    %c3_147 = arith.constant 3 : index
    %c0_148 = arith.constant 0 : index
    %c0_149 = arith.constant 0 : index
    %c0_150 = arith.constant 0 : index
    %121 = vector.load %arg6[%c3_147, %c0_148, %c0_149, %c0_150] : memref<6x5x14x160xf32, #tpu.memory_space<vmem>>, vector<1x1x14x160xf32>
    %122 = vector.shape_cast %121 : vector<1x1x14x160xf32> to vector<14x160xf32>
    %cst_151 = arith.constant dense<0.000000e+00> : vector<10x160xf32>
    %123 = tpu.matmul %120, %122, %cst_151 {dimension_numbers = #tpu.dot_dimension_numbers<[1], [0], [0], [1], [0, 0, 1, 1], [], []>} : vector<10x14xf32>, vector<14x160xf32>, vector<10x160xf32> -> vector<10x160xf32>
    %124 = arith.addf %119, %123 : vector<10x160xf32>
    %c1_152 = arith.constant 1 : index
    %c42_153 = arith.constant 42 : index
    %125 = vector.load %arg19[%c1_152, %c42_153] : memref<14x84xf32, #tpu.memory_space<vmem>>, vector<10x14xf32>
    %c3_154 = arith.constant 3 : index
    %c1_155 = arith.constant 1 : index
    %c0_156 = arith.constant 0 : index
    %c0_157 = arith.constant 0 : index
    %126 = vector.load %arg6[%c3_154, %c1_155, %c0_156, %c0_157] : memref<6x5x14x160xf32, #tpu.memory_space<vmem>>, vector<1x1x14x160xf32>
    %127 = vector.shape_cast %126 : vector<1x1x14x160xf32> to vector<14x160xf32>
    %cst_158 = arith.constant dense<0.000000e+00> : vector<10x160xf32>
    %128 = tpu.matmul %125, %127, %cst_158 {dimension_numbers = #tpu.dot_dimension_numbers<[1], [0], [0], [1], [0, 0, 1, 1], [], []>} : vector<10x14xf32>, vector<14x160xf32>, vector<10x160xf32> -> vector<10x160xf32>
    %129 = arith.addf %124, %128 : vector<10x160xf32>
    %c2_159 = arith.constant 2 : index
    %c42_160 = arith.constant 42 : index
    %130 = vector.load %arg19[%c2_159, %c42_160] : memref<14x84xf32, #tpu.memory_space<vmem>>, vector<10x14xf32>
    %c3_161 = arith.constant 3 : index
    %c2_162 = arith.constant 2 : index
    %c0_163 = arith.constant 0 : index
    %c0_164 = arith.constant 0 : index
    %131 = vector.load %arg6[%c3_161, %c2_162, %c0_163, %c0_164] : memref<6x5x14x160xf32, #tpu.memory_space<vmem>>, vector<1x1x14x160xf32>
    %132 = vector.shape_cast %131 : vector<1x1x14x160xf32> to vector<14x160xf32>
    %cst_165 = arith.constant dense<0.000000e+00> : vector<10x160xf32>
    %133 = tpu.matmul %130, %132, %cst_165 {dimension_numbers = #tpu.dot_dimension_numbers<[1], [0], [0], [1], [0, 0, 1, 1], [], []>} : vector<10x14xf32>, vector<14x160xf32>, vector<10x160xf32> -> vector<10x160xf32>
    %134 = arith.addf %129, %133 : vector<10x160xf32>
    %c3_166 = arith.constant 3 : index
    %c42_167 = arith.constant 42 : index
    %135 = vector.load %arg19[%c3_166, %c42_167] : memref<14x84xf32, #tpu.memory_space<vmem>>, vector<10x14xf32>
    %c3_168 = arith.constant 3 : index
    %c3_169 = arith.constant 3 : index
    %c0_170 = arith.constant 0 : index
    %c0_171 = arith.constant 0 : index
    %136 = vector.load %arg6[%c3_168, %c3_169, %c0_170, %c0_171] : memref<6x5x14x160xf32, #tpu.memory_space<vmem>>, vector<1x1x14x160xf32>
    %137 = vector.shape_cast %136 : vector<1x1x14x160xf32> to vector<14x160xf32>
    %cst_172 = arith.constant dense<0.000000e+00> : vector<10x160xf32>
    %138 = tpu.matmul %135, %137, %cst_172 {dimension_numbers = #tpu.dot_dimension_numbers<[1], [0], [0], [1], [0, 0, 1, 1], [], []>} : vector<10x14xf32>, vector<14x160xf32>, vector<10x160xf32> -> vector<10x160xf32>
    %139 = arith.addf %134, %138 : vector<10x160xf32>
    %c4_173 = arith.constant 4 : index
    %c42_174 = arith.constant 42 : index
    %140 = vector.load %arg19[%c4_173, %c42_174] : memref<14x84xf32, #tpu.memory_space<vmem>>, vector<10x14xf32>
    %c3_175 = arith.constant 3 : index
    %c4_176 = arith.constant 4 : index
    %c0_177 = arith.constant 0 : index
    %c0_178 = arith.constant 0 : index
    %141 = vector.load %arg6[%c3_175, %c4_176, %c0_177, %c0_178] : memref<6x5x14x160xf32, #tpu.memory_space<vmem>>, vector<1x1x14x160xf32>
    %142 = vector.shape_cast %141 : vector<1x1x14x160xf32> to vector<14x160xf32>
    %cst_179 = arith.constant dense<0.000000e+00> : vector<10x160xf32>
    %143 = tpu.matmul %140, %142, %cst_179 {dimension_numbers = #tpu.dot_dimension_numbers<[1], [0], [0], [1], [0, 0, 1, 1], [], []>} : vector<10x14xf32>, vector<14x160xf32>, vector<10x160xf32> -> vector<10x160xf32>
    %144 = arith.addf %139, %143 : vector<10x160xf32>
    %c0_180 = arith.constant 0 : index
    %c56 = arith.constant 56 : index
    %145 = vector.load %arg19[%c0_180, %c56] : memref<14x84xf32, #tpu.memory_space<vmem>>, vector<10x14xf32>
    %c4_181 = arith.constant 4 : index
    %c0_182 = arith.constant 0 : index
    %c0_183 = arith.constant 0 : index
    %c0_184 = arith.constant 0 : index
    %146 = vector.load %arg6[%c4_181, %c0_182, %c0_183, %c0_184] : memref<6x5x14x160xf32, #tpu.memory_space<vmem>>, vector<1x1x14x160xf32>
    %147 = vector.shape_cast %146 : vector<1x1x14x160xf32> to vector<14x160xf32>
    %cst_185 = arith.constant dense<0.000000e+00> : vector<10x160xf32>
    %148 = tpu.matmul %145, %147, %cst_185 {dimension_numbers = #tpu.dot_dimension_numbers<[1], [0], [0], [1], [0, 0, 1, 1], [], []>} : vector<10x14xf32>, vector<14x160xf32>, vector<10x160xf32> -> vector<10x160xf32>
    %149 = arith.addf %144, %148 : vector<10x160xf32>
    %c1_186 = arith.constant 1 : index
    %c56_187 = arith.constant 56 : index
    %150 = vector.load %arg19[%c1_186, %c56_187] : memref<14x84xf32, #tpu.memory_space<vmem>>, vector<10x14xf32>
    %c4_188 = arith.constant 4 : index
    %c1_189 = arith.constant 1 : index
    %c0_190 = arith.constant 0 : index
    %c0_191 = arith.constant 0 : index
    %151 = vector.load %arg6[%c4_188, %c1_189, %c0_190, %c0_191] : memref<6x5x14x160xf32, #tpu.memory_space<vmem>>, vector<1x1x14x160xf32>
    %152 = vector.shape_cast %151 : vector<1x1x14x160xf32> to vector<14x160xf32>
    %cst_192 = arith.constant dense<0.000000e+00> : vector<10x160xf32>
    %153 = tpu.matmul %150, %152, %cst_192 {dimension_numbers = #tpu.dot_dimension_numbers<[1], [0], [0], [1], [0, 0, 1, 1], [], []>} : vector<10x14xf32>, vector<14x160xf32>, vector<10x160xf32> -> vector<10x160xf32>
    %154 = arith.addf %149, %153 : vector<10x160xf32>
    %c2_193 = arith.constant 2 : index
    %c56_194 = arith.constant 56 : index
    %155 = vector.load %arg19[%c2_193, %c56_194] : memref<14x84xf32, #tpu.memory_space<vmem>>, vector<10x14xf32>
    %c4_195 = arith.constant 4 : index
    %c2_196 = arith.constant 2 : index
    %c0_197 = arith.constant 0 : index
    %c0_198 = arith.constant 0 : index
    %156 = vector.load %arg6[%c4_195, %c2_196, %c0_197, %c0_198] : memref<6x5x14x160xf32, #tpu.memory_space<vmem>>, vector<1x1x14x160xf32>
    %157 = vector.shape_cast %156 : vector<1x1x14x160xf32> to vector<14x160xf32>
    %cst_199 = arith.constant dense<0.000000e+00> : vector<10x160xf32>
    %158 = tpu.matmul %155, %157, %cst_199 {dimension_numbers = #tpu.dot_dimension_numbers<[1], [0], [0], [1], [0, 0, 1, 1], [], []>} : vector<10x14xf32>, vector<14x160xf32>, vector<10x160xf32> -> vector<10x160xf32>
    %159 = arith.addf %154, %158 : vector<10x160xf32>
    %c3_200 = arith.constant 3 : index
    %c56_201 = arith.constant 56 : index
    %160 = vector.load %arg19[%c3_200, %c56_201] : memref<14x84xf32, #tpu.memory_space<vmem>>, vector<10x14xf32>
    %c4_202 = arith.constant 4 : index
    %c3_203 = arith.constant 3 : index
    %c0_204 = arith.constant 0 : index
    %c0_205 = arith.constant 0 : index
    %161 = vector.load %arg6[%c4_202, %c3_203, %c0_204, %c0_205] : memref<6x5x14x160xf32, #tpu.memory_space<vmem>>, vector<1x1x14x160xf32>
    %162 = vector.shape_cast %161 : vector<1x1x14x160xf32> to vector<14x160xf32>
    %cst_206 = arith.constant dense<0.000000e+00> : vector<10x160xf32>
    %163 = tpu.matmul %160, %162, %cst_206 {dimension_numbers = #tpu.dot_dimension_numbers<[1], [0], [0], [1], [0, 0, 1, 1], [], []>} : vector<10x14xf32>, vector<14x160xf32>, vector<10x160xf32> -> vector<10x160xf32>
    %164 = arith.addf %159, %163 : vector<10x160xf32>
    %c4_207 = arith.constant 4 : index
    %c56_208 = arith.constant 56 : index
    %165 = vector.load %arg19[%c4_207, %c56_208] : memref<14x84xf32, #tpu.memory_space<vmem>>, vector<10x14xf32>
    %c4_209 = arith.constant 4 : index
    %c4_210 = arith.constant 4 : index
    %c0_211 = arith.constant 0 : index
    %c0_212 = arith.constant 0 : index
    %166 = vector.load %arg6[%c4_209, %c4_210, %c0_211, %c0_212] : memref<6x5x14x160xf32, #tpu.memory_space<vmem>>, vector<1x1x14x160xf32>
    %167 = vector.shape_cast %166 : vector<1x1x14x160xf32> to vector<14x160xf32>
    %cst_213 = arith.constant dense<0.000000e+00> : vector<10x160xf32>
    %168 = tpu.matmul %165, %167, %cst_213 {dimension_numbers = #tpu.dot_dimension_numbers<[1], [0], [0], [1], [0, 0, 1, 1], [], []>} : vector<10x14xf32>, vector<14x160xf32>, vector<10x160xf32> -> vector<10x160xf32>
    %169 = arith.addf %164, %168 : vector<10x160xf32>
    %c0_214 = arith.constant 0 : index
    %c70 = arith.constant 70 : index
    %170 = vector.load %arg19[%c0_214, %c70] : memref<14x84xf32, #tpu.memory_space<vmem>>, vector<10x14xf32>
    %c5 = arith.constant 5 : index
    %c0_215 = arith.constant 0 : index
    %c0_216 = arith.constant 0 : index
    %c0_217 = arith.constant 0 : index
    %171 = vector.load %arg6[%c5, %c0_215, %c0_216, %c0_217] : memref<6x5x14x160xf32, #tpu.memory_space<vmem>>, vector<1x1x14x160xf32>
    %172 = vector.shape_cast %171 : vector<1x1x14x160xf32> to vector<14x160xf32>
    %cst_218 = arith.constant dense<0.000000e+00> : vector<10x160xf32>
    %173 = tpu.matmul %170, %172, %cst_218 {dimension_numbers = #tpu.dot_dimension_numbers<[1], [0], [0], [1], [0, 0, 1, 1], [], []>} : vector<10x14xf32>, vector<14x160xf32>, vector<10x160xf32> -> vector<10x160xf32>
    %174 = arith.addf %169, %173 : vector<10x160xf32>
    %c1_219 = arith.constant 1 : index
    %c70_220 = arith.constant 70 : index
    %175 = vector.load %arg19[%c1_219, %c70_220] : memref<14x84xf32, #tpu.memory_space<vmem>>, vector<10x14xf32>
    %c5_221 = arith.constant 5 : index
    %c1_222 = arith.constant 1 : index
    %c0_223 = arith.constant 0 : index
    %c0_224 = arith.constant 0 : index
    %176 = vector.load %arg6[%c5_221, %c1_222, %c0_223, %c0_224] : memref<6x5x14x160xf32, #tpu.memory_space<vmem>>, vector<1x1x14x160xf32>
    %177 = vector.shape_cast %176 : vector<1x1x14x160xf32> to vector<14x160xf32>
    %cst_225 = arith.constant dense<0.000000e+00> : vector<10x160xf32>
    %178 = tpu.matmul %175, %177, %cst_225 {dimension_numbers = #tpu.dot_dimension_numbers<[1], [0], [0], [1], [0, 0, 1, 1], [], []>} : vector<10x14xf32>, vector<14x160xf32>, vector<10x160xf32> -> vector<10x160xf32>
    %179 = arith.addf %174, %178 : vector<10x160xf32>
    %c2_226 = arith.constant 2 : index
    %c70_227 = arith.constant 70 : index
    %180 = vector.load %arg19[%c2_226, %c70_227] : memref<14x84xf32, #tpu.memory_space<vmem>>, vector<10x14xf32>
    %c5_228 = arith.constant 5 : index
    %c2_229 = arith.constant 2 : index
    %c0_230 = arith.constant 0 : index
    %c0_231 = arith.constant 0 : index
    %181 = vector.load %arg6[%c5_228, %c2_229, %c0_230, %c0_231] : memref<6x5x14x160xf32, #tpu.memory_space<vmem>>, vector<1x1x14x160xf32>
    %182 = vector.shape_cast %181 : vector<1x1x14x160xf32> to vector<14x160xf32>
    %cst_232 = arith.constant dense<0.000000e+00> : vector<10x160xf32>
    %183 = tpu.matmul %180, %182, %cst_232 {dimension_numbers = #tpu.dot_dimension_numbers<[1], [0], [0], [1], [0, 0, 1, 1], [], []>} : vector<10x14xf32>, vector<14x160xf32>, vector<10x160xf32> -> vector<10x160xf32>
    %184 = arith.addf %179, %183 : vector<10x160xf32>
    %c3_233 = arith.constant 3 : index
    %c70_234 = arith.constant 70 : index
    %185 = vector.load %arg19[%c3_233, %c70_234] : memref<14x84xf32, #tpu.memory_space<vmem>>, vector<10x14xf32>
    %c5_235 = arith.constant 5 : index
    %c3_236 = arith.constant 3 : index
    %c0_237 = arith.constant 0 : index
    %c0_238 = arith.constant 0 : index
    %186 = vector.load %arg6[%c5_235, %c3_236, %c0_237, %c0_238] : memref<6x5x14x160xf32, #tpu.memory_space<vmem>>, vector<1x1x14x160xf32>
    %187 = vector.shape_cast %186 : vector<1x1x14x160xf32> to vector<14x160xf32>
    %cst_239 = arith.constant dense<0.000000e+00> : vector<10x160xf32>
    %188 = tpu.matmul %185, %187, %cst_239 {dimension_numbers = #tpu.dot_dimension_numbers<[1], [0], [0], [1], [0, 0, 1, 1], [], []>} : vector<10x14xf32>, vector<14x160xf32>, vector<10x160xf32> -> vector<10x160xf32>
    %189 = arith.addf %184, %188 : vector<10x160xf32>
    %c4_240 = arith.constant 4 : index
    %c70_241 = arith.constant 70 : index
    %190 = vector.load %arg19[%c4_240, %c70_241] : memref<14x84xf32, #tpu.memory_space<vmem>>, vector<10x14xf32>
    %c5_242 = arith.constant 5 : index
    %c4_243 = arith.constant 4 : index
    %c0_244 = arith.constant 0 : index
    %c0_245 = arith.constant 0 : index
    %191 = vector.load %arg6[%c5_242, %c4_243, %c0_244, %c0_245] : memref<6x5x14x160xf32, #tpu.memory_space<vmem>>, vector<1x1x14x160xf32>
    %192 = vector.shape_cast %191 : vector<1x1x14x160xf32> to vector<14x160xf32>
    %cst_246 = arith.constant dense<0.000000e+00> : vector<10x160xf32>
    %193 = tpu.matmul %190, %192, %cst_246 {dimension_numbers = #tpu.dot_dimension_numbers<[1], [0], [0], [1], [0, 0, 1, 1], [], []>} : vector<10x14xf32>, vector<14x160xf32>, vector<10x160xf32> -> vector<10x160xf32>
    %194 = arith.addf %189, %193 : vector<10x160xf32>
    %c0_247 = arith.constant 0 : index
    %c0_248 = arith.constant 0 : index
    %195 = vector.load %arg7[%c0_247, %c0_248] : memref<1x160xf32, #tpu.memory_space<vmem>>, vector<1x160xf32>
    %196 = vector.broadcast %195 : vector<1x160xf32> to vector<10x160xf32>
    %197 = arith.addf %194, %196 : vector<10x160xf32>
    %cst_249 = arith.constant 0.000000e+00 : f32
    %198 = vector.broadcast %cst_249 : f32 to vector<10x160xf32>
    %199 = arith.subf %198, %197 : vector<10x160xf32>
    %200 = math.exp %199 : vector<10x160xf32>
    %cst_250 = arith.constant 1.000000e+00 : f32
    %201 = vector.broadcast %cst_250 : f32 to vector<10x160xf32>
    %202 = arith.addf %201, %200 : vector<10x160xf32>
    %cst_251 = arith.constant 1.000000e+00 : f32
    %203 = vector.broadcast %cst_251 : f32 to vector<10x160xf32>
    %204 = arith.divf %203, %202 : vector<10x160xf32>
    %c0_252 = arith.constant 0 : index
    %c0_253 = arith.constant 0 : index
    %205 = vector.load %arg8[%c0_252, %c0_253] : memref<5x10xf32, #tpu.memory_space<vmem>>, vector<5x10xf32>
    %cst_254 = arith.constant dense<0.000000e+00> : vector<5x160xf32>
    %206 = tpu.matmul %205, %204, %cst_254 {dimension_numbers = #tpu.dot_dimension_numbers<[1], [0], [0], [1], [0, 0, 1, 1], [], []>} : vector<5x10xf32>, vector<10x160xf32>, vector<5x160xf32> -> vector<5x160xf32>
    %c0_255 = arith.constant 0 : index
    %c0_256 = arith.constant 0 : index
    %207 = vector.load %arg9[%c0_255, %c0_256] : memref<160x80xf32, #tpu.memory_space<vmem>>, vector<160x80xf32>
    %cst_257 = arith.constant dense<0.000000e+00> : vector<5x80xf32>
    %208 = tpu.matmul %206, %207, %cst_257 {dimension_numbers = #tpu.dot_dimension_numbers<[1], [0], [0], [1], [0, 0, 1, 1], [], []>} : vector<5x160xf32>, vector<160x80xf32>, vector<5x80xf32> -> vector<5x80xf32>
    %209 = vector.extract_strided_slice %208 {offsets = [0, 0], sizes = [1, 80], strides = [1, 1]} : vector<5x80xf32> to vector<1x80xf32>
    %c0_258 = arith.constant 0 : index
    %c0_259 = arith.constant 0 : index
    %c0_260 = arith.constant 0 : index
    %210 = vector.load %arg10[%c0_258, %c0_259, %c0_260] : memref<5x80x128xf32, #tpu.memory_space<vmem>>, vector<1x80x128xf32>
    %211 = vector.shape_cast %210 : vector<1x80x128xf32> to vector<80x128xf32>
    %cst_261 = arith.constant dense<0.000000e+00> : vector<1x128xf32>
    %212 = tpu.matmul %209, %211, %cst_261 {dimension_numbers = #tpu.dot_dimension_numbers<[1], [0], [0], [1], [0, 0, 1, 1], [], []>} : vector<1x80xf32>, vector<80x128xf32>, vector<1x128xf32> -> vector<1x128xf32>
    %213 = vector.extract_strided_slice %208 {offsets = [1, 0], sizes = [1, 80], strides = [1, 1]} : vector<5x80xf32> to vector<1x80xf32>
    %c1_262 = arith.constant 1 : index
    %c0_263 = arith.constant 0 : index
    %c0_264 = arith.constant 0 : index
    %214 = vector.load %arg10[%c1_262, %c0_263, %c0_264] : memref<5x80x128xf32, #tpu.memory_space<vmem>>, vector<1x80x128xf32>
    %215 = vector.shape_cast %214 : vector<1x80x128xf32> to vector<80x128xf32>
    %cst_265 = arith.constant dense<0.000000e+00> : vector<1x128xf32>
    %216 = tpu.matmul %213, %215, %cst_265 {dimension_numbers = #tpu.dot_dimension_numbers<[1], [0], [0], [1], [0, 0, 1, 1], [], []>} : vector<1x80xf32>, vector<80x128xf32>, vector<1x128xf32> -> vector<1x128xf32>
    %217 = arith.addf %212, %216 : vector<1x128xf32>
    %218 = vector.extract_strided_slice %208 {offsets = [2, 0], sizes = [1, 80], strides = [1, 1]} : vector<5x80xf32> to vector<1x80xf32>
    %c2_266 = arith.constant 2 : index
    %c0_267 = arith.constant 0 : index
    %c0_268 = arith.constant 0 : index
    %219 = vector.load %arg10[%c2_266, %c0_267, %c0_268] : memref<5x80x128xf32, #tpu.memory_space<vmem>>, vector<1x80x128xf32>
    %220 = vector.shape_cast %219 : vector<1x80x128xf32> to vector<80x128xf32>
    %cst_269 = arith.constant dense<0.000000e+00> : vector<1x128xf32>
    %221 = tpu.matmul %218, %220, %cst_269 {dimension_numbers = #tpu.dot_dimension_numbers<[1], [0], [0], [1], [0, 0, 1, 1], [], []>} : vector<1x80xf32>, vector<80x128xf32>, vector<1x128xf32> -> vector<1x128xf32>
    %222 = arith.addf %217, %221 : vector<1x128xf32>
    %223 = vector.extract_strided_slice %208 {offsets = [3, 0], sizes = [1, 80], strides = [1, 1]} : vector<5x80xf32> to vector<1x80xf32>
    %c3_270 = arith.constant 3 : index
    %c0_271 = arith.constant 0 : index
    %c0_272 = arith.constant 0 : index
    %224 = vector.load %arg10[%c3_270, %c0_271, %c0_272] : memref<5x80x128xf32, #tpu.memory_space<vmem>>, vector<1x80x128xf32>
    %225 = vector.shape_cast %224 : vector<1x80x128xf32> to vector<80x128xf32>
    %cst_273 = arith.constant dense<0.000000e+00> : vector<1x128xf32>
    %226 = tpu.matmul %223, %225, %cst_273 {dimension_numbers = #tpu.dot_dimension_numbers<[1], [0], [0], [1], [0, 0, 1, 1], [], []>} : vector<1x80xf32>, vector<80x128xf32>, vector<1x128xf32> -> vector<1x128xf32>
    %227 = arith.addf %222, %226 : vector<1x128xf32>
    %228 = vector.extract_strided_slice %208 {offsets = [4, 0], sizes = [1, 80], strides = [1, 1]} : vector<5x80xf32> to vector<1x80xf32>
    %c4_274 = arith.constant 4 : index
    %c0_275 = arith.constant 0 : index
    %c0_276 = arith.constant 0 : index
    %229 = vector.load %arg10[%c4_274, %c0_275, %c0_276] : memref<5x80x128xf32, #tpu.memory_space<vmem>>, vector<1x80x128xf32>
    %230 = vector.shape_cast %229 : vector<1x80x128xf32> to vector<80x128xf32>
    %cst_277 = arith.constant dense<0.000000e+00> : vector<1x128xf32>
    %231 = tpu.matmul %228, %230, %cst_277 {dimension_numbers = #tpu.dot_dimension_numbers<[1], [0], [0], [1], [0, 0, 1, 1], [], []>} : vector<1x80xf32>, vector<80x128xf32>, vector<1x128xf32> -> vector<1x128xf32>
    %232 = arith.addf %227, %231 : vector<1x128xf32>
    %c0_278 = arith.constant 0 : index
    %c0_279 = arith.constant 0 : index
    %233 = vector.load %arg11[%c0_278, %c0_279] : memref<1x128xf32, #tpu.memory_space<vmem>>, vector<1x128xf32>
    %234 = arith.addf %232, %233 : vector<1x128xf32>
    %cst_280 = arith.constant 0.000000e+00 : f32
    %235 = vector.broadcast %cst_280 : f32 to vector<1x128xf32>
    %236 = arith.subf %235, %234 : vector<1x128xf32>
    %237 = math.exp %236 : vector<1x128xf32>
    %cst_281 = arith.constant 1.000000e+00 : f32
    %238 = vector.broadcast %cst_281 : f32 to vector<1x128xf32>
    %239 = arith.addf %238, %237 : vector<1x128xf32>
    %cst_282 = arith.constant 1.000000e+00 : f32
    %240 = vector.broadcast %cst_282 : f32 to vector<1x128xf32>
    %241 = arith.divf %240, %239 : vector<1x128xf32>
    %c0_283 = arith.constant 0 : index
    %c0_284 = arith.constant 0 : index
    %242 = vector.load %arg12[%c0_283, %c0_284] : memref<128x128xf32, #tpu.memory_space<vmem>>, vector<128x128xf32>
    %cst_285 = arith.constant dense<0.000000e+00> : vector<1x128xf32>
    %243 = tpu.matmul %241, %242, %cst_285 {dimension_numbers = #tpu.dot_dimension_numbers<[1], [0], [0], [1], [0, 0, 1, 1], [], []>} : vector<1x128xf32>, vector<128x128xf32>, vector<1x128xf32> -> vector<1x128xf32>
    %c0_286 = arith.constant 0 : index
    %c0_287 = arith.constant 0 : index
    %244 = vector.load %arg13[%c0_286, %c0_287] : memref<1x128xf32, #tpu.memory_space<vmem>>, vector<1x128xf32>
    %245 = arith.addf %243, %244 : vector<1x128xf32>
    %cst_288 = arith.constant 0.000000e+00 : f32
    %246 = vector.broadcast %cst_288 : f32 to vector<1x128xf32>
    %247 = arith.subf %246, %245 : vector<1x128xf32>
    %248 = math.exp %247 : vector<1x128xf32>
    %cst_289 = arith.constant 1.000000e+00 : f32
    %249 = vector.broadcast %cst_289 : f32 to vector<1x128xf32>
    %250 = arith.addf %249, %248 : vector<1x128xf32>
    %cst_290 = arith.constant 1.000000e+00 : f32
    %251 = vector.broadcast %cst_290 : f32 to vector<1x128xf32>
    %252 = arith.divf %251, %250 : vector<1x128xf32>
    %c0_291 = arith.constant 0 : index
    %c0_292 = arith.constant 0 : index
    %253 = vector.load %arg14[%c0_291, %c0_292] : memref<128x128xf32, #tpu.memory_space<vmem>>, vector<128x128xf32>
    %cst_293 = arith.constant dense<0.000000e+00> : vector<1x128xf32>
    %254 = tpu.matmul %252, %253, %cst_293 {dimension_numbers = #tpu.dot_dimension_numbers<[1], [0], [0], [1], [0, 0, 1, 1], [], []>} : vector<1x128xf32>, vector<128x128xf32>, vector<1x128xf32> -> vector<1x128xf32>
    %c0_294 = arith.constant 0 : index
    %c0_295 = arith.constant 0 : index
    %255 = vector.load %arg15[%c0_294, %c0_295] : memref<1x128xf32, #tpu.memory_space<vmem>>, vector<1x128xf32>
    %256 = arith.addf %254, %255 : vector<1x128xf32>
    %cst_296 = arith.constant 0.000000e+00 : f32
    %257 = vector.broadcast %cst_296 : f32 to vector<1x128xf32>
    %258 = arith.subf %257, %256 : vector<1x128xf32>
    %259 = math.exp %258 : vector<1x128xf32>
    %cst_297 = arith.constant 1.000000e+00 : f32
    %260 = vector.broadcast %cst_297 : f32 to vector<1x128xf32>
    %261 = arith.addf %260, %259 : vector<1x128xf32>
    %cst_298 = arith.constant 1.000000e+00 : f32
    %262 = vector.broadcast %cst_298 : f32 to vector<1x128xf32>
    %263 = arith.divf %262, %261 : vector<1x128xf32>
    %c0_299 = arith.constant 0 : index
    %c0_300 = arith.constant 0 : index
    %264 = vector.load %arg16[%c0_299, %c0_300] : memref<128x128xf32, #tpu.memory_space<vmem>>, vector<128x128xf32>
    %cst_301 = arith.constant dense<0.000000e+00> : vector<1x128xf32>
    %265 = tpu.matmul %263, %264, %cst_301 {dimension_numbers = #tpu.dot_dimension_numbers<[1], [0], [0], [1], [0, 0, 1, 1], [], []>} : vector<1x128xf32>, vector<128x128xf32>, vector<1x128xf32> -> vector<1x128xf32>
    %c0_302 = arith.constant 0 : index
    %c0_303 = arith.constant 0 : index
    %266 = vector.load %arg17[%c0_302, %c0_303] : memref<1x128xf32, #tpu.memory_space<vmem>>, vector<1x128xf32>
    %267 = arith.addf %265, %266 : vector<1x128xf32>
    %268 = vector.extract_strided_slice %267 {offsets = [0, 0], sizes = [1, 10], strides = [1, 1]} : vector<1x128xf32> to vector<1x10xf32>
    %c0_304 = arith.constant 0 : index
    %c0_305 = arith.constant 0 : index
    %c0_306 = arith.constant 0 : index
    %269 = vector.load %arg18[%c0_304, %c0_305, %c0_306] : memref<1x1x10xf32, #tpu.memory_space<vmem>>, vector<1x1x10xf32>
    %270 = vector.shape_cast %269 : vector<1x1x10xf32> to vector<1x10xf32>
    %271 = vector.shape_cast %268 : vector<1x10xf32> to vector<1x1x10xf32>
    tpu.vector_store %arg18[%c0_304, %c0_305, %c0_306], %271 {strides = array<i32>} : memref<1x1x10xf32, #tpu.memory_space<vmem>>, vector<1x1x10xf32>,
    return
  }
  func.func @transform_0(%arg0: i32) -> (i32, i32, i32) {
    %c0_i32 = arith.constant 0 : i32
    %c0_i32_0 = arith.constant 0 : i32
    %c0_i32_1 = arith.constant 0 : i32
    return %arg0, %c0_i32, %c0_i32_0 : i32, i32, i32
  }
  func.func @transform_1(%arg0: i32) -> (i32, i32, i32) {
    %c0_i32 = arith.constant 0 : i32
    %c0_i32_0 = arith.constant 0 : i32
    %c0_i32_1 = arith.constant 0 : i32
    %c0_i32_2 = arith.constant 0 : i32
    return %c0_i32, %c0_i32_0, %c0_i32_1 : i32, i32, i32
  }
  func.func @transform_2(%arg0: i32) -> (i32, i32) {
    %c0_i32 = arith.constant 0 : i32
    %c0_i32_0 = arith.constant 0 : i32
    %c0_i32_1 = arith.constant 0 : i32
    return %c0_i32, %c0_i32_0 : i32, i32
  }
  func.func @transform_3(%arg0: i32) -> (i32, i32) {
    %c0_i32 = arith.constant 0 : i32
    %c0_i32_0 = arith.constant 0 : i32
    %c0_i32_1 = arith.constant 0 : i32
    return %c0_i32, %c0_i32_0 : i32, i32
  }
  func.func @transform_4(%arg0: i32) -> (i32, i32) {
    %c0_i32 = arith.constant 0 : i32
    %c0_i32_0 = arith.constant 0 : i32
    %c0_i32_1 = arith.constant 0 : i32
    return %c0_i32, %c0_i32_0 : i32, i32
  }
  func.func @transform_5(%arg0: i32) -> (i32, i32, i32, i32) {
    %c0_i32 = arith.constant 0 : i32
    %c0_i32_0 = arith.constant 0 : i32
    %c0_i32_1 = arith.constant 0 : i32
    %c0_i32_2 = arith.constant 0 : i32
    %c0_i32_3 = arith.constant 0 : i32
    return %c0_i32, %c0_i32_0, %c0_i32_1, %c0_i32_2 : i32, i32, i32, i32
  }
  func.func @transform_6(%arg0: i32) -> (i32, i32) {
    %c0_i32 = arith.constant 0 : i32
    %c0_i32_0 = arith.constant 0 : i32
    %c0_i32_1 = arith.constant 0 : i32
    return %c0_i32, %c0_i32_0 : i32, i32
  }
  func.func @transform_7(%arg0: i32) -> (i32, i32) {
    %c0_i32 = arith.constant 0 : i32
    %c0_i32_0 = arith.constant 0 : i32
    %c0_i32_1 = arith.constant 0 : i32
    return %c0_i32, %c0_i32_0 : i32, i32
  }
  func.func @transform_8(%arg0: i32) -> (i32, i32) {
    %c0_i32 = arith.constant 0 : i32
    %c0_i32_0 = arith.constant 0 : i32
    %c0_i32_1 = arith.constant 0 : i32
    return %c0_i32, %c0_i32_0 : i32, i32
  }
  func.func @transform_9(%arg0: i32) -> (i32, i32, i32) {
    %c0_i32 = arith.constant 0 : i32
    %c0_i32_0 = arith.constant 0 : i32
    %c0_i32_1 = arith.constant 0 : i32
    %c0_i32_2 = arith.constant 0 : i32
    return %c0_i32, %c0_i32_0, %c0_i32_1 : i32, i32, i32
  }
  func.func @transform_10(%arg0: i32) -> (i32, i32) {
    %c0_i32 = arith.constant 0 : i32
    %c0_i32_0 = arith.constant 0 : i32
    %c0_i32_1 = arith.constant 0 : i32
    return %c0_i32, %c0_i32_0 : i32, i32
  }
  func.func @transform_11(%arg0: i32) -> (i32, i32) {
    %c0_i32 = arith.constant 0 : i32
    %c0_i32_0 = arith.constant 0 : i32
    %c0_i32_1 = arith.constant 0 : i32
    return %c0_i32, %c0_i32_0 : i32, i32
  }
  func.func @transform_12(%arg0: i32) -> (i32, i32) {
    %c0_i32 = arith.constant 0 : i32
    %c0_i32_0 = arith.constant 0 : i32
    %c0_i32_1 = arith.constant 0 : i32
    return %c0_i32, %c0_i32_0 : i32, i32
  }
  func.func @transform_13(%arg0: i32) -> (i32, i32) {
    %c0_i32 = arith.constant 0 : i32
    %c0_i32_0 = arith.constant 0 : i32
    %c0_i32_1 = arith.constant 0 : i32
    return %c0_i32, %c0_i32_0 : i32, i32
  }
  func.func @transform_14(%arg0: i32) -> (i32, i32) {
    %c0_i32 = arith.constant 0 : i32
    %c0_i32_0 = arith.constant 0 : i32
    %c0_i32_1 = arith.constant 0 : i32
    return %c0_i32, %c0_i32_0 : i32, i32
  }
  func.func @transform_15(%arg0: i32) -> (i32, i32) {
    %c0_i32 = arith.constant 0 : i32
    %c0_i32_0 = arith.constant 0 : i32
    %c0_i32_1 = arith.constant 0 : i32
    return %c0_i32, %c0_i32_0 : i32, i32
  }
  func.func @transform_16(%arg0: i32) -> (i32, i32) {
    %c0_i32 = arith.constant 0 : i32
    %c0_i32_0 = arith.constant 0 : i32
    %c0_i32_1 = arith.constant 0 : i32
    return %c0_i32, %c0_i32_0 : i32, i32
  }
  func.func @transform_17(%arg0: i32) -> (i32, i32, i32) {
    %c0_i32 = arith.constant 0 : i32
    %c0_i32_0 = arith.constant 0 : i32
    %c0_i32_1 = arith.constant 0 : i32
    return %arg0, %c0_i32, %c0_i32_0 : i32, i32, i32
  }
}

</mosaic_0001>

<llo_original>
// kernel: lenet_forward.1
$region0: #{lenet_forward.1}
  #allocation0 [shape = 'u32[]', space=smem, size = 0x4, offset = 0x4, fixed_abs, tag = 'smem constant byte address 0x4 - core index']
  #allocation1 [shape = 'u32[72,128]{1,0:T(1,128)}', space=vmem, size = 0x9000, scoped, tag = 'internal scratch']
  #allocation2 [shape = 'f32[14,84]{1,0:T(8,128)}', space=vmem, size = 0x2000, scoped, tag = 'scratch operand']
  %s0 = inlined_call_operand.vmem [shape: f32[2,32,32], index: 0, kind: input, shape index: {}]
  %s1 = inlined_call_operand.vmem [shape: f32[5,32,168], index: 1, kind: input, shape index: {}]
  %s2 = inlined_call_operand.vmem [shape: f32[1,168], index: 2, kind: input, shape index: {}]
  %s3 = inlined_call_operand.vmem [shape: f32[14,28], index: 3, kind: input, shape index: {}]
  %s4 = inlined_call_operand.hbm [shape: f32[168,84], index: 4, kind: input, shape index: {}]
  %s5 = inlined_call_operand.hbm [shape: f32[6,5,14,160], index: 5, kind: input, shape index: {}]
  %s6 = inlined_call_operand.vmem [shape: f32[1,160], index: 6, kind: input, shape index: {}]
  %s7 = inlined_call_operand.vmem [shape: f32[5,10], index: 7, kind: input, shape index: {}]
  %s8 = inlined_call_operand.hbm [shape: f32[160,80], index: 8, kind: input, shape index: {}]
  %s9 = inlined_call_operand.hbm [shape: f32[5,80,128], index: 9, kind: input, shape index: {}]
  %s10 = inlined_call_operand.vmem [shape: f32[1,128], index: 10, kind: input, shape index: {}]
  %s11 = inlined_call_operand.hbm [shape: f32[128,128], index: 11, kind: input, shape index: {}]
  %s12 = inlined_call_operand.vmem [shape: f32[1,128], index: 12, kind: input, shape index: {}]
  %s13 = inlined_call_operand.hbm [shape: f32[128,128], index: 13, kind: input, shape index: {}]
  %s14 = inlined_call_operand.vmem [shape: f32[1,128], index: 14, kind: input, shape index: {}]
  %s15 = inlined_call_operand.hbm [shape: f32[128,128], index: 15, kind: input, shape index: {}]
  %s16 = inlined_call_operand.vmem [shape: f32[1,128], index: 16, kind: input, shape index: {}]
  %s17 = inlined_call_operand.hbm [shape: f32[2,1,10], index: 17, kind: output, shape index: {}]
  %s18 = sld [smem:[#allocation0]]
  $region129: #{lenet_forward.1} parent=0
    _
  %s20 = ssub.s32 1, %s18
  %s21 = scalar_select 0, %s20, %s18
  $region1: #{lenet_forward.1} parent=0
    #allocation3 [shape = 'u8[86016]{0}', space=vmem, size = 0x15000, scoped, tag = 'input window, operand 4, single buffered']
    #allocation4 [shape = 's32[2]{0}', space=sflag, size = 0x8, scoped, tag = 'scoped memory for lenet_forward.1']
    #allocation5 [shape = 's32[2]{0}', space=sflag, size = 0x8, scoped, tag = 'scoped memory for lenet_forward.1']
    #allocation6 [shape = 'u8[491520]{0}', space=vmem, size = 0x78000, scoped, tag = 'input window, operand 5, single buffered']
    #allocation7 [shape = 's32[1]{0}', space=sflag, size = 0x4, scoped, tag = 'scoped memory for lenet_forward.1']
    #allocation8 [shape = 'u8[81920]{0}', space=vmem, size = 0x14000, scoped, tag = 'input window, operand 8, single buffered']
    #allocation9 [shape = 'u8[204800]{0}', space=vmem, size = 0x32000, scoped, tag = 'input window, operand 9, single buffered']
    #allocation10 [shape = 's32[1]{0}', space=sflag, size = 0x4, scoped, tag = 'scoped memory for lenet_forward.1']
    #allocation11 [shape = 'u8[65536]{0}', space=vmem, size = 0x10000, scoped, tag = 'input window, operand 11, single buffered']
    #allocation12 [shape = 'u8[65536]{0}', space=vmem, size = 0x10000, scoped, tag = 'input window, operand 13, single buffered']
    #allocation13 [shape = 's32[1]{0}', space=sflag, size = 0x4, scoped, tag = 'scoped memory for lenet_forward.1']
    #allocation14 [shape = 'u8[65536]{0}', space=vmem, size = 0x10000, scoped, tag = 'input window, operand 15, single buffered']
    #allocation15 [shape = 'u8[1024]{0}', space=vmem, size = 0x400, scoped, tag = 'output window, operand 0']
    %22 = vsyncpa [#allocation4], 0
    %23 = vsyncpa [#allocation7], 0
    %24 = vsyncpa [#allocation10], 0
    %25 = vsyncpa [#allocation13], 0
    %26 = vsyncpa [#allocation5], 0
    %s27 = scalar_lea.sflag [#allocation5], 1
    %28 = vsyncpa %s27, 0
    loop: start=0, step=1, limit=4
    $region2: #{lenet_forward.1} parent=1 // loop_pre_header
      _
    $region3: #{lenet_forward.1} parent=1 // loop_header
      %s30 = sphi 0, %s34
      %p31 = scmp.ge.s32.totalorder %s30, 4
      %s40 = sphi 0, %s42
      %s43 = sphi 0, %s40
      %s44 = sphi 0, %s43
      %s60 = sphi 0, %s44
      %s64 = sphi 0, %s64
      %s66 = sphi 0, %s64
      %s67 = sphi 0, %s66
      %s81 = sphi 0, %s67
      %s85 = sphi 0, %s85
      %s87 = sphi 0, %s85
      %s88 = sphi 0, %s87
      %s102 = sphi 0, %s88
      %s106 = sphi 0, %s106
      %s108 = sphi 0, %s106
      %s109 = sphi 0, %s108
      %s123 = sphi 0, %s109
      %s127 = sphi 0, %s127
      %s129 = sphi 0, %s127
      %s130 = sphi 0, %s129
      %s144 = sphi 0, %s130
      %s148 = sphi 0, %s148
      %s150 = sphi 0, %s148
      %s151 = sphi 0, %s150
      %s165 = sphi 0, %s151
      %s169 = sphi 0, %s169
      %s171 = sphi 0, %s169
      %s172 = sphi 0, %s171
      %s186 = sphi 0, %s172
      %s190 = sphi 0, %s190
      %s192 = sphi 0, %s190
      %s193 = sphi 0, %s192
      %s207 = sphi 0, %s193
      %s211 = sphi 0, %s211
      %s213 = sphi 0, %s211
      %s214 = sphi 0, %s213
      %s228 = sphi 0, %s214
      %s232 = sphi 0, %s232
      %s234 = sphi 0, %s232
      %s235 = sphi 0, %s234
      %s249 = sphi 0, %s235
      %s253 = sphi 0, %s253
      %s255 = sphi 0, %s253
      %s256 = sphi 0, %s255
      %s270 = sphi 0, %s256
      %s274 = sphi 0, %s274
      %s276 = sphi 0, %s274
      %s277 = sphi 0, %s276
      %s291 = sphi 0, %s277
      %s295 = sphi 0, %s295
      %s297 = sphi 0, %s295
      %s298 = sphi 0, %s297
      %s312 = sphi 0, %s298
      %s316 = sphi 0, %s316
      %s318 = sphi 0, %s316
      %s319 = sphi 0, %s318
      %s333 = sphi 0, %s319
      %s337 = sphi 0, %s337
      %s339 = sphi 0, %s337
      %s340 = sphi 0, %s339
      %s354 = sphi 0, %s340
      %s358 = sphi 0, %s358
      %s360 = sphi 0, %s358
      %s361 = sphi 0, %s360
      %s375 = sphi 0, %s361
      %s379 = sphi 0, %s379
      %s381 = sphi 0, %s379
      %s382 = sphi 0, %s381
      %s396 = sphi 0, %s382
      %s402 = sphi 0, %s404
      %s405 = sphi 0, %s402
      %s406 = sphi 0, %s405
      %s422 = sphi 0, %s406
    $region4: #{lenet_forward.1} parent=1 // loop_header_branch
      %33 = sbr.rel (%p31) target = $region8
    $region5: #{lenet_forward.1} parent=1 // loop_body
      %s35 = ssub.s32 %s30, 1
      %s36 = ssub.s32 %s30, 2
      %s37 = sadd.s32 %s30, 1
      %s38 = ssub.s32 %s30, %s37
      %p39 = scmp.eq.s32.totalorder %s38, 0
      %s41 = sadd.s32 %s40, 1
      %s42 = scalar_select %p39, %s40, %s41
      %p45 = pneg %p39
      %p46 = scmp.eq.s32.totalorder %s30, 1
      %p47 = por %p45, %p46
      %p48 = scmp.ne.s32.totalorder %s40, %s43
      %p49 = scmp.eq.s32.totalorder %s30, 0
      %p50 = por %p48, %p49
      %p51 = scmp.ne.s32.totalorder %s40, %s43
      %p52 = scmp.eq.s32.totalorder %s35, 1
      %p53 = por %p51, %p52
      %p54 = scmp.ne.s32.totalorder %s43, %s44
      %p55 = scmp.eq.s32.totalorder %s35, 0
      %p56 = por %p54, %p55
      %p57 = scmp.ne.s32.totalorder %s43, %s44
      %p58 = scmp.eq.s32.totalorder %s36, 1
      %p59 = por %p57, %p58
      %p61 = scmp.ne.s32.totalorder %s44, %s60
      %p62 = scmp.eq.s32.totalorder %s36, 0
      %p63 = por %p61, %p62
      %s65 = sadd.s32 %s64, 1
      %p68 = scmp.eq.s32.totalorder %s30, 1
      %p69 = scmp.ne.s32.totalorder %s64, %s66
      %p70 = scmp.eq.s32.totalorder %s30, 0
      %p71 = por %p69, %p70
      %p72 = scmp.ne.s32.totalorder %s64, %s66
      %p73 = scmp.eq.s32.totalorder %s35, 1
      %p74 = por %p72, %p73
      %p75 = scmp.ne.s32.totalorder %s66, %s67
      %p76 = scmp.eq.s32.totalorder %s35, 0
      %p77 = por %p75, %p76
      %p78 = scmp.ne.s32.totalorder %s66, %s67
      %p79 = scmp.eq.s32.totalorder %s36, 1
      %p80 = por %p78, %p79
      %p82 = scmp.ne.s32.totalorder %s67, %s81
      %p83 = scmp.eq.s32.totalorder %s36, 0
      %p84 = por %p82, %p83
      %s86 = sadd.s32 %s85, 1
      %p89 = scmp.eq.s32.totalorder %s30, 1
      %p90 = scmp.ne.s32.totalorder %s85, %s87
      %p91 = scmp.eq.s32.totalorder %s30, 0
      %p92 = por %p90, %p91
      %p93 = scmp.ne.s32.totalorder %s85, %s87
      %p94 = scmp.eq.s32.totalorder %s35, 1
      %p95 = por %p93, %p94
      %p96 = scmp.ne.s32.totalorder %s87, %s88
      %p97 = scmp.eq.s32.totalorder %s35, 0
      %p98 = por %p96, %p97
      %p99 = scmp.ne.s32.totalorder %s87, %s88
      %p100 = scmp.eq.s32.totalorder %s36, 1
      %p101 = por %p99, %p100
      %p103 = scmp.ne.s32.totalorder %s88, %s102
      %p104 = scmp.eq.s32.totalorder %s36, 0
      %p105 = por %p103, %p104
      %s107 = sadd.s32 %s106, 1
      %p110 = scmp.eq.s32.totalorder %s30, 1
      %p111 = scmp.ne.s32.totalorder %s106, %s108
      %p112 = scmp.eq.s32.totalorder %s30, 0
      %p113 = por %p111, %p112
      %p114 = scmp.ne.s32.totalorder %s106, %s108
      %p115 = scmp.eq.s32.totalorder %s35, 1
      %p116 = por %p114, %p115
      %p117 = scmp.ne.s32.totalorder %s108, %s109
      %p118 = scmp.eq.s32.totalorder %s35, 0
      %p119 = por %p117, %p118
      %p120 = scmp.ne.s32.totalorder %s108, %s109
      %p121 = scmp.eq.s32.totalorder %s36, 1
      %p122 = por %p120, %p121
      %p124 = scmp.ne.s32.totalorder %s109, %s123
      %p125 = scmp.eq.s32.totalorder %s36, 0
      %p126 = por %p124, %p125
      %s128 = sadd.s32 %s127, 1
      %p131 = scmp.eq.s32.totalorder %s30, 1
      %p132 = scmp.ne.s32.totalorder %s127, %s129
      %p133 = scmp.eq.s32.totalorder %s30, 0
      %p134 = por %p132, %p133
      %p135 = scmp.ne.s32.totalorder %s127, %s129
      %p136 = scmp.eq.s32.totalorder %s35, 1
      %p137 = por %p135, %p136
      %p138 = scmp.ne.s32.totalorder %s129, %s130
      %p139 = scmp.eq.s32.totalorder %s35, 0
      %p140 = por %p138, %p139
      %p141 = scmp.ne.s32.totalorder %s129, %s130
      %p142 = scmp.eq.s32.totalorder %s36, 1
      %p143 = por %p141, %p142
      %p145 = scmp.ne.s32.totalorder %s130, %s144
      %p146 = scmp.eq.s32.totalorder %s36, 0
      %p147 = por %p145, %p146
      %s149 = sadd.s32 %s148, 1
      %p152 = scmp.eq.s32.totalorder %s30, 1
      %p153 = scmp.ne.s32.totalorder %s148, %s150
      %p154 = scmp.eq.s32.totalorder %s30, 0
      %p155 = por %p153, %p154
      %p156 = scmp.ne.s32.totalorder %s148, %s150
      %p157 = scmp.eq.s32.totalorder %s35, 1
      %p158 = por %p156, %p157
      %p159 = scmp.ne.s32.totalorder %s150, %s151
      %p160 = scmp.eq.s32.totalorder %s35, 0
      %p161 = por %p159, %p160
      %p162 = scmp.ne.s32.totalorder %s150, %s151
      %p163 = scmp.eq.s32.totalorder %s36, 1
      %p164 = por %p162, %p163
      %p166 = scmp.ne.s32.totalorder %s151, %s165
      %p167 = scmp.eq.s32.totalorder %s36, 0
      %p168 = por %p166, %p167
      %s170 = sadd.s32 %s169, 1
      %p173 = scmp.eq.s32.totalorder %s30, 1
      %p174 = scmp.ne.s32.totalorder %s169, %s171
      %p175 = scmp.eq.s32.totalorder %s30, 0
      %p176 = por %p174, %p175
      %p177 = scmp.ne.s32.totalorder %s169, %s171
      %p178 = scmp.eq.s32.totalorder %s35, 1
      %p179 = por %p177, %p178
      %p180 = scmp.ne.s32.totalorder %s171, %s172
      %p181 = scmp.eq.s32.totalorder %s35, 0
      %p182 = por %p180, %p181
      %p183 = scmp.ne.s32.totalorder %s171, %s172
      %p184 = scmp.eq.s32.totalorder %s36, 1
      %p185 = por %p183, %p184
      %p187 = scmp.ne.s32.totalorder %s172, %s186
      %p188 = scmp.eq.s32.totalorder %s36, 0
      %p189 = por %p187, %p188
      %s191 = sadd.s32 %s190, 1
      %p194 = scmp.eq.s32.totalorder %s30, 1
      %p195 = scmp.ne.s32.totalorder %s190, %s192
      %p196 = scmp.eq.s32.totalorder %s30, 0
      %p197 = por %p195, %p196
      %p198 = scmp.ne.s32.totalorder %s190, %s192
      %p199 = scmp.eq.s32.totalorder %s35, 1
      %p200 = por %p198, %p199
      %p201 = scmp.ne.s32.totalorder %s192, %s193
      %p202 = scmp.eq.s32.totalorder %s35, 0
      %p203 = por %p201, %p202
      %p204 = scmp.ne.s32.totalorder %s192, %s193
      %p205 = scmp.eq.s32.totalorder %s36, 1
      %p206 = por %p204, %p205
      %p208 = scmp.ne.s32.totalorder %s193, %s207
      %p209 = scmp.eq.s32.totalorder %s36, 0
      %p210 = por %p208, %p209
      %s212 = sadd.s32 %s211, 1
      %p215 = scmp.eq.s32.totalorder %s30, 1
      %p216 = scmp.ne.s32.totalorder %s211, %s213
      %p217 = scmp.eq.s32.totalorder %s30, 0
      %p218 = por %p216, %p217
      %p219 = scmp.ne.s32.totalorder %s211, %s213
      %p220 = scmp.eq.s32.totalorder %s35, 1
      %p221 = por %p219, %p220
      %p222 = scmp.ne.s32.totalorder %s213, %s214
      %p223 = scmp.eq.s32.totalorder %s35, 0
      %p224 = por %p222, %p223
      %p225 = scmp.ne.s32.totalorder %s213, %s214
      %p226 = scmp.eq.s32.totalorder %s36, 1
      %p227 = por %p225, %p226
      %p229 = scmp.ne.s32.totalorder %s214, %s228
      %p230 = scmp.eq.s32.totalorder %s36, 0
      %p231 = por %p229, %p230
      %s233 = sadd.s32 %s232, 1
      %p236 = scmp.eq.s32.totalorder %s30, 1
      %p237 = scmp.ne.s32.totalorder %s232, %s234
      %p238 = scmp.eq.s32.totalorder %s30, 0
      %p239 = por %p237, %p238
      %p240 = scmp.ne.s32.totalorder %s232, %s234
      %p241 = scmp.eq.s32.totalorder %s35, 1
      %p242 = por %p240, %p241
      %p243 = scmp.ne.s32.totalorder %s234, %s235
      %p244 = scmp.eq.s32.totalorder %s35, 0
      %p245 = por %p243, %p244
      %p246 = scmp.ne.s32.totalorder %s234, %s235
      %p247 = scmp.eq.s32.totalorder %s36, 1
      %p248 = por %p246, %p247
      %p250 = scmp.ne.s32.totalorder %s235, %s249
      %p251 = scmp.eq.s32.totalorder %s36, 0
      %p252 = por %p250, %p251
      %s254 = sadd.s32 %s253, 1
      %p257 = scmp.eq.s32.totalorder %s30, 1
      %p258 = scmp.ne.s32.totalorder %s253, %s255
      %p259 = scmp.eq.s32.totalorder %s30, 0
      %p260 = por %p258, %p259
      %p261 = scmp.ne.s32.totalorder %s253, %s255
      %p262 = scmp.eq.s32.totalorder %s35, 1
      %p263 = por %p261, %p262
      %p264 = scmp.ne.s32.totalorder %s255, %s256
      %p265 = scmp.eq.s32.totalorder %s35, 0
      %p266 = por %p264, %p265
      %p267 = scmp.ne.s32.totalorder %s255, %s256
      %p268 = scmp.eq.s32.totalorder %s36, 1
      %p269 = por %p267, %p268
      %p271 = scmp.ne.s32.totalorder %s256, %s270
      %p272 = scmp.eq.s32.totalorder %s36, 0
      %p273 = por %p271, %p272
      %s275 = sadd.s32 %s274, 1
      %p278 = scmp.eq.s32.totalorder %s30, 1
      %p279 = scmp.ne.s32.totalorder %s274, %s276
      %p280 = scmp.eq.s32.totalorder %s30, 0
      %p281 = por %p279, %p280
      %p282 = scmp.ne.s32.totalorder %s274, %s276
      %p283 = scmp.eq.s32.totalorder %s35, 1
      %p284 = por %p282, %p283
      %p285 = scmp.ne.s32.totalorder %s276, %s277
      %p286 = scmp.eq.s32.totalorder %s35, 0
      %p287 = por %p285, %p286
      %p288 = scmp.ne.s32.totalorder %s276, %s277
      %p289 = scmp.eq.s32.totalorder %s36, 1
      %p290 = por %p288, %p289
      %p292 = scmp.ne.s32.totalorder %s277, %s291
      %p293 = scmp.eq.s32.totalorder %s36, 0
      %p294 = por %p292, %p293
      %s296 = sadd.s32 %s295, 1
      %p299 = scmp.eq.s32.totalorder %s30, 1
      %p300 = scmp.ne.s32.totalorder %s295, %s297
      %p301 = scmp.eq.s32.totalorder %s30, 0
      %p302 = por %p300, %p301
      %p303 = scmp.ne.s32.totalorder %s295, %s297
      %p304 = scmp.eq.s32.totalorder %s35, 1
      %p305 = por %p303, %p304
      %p306 = scmp.ne.s32.totalorder %s297, %s298
      %p307 = scmp.eq.s32.totalorder %s35, 0
      %p308 = por %p306, %p307
      %p309 = scmp.ne.s32.totalorder %s297, %s298
      %p310 = scmp.eq.s32.totalorder %s36, 1
      %p311 = por %p309, %p310
      %p313 = scmp.ne.s32.totalorder %s298, %s312
      %p314 = scmp.eq.s32.totalorder %s36, 0
      %p315 = por %p313, %p314
      %s317 = sadd.s32 %s316, 1
      %p320 = scmp.eq.s32.totalorder %s30, 1
      %p321 = scmp.ne.s32.totalorder %s316, %s318
      %p322 = scmp.eq.s32.totalorder %s30, 0
      %p323 = por %p321, %p322
      %p324 = scmp.ne.s32.totalorder %s316, %s318
      %p325 = scmp.eq.s32.totalorder %s35, 1
      %p326 = por %p324, %p325
      %p327 = scmp.ne.s32.totalorder %s318, %s319
      %p328 = scmp.eq.s32.totalorder %s35, 0
      %p329 = por %p327, %p328
      %p330 = scmp.ne.s32.totalorder %s318, %s319
      %p331 = scmp.eq.s32.totalorder %s36, 1
      %p332 = por %p330, %p331
      %p334 = scmp.ne.s32.totalorder %s319, %s333
      %p335 = scmp.eq.s32.totalorder %s36, 0
      %p336 = por %p334, %p335
      %s338 = sadd.s32 %s337, 1
      %p341 = scmp.eq.s32.totalorder %s30, 1
      %p342 = scmp.ne.s32.totalorder %s337, %s339
      %p343 = scmp.eq.s32.totalorder %s30, 0
      %p344 = por %p342, %p343
      %p345 = scmp.ne.s32.totalorder %s337, %s339
      %p346 = scmp.eq.s32.totalorder %s35, 1
      %p347 = por %p345, %p346
      %p348 = scmp.ne.s32.totalorder %s339, %s340
      %p349 = scmp.eq.s32.totalorder %s35, 0
      %p350 = por %p348, %p349
      %p351 = scmp.ne.s32.totalorder %s339, %s340
      %p352 = scmp.eq.s32.totalorder %s36, 1
      %p353 = por %p351, %p352
      %p355 = scmp.ne.s32.totalorder %s340, %s354
      %p356 = scmp.eq.s32.totalorder %s36, 0
      %p357 = por %p355, %p356
      %s359 = sadd.s32 %s358, 1
      %p362 = scmp.eq.s32.totalorder %s30, 1
      %p363 = scmp.ne.s32.totalorder %s358, %s360
      %p364 = scmp.eq.s32.totalorder %s30, 0
      %p365 = por %p363, %p364
      %p366 = scmp.ne.s32.totalorder %s358, %s360
      %p367 = scmp.eq.s32.totalorder %s35, 1
      %p368 = por %p366, %p367
      %p369 = scmp.ne.s32.totalorder %s360, %s361
      %p370 = scmp.eq.s32.totalorder %s35, 0
      %p371 = por %p369, %p370
      %p372 = scmp.ne.s32.totalorder %s360, %s361
      %p373 = scmp.eq.s32.totalorder %s36, 1
      %p374 = por %p372, %p373
      %p376 = scmp.ne.s32.totalorder %s361, %s375
      %p377 = scmp.eq.s32.totalorder %s36, 0
      %p378 = por %p376, %p377
      %s380 = sadd.s32 %s379, 1
      %p383 = scmp.eq.s32.totalorder %s30, 1
      %p384 = scmp.ne.s32.totalorder %s379, %s381
      %p385 = scmp.eq.s32.totalorder %s30, 0
      %p386 = por %p384, %p385
      %p387 = scmp.ne.s32.totalorder %s379, %s381
      %p388 = scmp.eq.s32.totalorder %s35, 1
      %p389 = por %p387, %p388
      %p390 = scmp.ne.s32.totalorder %s381, %s382
      %p391 = scmp.eq.s32.totalorder %s35, 0
      %p392 = por %p390, %p391
      %p393 = scmp.ne.s32.totalorder %s381, %s382
      %p394 = scmp.eq.s32.totalorder %s36, 1
      %p395 = por %p393, %p394
      %p397 = scmp.ne.s32.totalorder %s382, %s396
      %p398 = scmp.eq.s32.totalorder %s36, 0
      %p399 = por %p397, %p398
      %s400 = ssub.s32 %s30, %s37
      %p401 = scmp.eq.s32.totalorder %s400, 0
      %s403 = sadd.s32 %s402, 1
      %s404 = scalar_select %p401, %s402, %s403
      %p407 = pneg %p401
      %p408 = scmp.eq.s32.totalorder %s30, 1
      %p409 = por %p407, %p408
      %p410 = scmp.ne.s32.totalorder %s402, %s405
      %p411 = scmp.eq.s32.totalorder %s30, 0
      %p412 = por %p410, %p411
      %p413 = scmp.ne.s32.totalorder %s402, %s405
      %p414 = scmp.eq.s32.totalorder %s35, 1
      %p415 = por %p413, %p414
      %p416 = scmp.ne.s32.totalorder %s405, %s406
      %p417 = scmp.eq.s32.totalorder %s35, 0
      %p418 = por %p416, %p417
      %p419 = scmp.ne.s32.totalorder %s405, %s406
      %p420 = scmp.eq.s32.totalorder %s36, 1
      %p421 = por %p419, %p420
      %p423 = scmp.ne.s32.totalorder %s406, %s422
      %p424 = scmp.eq.s32.totalorder %s36, 0
      %p425 = por %p423, %p424
      %p426 = scmp.le.s32.totalorder 1, %s30
      %p427 = scmp.lt.s32.totalorder %s30, 3
      %p428 = pnand %p426, %p427
      %p429 = pneg %p428
      // Predicated region
      $region9: #{lenet_forward.1} parent=5 // pred_check
        _
      $region10: #{lenet_forward.1} parent=5 // pred_check_branch
        %431 = sbr.rel (%p428) target = $region12
      $region11: #{lenet_forward.1} parent=5 // pred_region
        %s432 = ssub.s32 %s30, 1
        // Predicated region
        $region13: #{lenet_forward.1} parent=11 // pred_check
          %p433 = pneg %p77
        $region14: #{lenet_forward.1} parent=11 // pred_check_branch
          %435 = sbr.rel (%p433) target = $region16
        $region15: #{lenet_forward.1} parent=11 // pred_region
          _
        $region16: #{lenet_forward.1} parent=11 // pred_fallthru
          _
        // Predicated region
        $region17: #{lenet_forward.1} parent=11 // pred_check
          %p436 = pneg %p98
        $region18: #{lenet_forward.1} parent=11 // pred_check_branch
          %438 = sbr.rel (%p436) target = $region20
        $region19: #{lenet_forward.1} parent=11 // pred_region
          _
        $region20: #{lenet_forward.1} parent=11 // pred_fallthru
          _
        // Predicated region
        $region21: #{lenet_forward.1} parent=11 // pred_check
          %p439 = pneg %p119
        $region22: #{lenet_forward.1} parent=11 // pred_check_branch
          %441 = sbr.rel (%p439) target = $region24
        $region23: #{lenet_forward.1} parent=11 // pred_region
          _
        $region24: #{lenet_forward.1} parent=11 // pred_fallthru
          _
        // Predicated region
        $region25: #{lenet_forward.1} parent=11 // pred_check
          %p442 = pneg %p140
        $region26: #{lenet_forward.1} parent=11 // pred_check_branch
          %444 = sbr.rel (%p442) target = $region28
        $region27: #{lenet_forward.1} parent=11 // pred_region
          %446 = vsyncadd [#allocation4], 0
          %s447 = sshll.u32 %s4, 4
          %s448 = int_to_ptr.hbm [resolvable:$true] %s447
          %s449 = sshll.u32 [#allocation3], 4
          %s450 = int_to_ptr.vmem [resolvable:$true] %s449
          %455 = dma.hbm_to_vmem [thread:$0]  %s448, 2688, %s450, [#allocation4], 128, 128, 8
        $region28: #{lenet_forward.1} parent=11 // pred_fallthru
          _
        // Predicated region
        $region29: #{lenet_forward.1} parent=11 // pred_check
          %p456 = pneg %p161
        $region30: #{lenet_forward.1} parent=11 // pred_check_branch
          %458 = sbr.rel (%p456) target = $region32
        $region31: #{lenet_forward.1} parent=11 // pred_region
          %460 = vsyncadd [#allocation7], 0
          %s461 = sshll.u32 %s5, 4
          %s462 = int_to_ptr.hbm [resolvable:$true] %s461
          %s463 = sshll.u32 [#allocation6], 4
          %s464 = int_to_ptr.vmem [resolvable:$true] %s463
          %469 = dma.hbm_to_vmem [thread:$0]  %s462, 15360, %s464, [#allocation7], 256, 256, 16
        $region32: #{lenet_forward.1} parent=11 // pred_fallthru
          _
        // Predicated region
        $region33: #{lenet_forward.1} parent=11 // pred_check
          %p470 = pneg %p182
        $region34: #{lenet_forward.1} parent=11 // pred_check_branch
          %472 = sbr.rel (%p470) target = $region36
        $region35: #{lenet_forward.1} parent=11 // pred_region
          _
        $region36: #{lenet_forward.1} parent=11 // pred_fallthru
          _
        // Predicated region
        $region37: #{lenet_forward.1} parent=11 // pred_check
          %p473 = pneg %p203
        $region38: #{lenet_forward.1} parent=11 // pred_check_branch
          %475 = sbr.rel (%p473) target = $region40
        $region39: #{lenet_forward.1} parent=11 // pred_region
          _
        $region40: #{lenet_forward.1} parent=11 // pred_fallthru
          _
        // Predicated region
        $region41: #{lenet_forward.1} parent=11 // pred_check
          %p476 = pneg %p224
        $region42: #{lenet_forward.1} parent=11 // pred_check_branch
          %478 = sbr.rel (%p476) target = $region44
        $region43: #{lenet_forward.1} parent=11 // pred_region
          %480 = vsyncadd [#allocation7], 0
          %s481 = sshll.u32 %s8, 4
          %s482 = int_to_ptr.hbm [resolvable:$true] %s481
          %s483 = sshll.u32 [#allocation8], 4
          %s484 = int_to_ptr.vmem [resolvable:$true] %s483
          %489 = dma.hbm_to_vmem [thread:$0]  %s482, 2560, %s484, [#allocation7], 128, 128, 8
        $region44: #{lenet_forward.1} parent=11 // pred_fallthru
          _
        // Predicated region
        $region45: #{lenet_forward.1} parent=11 // pred_check
          %p490 = pneg %p245
        $region46: #{lenet_forward.1} parent=11 // pred_check_branch
          %492 = sbr.rel (%p490) target = $region48
        $region47: #{lenet_forward.1} parent=11 // pred_region
          %494 = vsyncadd [#allocation10], 0
          %s495 = sshll.u32 %s9, 4
          %s496 = int_to_ptr.hbm [resolvable:$true] %s495
          %s497 = sshll.u32 [#allocation9], 4
          %s498 = int_to_ptr.vmem [resolvable:$true] %s497
          %503 = dma.hbm_to_vmem [thread:$0]  %s496, 6400, %s498, [#allocation10], 128, 128, 8
        $region48: #{lenet_forward.1} parent=11 // pred_fallthru
          _
        // Predicated region
        $region49: #{lenet_forward.1} parent=11 // pred_check
          %p504 = pneg %p266
        $region50: #{lenet_forward.1} parent=11 // pred_check_branch
          %506 = sbr.rel (%p504) target = $region52
        $region51: #{lenet_forward.1} parent=11 // pred_region
          _
        $region52: #{lenet_forward.1} parent=11 // pred_fallthru
          _
        // Predicated region
        $region53: #{lenet_forward.1} parent=11 // pred_check
          %p507 = pneg %p287
        $region54: #{lenet_forward.1} parent=11 // pred_check_branch
          %509 = sbr.rel (%p507) target = $region56
        $region55: #{lenet_forward.1} parent=11 // pred_region
          %511 = vsyncadd [#allocation10], 0
          %s512 = sshll.u32 %s11, 4
          %s513 = int_to_ptr.hbm [resolvable:$true] %s512
          %s514 = sshll.u32 [#allocation11], 4
          %s515 = int_to_ptr.vmem [resolvable:$true] %s514
          %520 = dma.hbm_to_vmem [thread:$0]  %s513, 2048, %s515, [#allocation10], 128, 128, 8
        $region56: #{lenet_forward.1} parent=11 // pred_fallthru
          _
        // Predicated region
        $region57: #{lenet_forward.1} parent=11 // pred_check
          %p521 = pneg %p308
        $region58: #{lenet_forward.1} parent=11 // pred_check_branch
          %523 = sbr.rel (%p521) target = $region60
        $region59: #{lenet_forward.1} parent=11 // pred_region
          _
        $region60: #{lenet_forward.1} parent=11 // pred_fallthru
          _
        // Predicated region
        $region61: #{lenet_forward.1} parent=11 // pred_check
          %p524 = pneg %p329
        $region62: #{lenet_forward.1} parent=11 // pred_check_branch
          %526 = sbr.rel (%p524) target = $region64
        $region63: #{lenet_forward.1} parent=11 // pred_region
          %528 = vsyncadd [#allocation13], 0
          %s529 = sshll.u32 %s13, 4
          %s530 = int_to_ptr.hbm [resolvable:$true] %s529
          %s531 = sshll.u32 [#allocation12], 4
          %s532 = int_to_ptr.vmem [resolvable:$true] %s531
          %537 = dma.hbm_to_vmem [thread:$0]  %s530, 2048, %s532, [#allocation13], 128, 128, 8
        $region64: #{lenet_forward.1} parent=11 // pred_fallthru
          _
        // Predicated region
        $region65: #{lenet_forward.1} parent=11 // pred_check
          %p538 = pneg %p350
        $region66: #{lenet_forward.1} parent=11 // pred_check_branch
          %540 = sbr.rel (%p538) target = $region68
        $region67: #{lenet_forward.1} parent=11 // pred_region
          _
        $region68: #{lenet_forward.1} parent=11 // pred_fallthru
          _
        // Predicated region
        $region69: #{lenet_forward.1} parent=11 // pred_check
          %p541 = pneg %p371
        $region70: #{lenet_forward.1} parent=11 // pred_check_branch
          %543 = sbr.rel (%p541) target = $region72
        $region71: #{lenet_forward.1} parent=11 // pred_region
          %545 = vsyncadd [#allocation13], 0
          %s546 = sshll.u32 %s15, 4
          %s547 = int_to_ptr.hbm [resolvable:$true] %s546
          %s548 = sshll.u32 [#allocation14], 4
          %s549 = int_to_ptr.vmem [resolvable:$true] %s548
          %554 = dma.hbm_to_vmem [thread:$0]  %s547, 2048, %s549, [#allocation13], 128, 128, 8
        $region72: #{lenet_forward.1} parent=11 // pred_fallthru
          _
        // Predicated region
        $region73: #{lenet_forward.1} parent=11 // pred_check
          %p555 = pneg %p392
        $region74: #{lenet_forward.1} parent=11 // pred_check_branch
          %557 = sbr.rel (%p555) target = $region76
        $region75: #{lenet_forward.1} parent=11 // pred_region
          _
        $region76: #{lenet_forward.1} parent=11 // pred_fallthru
          _
      $region12: #{lenet_forward.1} parent=5 // pred_fallthru
        _
      %p558 = scmp.lt.s32.totalorder %s30, 2
      // Predicated region
      $region77: #{lenet_forward.1} parent=5 // pred_check
        %p559 = pneg %p558
      $region78: #{lenet_forward.1} parent=5 // pred_check_branch
        %561 = sbr.rel (%p559) target = $region80
      $region79: #{lenet_forward.1} parent=5 // pred_region
        // Predicated region
        $region81: #{lenet_forward.1} parent=79 // pred_check
          %p562 = pneg %p50
        $region82: #{lenet_forward.1} parent=79 // pred_check_branch
          %564 = sbr.rel (%p562) target = $region84
        $region83: #{lenet_forward.1} parent=79 // pred_region
          %p565 = scmp.lt.s32.totalorder %s30, 1
          %s566 = scalar_select %p565, %s30, 1
          %s567 = smul.addr %s566, 4
          %s568 = smul.addr %s567, 8
          %s569 = scalar_lea.vmem %s0, %s568
        $region84: #{lenet_forward.1} parent=79 // pred_fallthru
          _
      $region80: #{lenet_forward.1} parent=5 // pred_fallthru
        _
      %p570 = scmp.le.s32.totalorder 1, %s30
      %p571 = scmp.lt.s32.totalorder %s30, 3
      %p572 = pnand %p570, %p571
      %p573 = pneg %p572
      // Predicated region
      $region85: #{lenet_forward.1} parent=5 // pred_check
        _
      $region86: #{lenet_forward.1} parent=5 // pred_check_branch
        %575 = sbr.rel (%p572) target = $region88
      $region87: #{lenet_forward.1} parent=5 // pred_region
        %s576 = ssub.s32 %s30, 1
        // Predicated region
        $region89: #{lenet_forward.1} parent=87 // pred_check
          %p577 = pneg %p140
        $region90: #{lenet_forward.1} parent=87 // pred_check_branch
          %579 = sbr.rel (%p577) target = $region92
        $region91: #{lenet_forward.1} parent=87 // pred_region
          %581 = dma.done [#allocation4], 2688
        $region92: #{lenet_forward.1} parent=87 // pred_fallthru
          _
        // Predicated region
        $region93: #{lenet_forward.1} parent=87 // pred_check
          %p582 = pneg %p161
        $region94: #{lenet_forward.1} parent=87 // pred_check_branch
          %584 = sbr.rel (%p582) target = $region96
        $region95: #{lenet_forward.1} parent=87 // pred_region
          %586 = dma.done [#allocation7], 15360
        $region96: #{lenet_forward.1} parent=87 // pred_fallthru
          _
        // Predicated region
        $region97: #{lenet_forward.1} parent=87 // pred_check
          %p587 = pneg %p224
        $region98: #{lenet_forward.1} parent=87 // pred_check_branch
          %589 = sbr.rel (%p587) target = $region100
        $region99: #{lenet_forward.1} parent=87 // pred_region
          %591 = dma.done [#allocation7], 2560
        $region100: #{lenet_forward.1} parent=87 // pred_fallthru
          _
        // Predicated region
        $region101: #{lenet_forward.1} parent=87 // pred_check
          %p592 = pneg %p245
        $region102: #{lenet_forward.1} parent=87 // pred_check_branch
          %594 = sbr.rel (%p592) target = $region104
        $region103: #{lenet_forward.1} parent=87 // pred_region
          %596 = dma.done [#allocation10], 6400
        $region104: #{lenet_forward.1} parent=87 // pred_fallthru
          _
        // Predicated region
        $region105: #{lenet_forward.1} parent=87 // pred_check
          %p597 = pneg %p287
        $region106: #{lenet_forward.1} parent=87 // pred_check_branch
          %599 = sbr.rel (%p597) target = $region108
        $region107: #{lenet_forward.1} parent=87 // pred_region
          %601 = dma.done [#allocation10], 2048
        $region108: #{lenet_forward.1} parent=87 // pred_fallthru
          _
        // Predicated region
        $region109: #{lenet_forward.1} parent=87 // pred_check
          %p602 = pneg %p329
        $region110: #{lenet_forward.1} parent=87 // pred_check_branch
          %604 = sbr.rel (%p602) target = $region112
        $region111: #{lenet_forward.1} parent=87 // pred_region
          %606 = dma.done [#allocation13], 2048
        $region112: #{lenet_forward.1} parent=87 // pred_fallthru
          _
        // Predicated region
        $region113: #{lenet_forward.1} parent=87 // pred_check
          %p607 = pneg %p371
        $region114: #{lenet_forward.1} parent=87 // pred_check_branch
          %609 = sbr.rel (%p607) target = $region116
        $region115: #{lenet_forward.1} parent=87 // pred_region
          %611 = dma.done [#allocation13], 2048
        $region116: #{lenet_forward.1} parent=87 // pred_fallthru
          _
        %p612 = scmp.lt.s32.totalorder %s35, 1
        %s613 = scalar_select %p612, %s35, 1
        %s614 = smul.addr %s613, 4
        %s615 = smul.addr %s614, 8
        %s616 = scalar_lea.vmem %s0, %s615
        %p617 = pneg %p56
        %p618 = pneg %p53
        %p619 = pneg %p77
        %p620 = pneg %p74
        %p621 = pneg %p98
        %p622 = pneg %p95
        %p623 = pneg %p119
        %p624 = pneg %p116
        %p625 = pneg %p140
        %p626 = pneg %p137
        %p627 = pneg %p161
        %p628 = pneg %p158
        %p629 = pneg %p182
        %p630 = pneg %p179
        %p631 = pneg %p203
        %p632 = pneg %p200
        %p633 = pneg %p224
        %p634 = pneg %p221
        %p635 = pneg %p245
        %p636 = pneg %p242
        %p637 = pneg %p266
        %p638 = pneg %p263
        %p639 = pneg %p287
        %p640 = pneg %p284
        %p641 = pneg %p308
        %p642 = pneg %p305
        %p643 = pneg %p329
        %p644 = pneg %p326
        %p645 = pneg %p350
        %p646 = pneg %p347
        %p647 = pneg %p371
        %p648 = pneg %p368
        %p649 = pneg %p392
        %p650 = pneg %p389
        %p651 = pneg %p418
        %p652 = pneg %p415
        %s653 = sand.u32 %s405, 1
        %s654 = scalar_lea.sflag [#allocation5], %s653
        %s655 = sand.u32 %s405, 1
        %s656 = scalar_lea.vmem [#allocation15], %s655
        %p657 = scmp.lt.s32.totalorder %s35, 1
        %s658 = scalar_select %p657, %s35, 1
        %s659 = smul.addr %s658, 4
        %s660 = smul.addr %s659, 8
        %s661 = scalar_lea.vmem %s0, %s660
        %v662 = vld [vmem:[%s661] sm:$0xff]
        %v663 = vld [vmem:[%s661 + $0x8] sm:$0xff]
        %v664 = vld [vmem:[%s661 + $0x10] sm:$0xff]
        %v665 = vld [vmem:[%s661 + $0x18] sm:$0xf]
        %v666 = vld [vmem:[%s1] sm:$0xff]
        %v667 = vld [vmem:[%s1 + $0x8] sm:$0xff]
        %v668 = vld [vmem:[%s1 + $0x10] sm:$0xff]
        %v669 = vld [vmem:[%s1 + $0x18] sm:$0xff]
        %v670 = vld [vmem:[%s1 + $0x20] sm:$0xff]
        %v671 = vld [vmem:[%s1 + $0x28] sm:$0xff]
        %v672 = vld [vmem:[%s1 + $0x30] sm:$0xff]
        %v673 = vld [vmem:[%s1 + $0x38] sm:$0xff]
        %v674 = vld [vmem:[%s661 + $0x1] sm:$0xff]
        %v675 = vld [vmem:[%s661 + $0x9] sm:$0xff]
        %v676 = vld [vmem:[%s661 + $0x11] sm:$0xff]
        %v677 = vld [vmem:[%s661 + $0x19] sm:$0xf]
        %s678 = scalar_lea.vmem %s1, 64
        %v679 = vld [vmem:[%s678] sm:$0xff]
        %v680 = vld [vmem:[%s678 + $0x8] sm:$0xff]
        %v681 = vld [vmem:[%s678 + $0x10] sm:$0xff]
        %v682 = vld [vmem:[%s678 + $0x18] sm:$0xff]
        %v683 = vld [vmem:[%s678 + $0x20] sm:$0xff]
        %v684 = vld [vmem:[%s678 + $0x28] sm:$0xff]
        %v685 = vld [vmem:[%s678 + $0x30] sm:$0xff]
        %v686 = vld [vmem:[%s678 + $0x38] sm:$0xff]
        %vm687 = vcmask 261120
        %v689 = vsel %vm687, %v674, 0
        %v692 = vsel %vm687, %v675, 0
        %v695 = vsel %vm687, %v676, 0
        %v698 = vsel %vm687, %v677, 0
        %700 = vmatpush.msra.mxu0 0.0
        %701 = vmatpush.msra.mxu0 0.0
        %702 = vmatpush.msra.mxu0 0.0
        %703 = vmatpush.msra.mxu0 0.0
        %704 = vmatpush.msra.mxu0 0.0
        %705 = vmatpush.msra.mxu0 0.0
        %706 = vmatpush.msra.mxu0 0.0
        %707 = vmatpush.msra.mxu0 0.0
        %708 = vmatpush.msra.mxu0 0.0
        %709 = vmatpush.msra.mxu0 0.0
        %710 = vmatpush.msra.mxu0 0.0
        %711 = vmatpush.msra.mxu0 0.0
        %712 = vmatpush.msra.mxu0 %v685
        %713 = vmatpush.msra.mxu0 %v683
        %714 = vmatpush.msra.mxu0 %v681
        %715 = vmatpush.msra.mxu0 %v679
        %716 = vmatmul.f32.gmra.mxu0 %v689
        %v717 = vpop.f32.mrf.mxu0
        %v718 = vadd.f32 0.0, %v717
        %719 = vmatmul.f32.gmra.mxu0 %v692
        %v720 = vpop.f32.mrf.mxu0
        %v721 = vadd.f32 0.0, %v720
        %722 = vmatmul.f32.gmra.mxu0 %v695
        %v723 = vpop.f32.mrf.mxu0
        %v724 = vadd.f32 0.0, %v723
        %725 = vmatmul.f32.gmra.mxu0 %v698
        %v726 = vpop.f32.mrf.mxu0
        %v727 = vadd.f32 0.0, %v726
        %728 = vdwg.mxu0
        %729 = vmatpush.msra.mxu0 0.0
        %730 = vmatpush.msra.mxu0 0.0
        %731 = vmatpush.msra.mxu0 0.0
        %732 = vmatpush.msra.mxu0 0.0
        %733 = vmatpush.msra.mxu0 0.0
        %734 = vmatpush.msra.mxu0 0.0
        %735 = vmatpush.msra.mxu0 0.0
        %736 = vmatpush.msra.mxu0 0.0
        %737 = vmatpush.msra.mxu0 0.0
        %738 = vmatpush.msra.mxu0 0.0
        %739 = vmatpush.msra.mxu0 0.0
        %740 = vmatpush.msra.mxu0 0.0
        %741 = vmatpush.msra.mxu0 %v686
        %742 = vmatpush.msra.mxu0 %v684
        %743 = vmatpush.msra.mxu0 %v682
        %744 = vmatpush.msra.mxu0 %v680
        %745 = vmatmul.f32.gmra.mxu0 %v689
        %v746 = vpop.f32.mrf.mxu0
        %v747 = vadd.f32 0.0, %v746
        %748 = vmatmul.f32.gmra.mxu0 %v692
        %v749 = vpop.f32.mrf.mxu0
        %v750 = vadd.f32 0.0, %v749
        %751 = vmatmul.f32.gmra.mxu0 %v695
        %v752 = vpop.f32.mrf.mxu0
        %v753 = vadd.f32 0.0, %v752
        %754 = vmatmul.f32.gmra.mxu0 %v698
        %v755 = vpop.f32.mrf.mxu0
        %v756 = vadd.f32 0.0, %v755
        %757 = vdwg.mxu0
        %v759 = vsel %vm687, %v662, 0
        %v762 = vsel %vm687, %v663, 0
        %v765 = vsel %vm687, %v664, 0
        %v768 = vsel %vm687, %v665, 0
        %770 = vmatpush.msra.mxu0 0.0
        %771 = vmatpush.msra.mxu0 0.0
        %772 = vmatpush.msra.mxu0 0.0
        %773 = vmatpush.msra.mxu0 0.0
        %774 = vmatpush.msra.mxu0 0.0
        %775 = vmatpush.msra.mxu0 0.0
        %776 = vmatpush.msra.mxu0 0.0
        %777 = vmatpush.msra.mxu0 0.0
        %778 = vmatpush.msra.mxu0 0.0
        %779 = vmatpush.msra.mxu0 0.0
        %780 = vmatpush.msra.mxu0 0.0
        %781 = vmatpush.msra.mxu0 0.0
        %782 = vmatpush.msra.mxu0 %v672
        %783 = vmatpush.msra.mxu0 %v670
        %784 = vmatpush.msra.mxu0 %v668
        %785 = vmatpush.msra.mxu0 %v666
        %786 = vmatmul.f32.gmra.mxu0 %v759
        %v787 = vpop.f32.mrf.mxu0
        %v788 = vadd.f32 %v718, %v787
        %789 = vmatmul.f32.gmra.mxu0 %v762
        %v790 = vpop.f32.mrf.mxu0
        %v791 = vadd.f32 %v721, %v790
        %792 = vmatmul.f32.gmra.mxu0 %v765
        %v793 = vpop.f32.mrf.mxu0
        %v794 = vadd.f32 %v724, %v793
        %795 = vmatmul.f32.gmra.mxu0 %v768
        %v796 = vpop.f32.mrf.mxu0
        %v797 = vadd.f32 %v727, %v796
        %798 = vdwg.mxu0
        %799 = vmatpush.msra.mxu0 0.0
        %800 = vmatpush.msra.mxu0 0.0
        %801 = vmatpush.msra.mxu0 0.0
        %802 = vmatpush.msra.mxu0 0.0
        %803 = vmatpush.msra.mxu0 0.0
        %804 = vmatpush.msra.mxu0 0.0
        %805 = vmatpush.msra.mxu0 0.0
        %806 = vmatpush.msra.mxu0 0.0
        %807 = vmatpush.msra.mxu0 0.0
        %808 = vmatpush.msra.mxu0 0.0
        %809 = vmatpush.msra.mxu0 0.0
        %810 = vmatpush.msra.mxu0 0.0
        %811 = vmatpush.msra.mxu0 %v673
        %812 = vmatpush.msra.mxu0 %v671
        %813 = vmatpush.msra.mxu0 %v669
        %814 = vmatpush.msra.mxu0 %v667
        %815 = vmatmul.f32.gmra.mxu0 %v759
        %v816 = vpop.f32.mrf.mxu0
        %v817 = vadd.f32 %v747, %v816
        %818 = vmatmul.f32.gmra.mxu0 %v762
        %v819 = vpop.f32.mrf.mxu0
        %v820 = vadd.f32 %v750, %v819
        %821 = vmatmul.f32.gmra.mxu0 %v765
        %v822 = vpop.f32.mrf.mxu0
        %v823 = vadd.f32 %v753, %v822
        %824 = vmatmul.f32.gmra.mxu0 %v768
        %v825 = vpop.f32.mrf.mxu0
        %v826 = vadd.f32 %v756, %v825
        %827 = vdwg.mxu0
        %v828 = vld [vmem:[%s661 + $0x2] sm:$0xff]
        %v829 = vld [vmem:[%s661 + $0xa] sm:$0xff]
        %v830 = vld [vmem:[%s661 + $0x12] sm:$0xff]
        %v831 = vld [vmem:[%s661 + $0x1a] sm:$0xf]
        %s832 = scalar_lea.vmem %s1, 128
        %v833 = vld [vmem:[%s832] sm:$0xff]
        %v834 = vld [vmem:[%s832 + $0x8] sm:$0xff]
        %v835 = vld [vmem:[%s832 + $0x10] sm:$0xff]
        %v836 = vld [vmem:[%s832 + $0x18] sm:$0xff]
        %v837 = vld [vmem:[%s832 + $0x20] sm:$0xff]
        %v838 = vld [vmem:[%s832 + $0x28] sm:$0xff]
        %v839 = vld [vmem:[%s832 + $0x30] sm:$0xff]
        %v840 = vld [vmem:[%s832 + $0x38] sm:$0xff]
        %v842 = vsel %vm687, %v828, 0
        %v845 = vsel %vm687, %v829, 0
        %v848 = vsel %vm687, %v830, 0
        %v851 = vsel %vm687, %v831, 0
        %853 = vmatpush.msra.mxu0 0.0
        %854 = vmatpush.msra.mxu0 0.0
        %855 = vmatpush.msra.mxu0 0.0
        %856 = vmatpush.msra.mxu0 0.0
        %857 = vmatpush.msra.mxu0 0.0
        %858 = vmatpush.msra.mxu0 0.0
        %859 = vmatpush.msra.mxu0 0.0
        %860 = vmatpush.msra.mxu0 0.0
        %861 = vmatpush.msra.mxu0 0.0
        %862 = vmatpush.msra.mxu0 0.0
        %863 = vmatpush.msra.mxu0 0.0
        %864 = vmatpush.msra.mxu0 0.0
        %865 = vmatpush.msra.mxu0 %v839
        %866 = vmatpush.msra.mxu0 %v837
        %867 = vmatpush.msra.mxu0 %v835
        %868 = vmatpush.msra.mxu0 %v833
        %869 = vmatmul.f32.gmra.mxu0 %v842
        %v870 = vpop.f32.mrf.mxu0
        %v871 = vadd.f32 0.0, %v870
        %872 = vmatmul.f32.gmra.mxu0 %v845
        %v873 = vpop.f32.mrf.mxu0
        %v874 = vadd.f32 0.0, %v873
        %875 = vmatmul.f32.gmra.mxu0 %v848
        %v876 = vpop.f32.mrf.mxu0
        %v877 = vadd.f32 0.0, %v876
        %878 = vmatmul.f32.gmra.mxu0 %v851
        %v879 = vpop.f32.mrf.mxu0
        %v880 = vadd.f32 0.0, %v879
        %881 = vdwg.mxu0
        %882 = vmatpush.msra.mxu0 0.0
        %883 = vmatpush.msra.mxu0 0.0
        %884 = vmatpush.msra.mxu0 0.0
        %885 = vmatpush.msra.mxu0 0.0
        %886 = vmatpush.msra.mxu0 0.0
        %887 = vmatpush.msra.mxu0 0.0
        %888 = vmatpush.msra.mxu0 0.0
        %889 = vmatpush.msra.mxu0 0.0
        %890 = vmatpush.msra.mxu0 0.0
        %891 = vmatpush.msra.mxu0 0.0
        %892 = vmatpush.msra.mxu0 0.0
        %893 = vmatpush.msra.mxu0 0.0
        %894 = vmatpush.msra.mxu0 %v840
        %895 = vmatpush.msra.mxu0 %v838
        %896 = vmatpush.msra.mxu0 %v836
        %897 = vmatpush.msra.mxu0 %v834
        %898 = vmatmul.f32.gmra.mxu0 %v842
        %v899 = vpop.f32.mrf.mxu0
        %v900 = vadd.f32 0.0, %v899
        %901 = vmatmul.f32.gmra.mxu0 %v845
        %v902 = vpop.f32.mrf.mxu0
        %v903 = vadd.f32 0.0, %v902
        %904 = vmatmul.f32.gmra.mxu0 %v848
        %v905 = vpop.f32.mrf.mxu0
        %v906 = vadd.f32 0.0, %v905
        %907 = vmatmul.f32.gmra.mxu0 %v851
        %v908 = vpop.f32.mrf.mxu0
        %v909 = vadd.f32 0.0, %v908
        %910 = vdwg.mxu0
        %v911 = vadd.f32 %v788, %v871
        %v912 = vadd.f32 %v817, %v900
        %v913 = vadd.f32 %v791, %v874
        %v914 = vadd.f32 %v820, %v903
        %v915 = vadd.f32 %v794, %v877
        %v916 = vadd.f32 %v823, %v906
        %v917 = vadd.f32 %v797, %v880
        %v918 = vadd.f32 %v826, %v909
        %v919 = vld [vmem:[%s661 + $0x3] sm:$0xff]
        %v920 = vld [vmem:[%s661 + $0xb] sm:$0xff]
        %v921 = vld [vmem:[%s661 + $0x13] sm:$0xff]
        %v922 = vld [vmem:[%s661 + $0x1b] sm:$0xf]
        %s923 = scalar_lea.vmem %s1, 192
        %v924 = vld [vmem:[%s923] sm:$0xff]
        %v925 = vld [vmem:[%s923 + $0x8] sm:$0xff]
        %v926 = vld [vmem:[%s923 + $0x10] sm:$0xff]
        %v927 = vld [vmem:[%s923 + $0x18] sm:$0xff]
        %v928 = vld [vmem:[%s923 + $0x20] sm:$0xff]
        %v929 = vld [vmem:[%s923 + $0x28] sm:$0xff]
        %v930 = vld [vmem:[%s923 + $0x30] sm:$0xff]
        %v931 = vld [vmem:[%s923 + $0x38] sm:$0xff]
        %v933 = vsel %vm687, %v919, 0
        %v936 = vsel %vm687, %v920, 0
        %v939 = vsel %vm687, %v921, 0
        %v942 = vsel %vm687, %v922, 0
        %944 = vmatpush.msra.mxu0 0.0
        %945 = vmatpush.msra.mxu0 0.0
        %946 = vmatpush.msra.mxu0 0.0
        %947 = vmatpush.msra.mxu0 0.0
        %948 = vmatpush.msra.mxu0 0.0
        %949 = vmatpush.msra.mxu0 0.0
        %950 = vmatpush.msra.mxu0 0.0
        %951 = vmatpush.msra.mxu0 0.0
        %952 = vmatpush.msra.mxu0 0.0
        %953 = vmatpush.msra.mxu0 0.0
        %954 = vmatpush.msra.mxu0 0.0
        %955 = vmatpush.msra.mxu0 0.0
        %956 = vmatpush.msra.mxu0 %v930
        %957 = vmatpush.msra.mxu0 %v928
        %958 = vmatpush.msra.mxu0 %v926
        %959 = vmatpush.msra.mxu0 %v924
        %960 = vmatmul.f32.gmra.mxu0 %v933
        %v961 = vpop.f32.mrf.mxu0
        %v962 = vadd.f32 0.0, %v961
        %963 = vmatmul.f32.gmra.mxu0 %v936
        %v964 = vpop.f32.mrf.mxu0
        %v965 = vadd.f32 0.0, %v964
        %966 = vmatmul.f32.gmra.mxu0 %v939
        %v967 = vpop.f32.mrf.mxu0
        %v968 = vadd.f32 0.0, %v967
        %969 = vmatmul.f32.gmra.mxu0 %v942
        %v970 = vpop.f32.mrf.mxu0
        %v971 = vadd.f32 0.0, %v970
        %972 = vdwg.mxu0
        %973 = vmatpush.msra.mxu0 0.0
        %974 = vmatpush.msra.mxu0 0.0
        %975 = vmatpush.msra.mxu0 0.0
        %976 = vmatpush.msra.mxu0 0.0
        %977 = vmatpush.msra.mxu0 0.0
        %978 = vmatpush.msra.mxu0 0.0
        %979 = vmatpush.msra.mxu0 0.0
        %980 = vmatpush.msra.mxu0 0.0
        %981 = vmatpush.msra.mxu0 0.0
        %982 = vmatpush.msra.mxu0 0.0
        %983 = vmatpush.msra.mxu0 0.0
        %984 = vmatpush.msra.mxu0 0.0
        %985 = vmatpush.msra.mxu0 %v931
        %986 = vmatpush.msra.mxu0 %v929
        %987 = vmatpush.msra.mxu0 %v927
        %988 = vmatpush.msra.mxu0 %v925
        %989 = vmatmul.f32.gmra.mxu0 %v933
        %v990 = vpop.f32.mrf.mxu0
        %v991 = vadd.f32 0.0, %v990
        %992 = vmatmul.f32.gmra.mxu0 %v936
        %v993 = vpop.f32.mrf.mxu0
        %v994 = vadd.f32 0.0, %v993
        %995 = vmatmul.f32.gmra.mxu0 %v939
        %v996 = vpop.f32.mrf.mxu0
        %v997 = vadd.f32 0.0, %v996
        %998 = vmatmul.f32.gmra.mxu0 %v942
        %v999 = vpop.f32.mrf.mxu0
        %v1000 = vadd.f32 0.0, %v999
        %1001 = vdwg.mxu0
        %v1002 = vadd.f32 %v911, %v962
        %v1003 = vadd.f32 %v912, %v991
        %v1004 = vadd.f32 %v913, %v965
        %v1005 = vadd.f32 %v914, %v994
        %v1006 = vadd.f32 %v915, %v968
        %v1007 = vadd.f32 %v916, %v997
        %v1008 = vadd.f32 %v917, %v971
        %v1009 = vadd.f32 %v918, %v1000
        %v1010 = vld [vmem:[%s661 + $0x4] sm:$0xff]
        %v1011 = vld [vmem:[%s661 + $0xc] sm:$0xff]
        %v1012 = vld [vmem:[%s661 + $0x14] sm:$0xff]
        %v1013 = vld [vmem:[%s661 + $0x1c] sm:$0xf]
        %s1014 = scalar_lea.vmem %s1, 256
        %v1015 = vld [vmem:[%s1014] sm:$0xff]
        %v1016 = vld [vmem:[%s1014 + $0x8] sm:$0xff]
        %v1017 = vld [vmem:[%s1014 + $0x10] sm:$0xff]
        %v1018 = vld [vmem:[%s1014 + $0x18] sm:$0xff]
        %v1019 = vld [vmem:[%s1014 + $0x20] sm:$0xff]
        %v1020 = vld [vmem:[%s1014 + $0x28] sm:$0xff]
        %v1021 = vld [vmem:[%s1014 + $0x30] sm:$0xff]
        %v1022 = vld [vmem:[%s1014 + $0x38] sm:$0xff]
        %v1024 = vsel %vm687, %v1010, 0
        %v1027 = vsel %vm687, %v1011, 0
        %v1030 = vsel %vm687, %v1012, 0
        %v1033 = vsel %vm687, %v1013, 0
        %1035 = vmatpush.msra.mxu0 0.0
        %1036 = vmatpush.msra.mxu0 0.0
        %1037 = vmatpush.msra.mxu0 0.0
        %1038 = vmatpush.msra.mxu0 0.0
        %1039 = vmatpush.msra.mxu0 0.0
        %1040 = vmatpush.msra.mxu0 0.0
        %1041 = vmatpush.msra.mxu0 0.0
        %1042 = vmatpush.msra.mxu0 0.0
        %1043 = vmatpush.msra.mxu0 0.0
        %1044 = vmatpush.msra.mxu0 0.0
        %1045 = vmatpush.msra.mxu0 0.0
        %1046 = vmatpush.msra.mxu0 0.0
        %1047 = vmatpush.msra.mxu0 %v1021
        %1048 = vmatpush.msra.mxu0 %v1019
        %1049 = vmatpush.msra.mxu0 %v1017
        %1050 = vmatpush.msra.mxu0 %v1015
        %1051 = vmatmul.f32.gmra.mxu0 %v1024
        %v1052 = vpop.f32.mrf.mxu0
        %v1053 = vadd.f32 0.0, %v1052
        %1054 = vmatmul.f32.gmra.mxu0 %v1027
        %v1055 = vpop.f32.mrf.mxu0
        %v1056 = vadd.f32 0.0, %v1055
        %1057 = vmatmul.f32.gmra.mxu0 %v1030
        %v1058 = vpop.f32.mrf.mxu0
        %v1059 = vadd.f32 0.0, %v1058
        %1060 = vmatmul.f32.gmra.mxu0 %v1033
        %v1061 = vpop.f32.mrf.mxu0
        %v1062 = vadd.f32 0.0, %v1061
        %1063 = vdwg.mxu0
        %1064 = vmatpush.msra.mxu0 0.0
        %1065 = vmatpush.msra.mxu0 0.0
        %1066 = vmatpush.msra.mxu0 0.0
        %1067 = vmatpush.msra.mxu0 0.0
        %1068 = vmatpush.msra.mxu0 0.0
        %1069 = vmatpush.msra.mxu0 0.0
        %1070 = vmatpush.msra.mxu0 0.0
        %1071 = vmatpush.msra.mxu0 0.0
        %1072 = vmatpush.msra.mxu0 0.0
        %1073 = vmatpush.msra.mxu0 0.0
        %1074 = vmatpush.msra.mxu0 0.0
        %1075 = vmatpush.msra.mxu0 0.0
        %1076 = vmatpush.msra.mxu0 %v1022
        %1077 = vmatpush.msra.mxu0 %v1020
        %1078 = vmatpush.msra.mxu0 %v1018
        %1079 = vmatpush.msra.mxu0 %v1016
        %1080 = vmatmul.f32.gmra.mxu0 %v1024
        %v1081 = vpop.f32.mrf.mxu0
        %v1082 = vadd.f32 0.0, %v1081
        %1083 = vmatmul.f32.gmra.mxu0 %v1027
        %v1084 = vpop.f32.mrf.mxu0
        %v1085 = vadd.f32 0.0, %v1084
        %1086 = vmatmul.f32.gmra.mxu0 %v1030
        %v1087 = vpop.f32.mrf.mxu0
        %v1088 = vadd.f32 0.0, %v1087
        %1089 = vmatmul.f32.gmra.mxu0 %v1033
        %v1090 = vpop.f32.mrf.mxu0
        %v1091 = vadd.f32 0.0, %v1090
        %1092 = vdwg.mxu0
        %v1093 = vadd.f32 %v1002, %v1053
        %v1094 = vadd.f32 %v1003, %v1082
        %v1095 = vadd.f32 %v1004, %v1056
        %v1096 = vadd.f32 %v1005, %v1085
        %v1097 = vadd.f32 %v1006, %v1059
        %v1098 = vadd.f32 %v1007, %v1088
        %v1099 = vadd.f32 %v1008, %v1062
        %v1100 = vadd.f32 %v1009, %v1091
        %v1101 = vld [vmem:[%s2] sm:$0x3]
        %v1103 = vperm.slane %v1101, 0
        %v1104 = vperm.slane %v1101, 1
        %v1107 = vadd.f32 %v1093, %v1103
        %v1108 = vadd.f32 %v1094, %v1104
        %v1109 = vadd.f32 %v1095, %v1103
        %v1110 = vadd.f32 %v1096, %v1104
        %v1111 = vadd.f32 %v1097, %v1103
        %v1112 = vadd.f32 %v1098, %v1104
        %v1113 = vadd.f32 %v1099, %v1103
        %v1114 = vadd.f32 %v1100, %v1104
        %v1115 = vsub.f32 0.0, %v1107
        %v1116 = vsub.f32 0.0, %v1108
        %v1117 = vsub.f32 0.0, %v1109
        %v1118 = vsub.f32 0.0, %v1110
        %v1119 = vsub.f32 0.0, %v1111
        %v1120 = vsub.f32 0.0, %v1112
        %v1121 = vsub.f32 0.0, %v1113
        %v1122 = vsub.f32 0.0, %v1114
        %v1123 = vmul.f32 %v1115, 1.442695
        %v1124 = vpow.pop %v1123
        %v1125 = vmul.f32 %v1116, 1.442695
        %v1126 = vpow.pop %v1125
        %v1127 = vmul.f32 %v1117, 1.442695
        %v1128 = vpow.pop %v1127
        %v1129 = vmul.f32 %v1118, 1.442695
        %v1130 = vpow.pop %v1129
        %v1131 = vmul.f32 %v1119, 1.442695
        %v1132 = vpow.pop %v1131
        %v1133 = vmul.f32 %v1120, 1.442695
        %v1134 = vpow.pop %v1133
        %v1135 = vmul.f32 %v1121, 1.442695
        %v1136 = vpow.pop %v1135
        %v1137 = vmul.f32 %v1122, 1.442695
        %v1138 = vpow.pop %v1137
        %v1139 = vadd.f32 %v1124, 1.0
        %v1140 = vadd.f32 %v1126, 1.0
        %v1141 = vadd.f32 %v1128, 1.0
        %v1142 = vadd.f32 %v1130, 1.0
        %v1143 = vadd.f32 %v1132, 1.0
        %v1144 = vadd.f32 %v1134, 1.0
        %v1145 = vadd.f32 %v1136, 1.0
        %v1146 = vadd.f32 %v1138, 1.0
        %v1147 = vrcp.pop %v1139
        %v1148 = vmul.f32 %v1139, %v1147
        %v1149 = vsub.f32 1.0, %v1148
        %v1150 = vmul.f32 %v1147, %v1149
        %v1151 = vadd.f32 %v1147, %v1150
        %vm1152 = vweird.f32 %v1139
        %vm1153 = vweird.f32 %v1147
        %vm1154 = vmor %vm1152, %vm1153
        %v1155 = vsel %vm1154, %v1147, %v1151
        %v1156 = vand.u32 2147483647, %v1139
        %vm1157 = vcmp.eq.f32.partialorder %v1156, 8.507059e+37
        %v1158 = vand.u32 %v1139, 2147483648
        %v1159 = vor.u32 1.1754944e-38, %v1158
        %v1160 = vsel %vm1157, %v1159, %v1155
        %v1161 = vmul.f32 1.0, %v1160
        %v1162 = vrcp.pop %v1140
        %v1163 = vmul.f32 %v1140, %v1162
        %v1164 = vsub.f32 1.0, %v1163
        %v1165 = vmul.f32 %v1162, %v1164
        %v1166 = vadd.f32 %v1162, %v1165
        %vm1167 = vweird.f32 %v1140
        %vm1168 = vweird.f32 %v1162
        %vm1169 = vmor %vm1167, %vm1168
        %v1170 = vsel %vm1169, %v1162, %v1166
        %v1171 = vand.u32 2147483647, %v1140
        %vm1172 = vcmp.eq.f32.partialorder %v1171, 8.507059e+37
        %v1173 = vand.u32 %v1140, 2147483648
        %v1174 = vor.u32 1.1754944e-38, %v1173
        %v1175 = vsel %vm1172, %v1174, %v1170
        %v1176 = vmul.f32 1.0, %v1175
        %v1177 = vrcp.pop %v1141
        %v1178 = vmul.f32 %v1141, %v1177
        %v1179 = vsub.f32 1.0, %v1178
        %v1180 = vmul.f32 %v1177, %v1179
        %v1181 = vadd.f32 %v1177, %v1180
        %vm1182 = vweird.f32 %v1141
        %vm1183 = vweird.f32 %v1177
        %vm1184 = vmor %vm1182, %vm1183
        %v1185 = vsel %vm1184, %v1177, %v1181
        %v1186 = vand.u32 2147483647, %v1141
        %vm1187 = vcmp.eq.f32.partialorder %v1186, 8.507059e+37
        %v1188 = vand.u32 %v1141, 2147483648
        %v1189 = vor.u32 1.1754944e-38, %v1188
        %v1190 = vsel %vm1187, %v1189, %v1185
        %v1191 = vmul.f32 1.0, %v1190
        %v1192 = vrcp.pop %v1142
        %v1193 = vmul.f32 %v1142, %v1192
        %v1194 = vsub.f32 1.0, %v1193
        %v1195 = vmul.f32 %v1192, %v1194
        %v1196 = vadd.f32 %v1192, %v1195
        %vm1197 = vweird.f32 %v1142
        %vm1198 = vweird.f32 %v1192
        %vm1199 = vmor %vm1197, %vm1198
        %v1200 = vsel %vm1199, %v1192, %v1196
        %v1201 = vand.u32 2147483647, %v1142
        %vm1202 = vcmp.eq.f32.partialorder %v1201, 8.507059e+37
        %v1203 = vand.u32 %v1142, 2147483648
        %v1204 = vor.u32 1.1754944e-38, %v1203
        %v1205 = vsel %vm1202, %v1204, %v1200
        %v1206 = vmul.f32 1.0, %v1205
        %v1207 = vrcp.pop %v1143
        %v1208 = vmul.f32 %v1143, %v1207
        %v1209 = vsub.f32 1.0, %v1208
        %v1210 = vmul.f32 %v1207, %v1209
        %v1211 = vadd.f32 %v1207, %v1210
        %vm1212 = vweird.f32 %v1143
        %vm1213 = vweird.f32 %v1207
        %vm1214 = vmor %vm1212, %vm1213
        %v1215 = vsel %vm1214, %v1207, %v1211
        %v1216 = vand.u32 2147483647, %v1143
        %vm1217 = vcmp.eq.f32.partialorder %v1216, 8.507059e+37
        %v1218 = vand.u32 %v1143, 2147483648
        %v1219 = vor.u32 1.1754944e-38, %v1218
        %v1220 = vsel %vm1217, %v1219, %v1215
        %v1221 = vmul.f32 1.0, %v1220
        %v1222 = vrcp.pop %v1144
        %v1223 = vmul.f32 %v1144, %v1222
        %v1224 = vsub.f32 1.0, %v1223
        %v1225 = vmul.f32 %v1222, %v1224
        %v1226 = vadd.f32 %v1222, %v1225
        %vm1227 = vweird.f32 %v1144
        %vm1228 = vweird.f32 %v1222
        %vm1229 = vmor %vm1227, %vm1228
        %v1230 = vsel %vm1229, %v1222, %v1226
        %v1231 = vand.u32 2147483647, %v1144
        %vm1232 = vcmp.eq.f32.partialorder %v1231, 8.507059e+37
        %v1233 = vand.u32 %v1144, 2147483648
        %v1234 = vor.u32 1.1754944e-38, %v1233
        %v1235 = vsel %vm1232, %v1234, %v1230
        %v1236 = vmul.f32 1.0, %v1235
        %v1237 = vrcp.pop %v1145
        %v1238 = vmul.f32 %v1145, %v1237
        %v1239 = vsub.f32 1.0, %v1238
        %v1240 = vmul.f32 %v1237, %v1239
        %v1241 = vadd.f32 %v1237, %v1240
        %vm1242 = vweird.f32 %v1145
        %vm1243 = vweird.f32 %v1237
        %vm1244 = vmor %vm1242, %vm1243
        %v1245 = vsel %vm1244, %v1237, %v1241
        %v1246 = vand.u32 2147483647, %v1145
        %vm1247 = vcmp.eq.f32.partialorder %v1246, 8.507059e+37
        %v1248 = vand.u32 %v1145, 2147483648
        %v1249 = vor.u32 1.1754944e-38, %v1248
        %v1250 = vsel %vm1247, %v1249, %v1245
        %v1251 = vmul.f32 1.0, %v1250
        %v1252 = vrcp.pop %v1146
        %v1253 = vmul.f32 %v1146, %v1252
        %v1254 = vsub.f32 1.0, %v1253
        %v1255 = vmul.f32 %v1252, %v1254
        %v1256 = vadd.f32 %v1252, %v1255
        %vm1257 = vweird.f32 %v1146
        %vm1258 = vweird.f32 %v1252
        %vm1259 = vmor %vm1257, %vm1258
        %v1260 = vsel %vm1259, %v1252, %v1256
        %v1261 = vand.u32 2147483647, %v1146
        %vm1262 = vcmp.eq.f32.partialorder %v1261, 8.507059e+37
        %v1263 = vand.u32 %v1146, 2147483648
        %v1264 = vor.u32 1.1754944e-38, %v1263
        %v1265 = vsel %vm1262, %v1264, %v1260
        %v1266 = vmul.f32 1.0, %v1265
        %v1267 = vld [vmem:[%s3] sm:$0xff]
        %v1268 = vld [vmem:[%s3 + $0x8] sm:$0x3f]
        %vm1269 = vcmask 228352
        %v1271 = vsel %vm1269, %v1267, 0
        %v1274 = vsel %vm1269, %v1268, 0
        %vm1276 = vcmask 1043456
        %v1278 = vsel %vm1276, %v1251, 0
        %v1281 = vsel %vm1276, %v1266, 0
        %1283 = vmatpush.msra.mxu0 0.0
        %1284 = vmatpush.msra.mxu0 0.0
        %1285 = vmatpush.msra.mxu0 0.0
        %1286 = vmatpush.msra.mxu0 0.0
        %1287 = vmatpush.msra.mxu0 0.0
        %1288 = vmatpush.msra.mxu0 0.0
        %1289 = vmatpush.msra.mxu0 0.0
        %1290 = vmatpush.msra.mxu0 0.0
        %1291 = vmatpush.msra.mxu0 0.0
        %1292 = vmatpush.msra.mxu0 0.0
        %1293 = vmatpush.msra.mxu0 0.0
        %1294 = vmatpush.msra.mxu0 0.0
        %1295 = vmatpush.msra.mxu0 %v1278
        %1296 = vmatpush.msra.mxu0 %v1221
        %1297 = vmatpush.msra.mxu0 %v1191
        %1298 = vmatpush.msra.mxu0 %v1161
        %1299 = vmatmul.f32.gmra.mxu0 %v1271
        %v1300 = vpop.f32.mrf.mxu0
        %v1301 = vadd.f32 0.0, %v1300
        %1302 = vmatmul.f32.gmra.mxu0 %v1274
        %v1303 = vpop.f32.mrf.mxu0
        %v1304 = vadd.f32 0.0, %v1303
        %1305 = vdwg.mxu0
        %1306 = vmatpush.msra.mxu0 0.0
        %1307 = vmatpush.msra.mxu0 0.0
        %1308 = vmatpush.msra.mxu0 0.0
        %1309 = vmatpush.msra.mxu0 0.0
        %1310 = vmatpush.msra.mxu0 0.0
        %1311 = vmatpush.msra.mxu0 0.0
        %1312 = vmatpush.msra.mxu0 0.0
        %1313 = vmatpush.msra.mxu0 0.0
        %1314 = vmatpush.msra.mxu0 0.0
        %1315 = vmatpush.msra.mxu0 0.0
        %1316 = vmatpush.msra.mxu0 0.0
        %1317 = vmatpush.msra.mxu0 0.0
        %1318 = vmatpush.msra.mxu0 %v1281
        %1319 = vmatpush.msra.mxu0 %v1236
        %1320 = vmatpush.msra.mxu0 %v1206
        %1321 = vmatpush.msra.mxu0 %v1176
        %1322 = vmatmul.f32.gmra.mxu0 %v1271
        %v1323 = vpop.f32.mrf.mxu0
        %v1324 = vadd.f32 0.0, %v1323
        %1325 = vmatmul.f32.gmra.mxu0 %v1274
        %v1326 = vpop.f32.mrf.mxu0
        %v1327 = vadd.f32 0.0, %v1326
        %1328 = vdwg.mxu0
        %v1329 = vld [vmem:[#allocation3] sm:$0xff]
        %v1330 = vld [vmem:[#allocation3 + $0x8] sm:$0xff]
        %v1331 = vld [vmem:[#allocation3 + $0x10] sm:$0xff]
        %v1332 = vld [vmem:[#allocation3 + $0x18] sm:$0xff]
        %v1333 = vld [vmem:[#allocation3 + $0x20] sm:$0xff]
        %v1334 = vld [vmem:[#allocation3 + $0x28] sm:$0xff]
        %v1335 = vld [vmem:[#allocation3 + $0x30] sm:$0xff]
        %v1336 = vld [vmem:[#allocation3 + $0x38] sm:$0xff]
        %v1337 = vld [vmem:[#allocation3 + $0x40] sm:$0xff]
        %v1338 = vld [vmem:[#allocation3 + $0x48] sm:$0xff]
        %v1339 = vld [vmem:[#allocation3 + $0x50] sm:$0xff]
        %v1340 = vld [vmem:[#allocation3 + $0x58] sm:$0xff]
        %v1341 = vld [vmem:[#allocation3 + $0x60] sm:$0xff]
        %v1342 = vld [vmem:[#allocation3 + $0x68] sm:$0xff]
        %v1343 = vld [vmem:[#allocation3 + $0x70] sm:$0xff]
        %v1344 = vld [vmem:[#allocation3 + $0x78] sm:$0xff]
        %v1345 = vld [vmem:[#allocation3 + $0x80] sm:$0xff]
        %v1346 = vld [vmem:[#allocation3 + $0x88] sm:$0xff]
        %v1347 = vld [vmem:[#allocation3 + $0x90] sm:$0xff]
        %v1348 = vld [vmem:[#allocation3 + $0x98] sm:$0xff]
        %v1349 = vld [vmem:[#allocation3 + $0xa0] sm:$0xff]
        %vm1350 = vcmask 326656
        %v1352 = vsel %vm1350, %v1324, 0
        %v1355 = vsel %vm1350, %v1327, 0
        %1357 = vmatpush.msra.mxu0 %v1344
        %1358 = vmatpush.msra.mxu0 %v1343
        %1359 = vmatpush.msra.mxu0 %v1342
        %1360 = vmatpush.msra.mxu0 %v1341
        %1361 = vmatpush.msra.mxu0 %v1340
        %1362 = vmatpush.msra.mxu0 %v1339
        %1363 = vmatpush.msra.mxu0 %v1338
        %1364 = vmatpush.msra.mxu0 %v1337
        %1365 = vmatpush.msra.mxu0 %v1336
        %1366 = vmatpush.msra.mxu0 %v1335
        %1367 = vmatpush.msra.mxu0 %v1334
        %1368 = vmatpush.msra.mxu0 %v1333
        %1369 = vmatpush.msra.mxu0 %v1332
        %1370 = vmatpush.msra.mxu0 %v1331
        %1371 = vmatpush.msra.mxu0 %v1330
        %1372 = vmatpush.msra.mxu0 %v1329
        %1373 = vmatmul.f32.gmra.mxu0 %v1301
        %v1374 = vpop.f32.mrf.mxu0
        %v1375 = vadd.f32 0.0, %v1374
        %1376 = vmatmul.f32.gmra.mxu0 %v1304
        %v1377 = vpop.f32.mrf.mxu0
        %v1378 = vadd.f32 0.0, %v1377
        %1379 = vdwg.mxu0
        %1380 = vmatpush.msra.mxu0 0.0
        %1381 = vmatpush.msra.mxu0 0.0
        %1382 = vmatpush.msra.mxu0 0.0
        %1383 = vmatpush.msra.mxu0 0.0
        %1384 = vmatpush.msra.mxu0 0.0
        %1385 = vmatpush.msra.mxu0 0.0
        %1386 = vmatpush.msra.mxu0 0.0
        %1387 = vmatpush.msra.mxu0 0.0
        %1388 = vmatpush.msra.mxu0 0.0
        %1389 = vmatpush.msra.mxu0 0.0
        %1390 = vmatpush.msra.mxu0 0.0
        %1391 = vmatpush.msra.mxu0 %v1349
        %1392 = vmatpush.msra.mxu0 %v1348
        %1393 = vmatpush.msra.mxu0 %v1347
        %1394 = vmatpush.msra.mxu0 %v1346
        %1395 = vmatpush.msra.mxu0 %v1345
        %1396 = vmatmul.f32.gmra.mxu0 %v1352
        %v1397 = vpop.f32.mrf.mxu0
        %v1398 = vadd.f32 %v1375, %v1397
        %1399 = vmatmul.f32.gmra.mxu0 %v1355
        %v1400 = vpop.f32.mrf.mxu0
        %v1401 = vadd.f32 %v1378, %v1400
        %1402 = vdwg.mxu0
        %vm1403 = vcmask 687104
        %1404 = vst.msk [vmem:[#allocation2] sm:$0xff] %vm1403, %v1398
        %vm1405 = vcmask 685056
        %1406 = vst.msk [vmem:[#allocation2 + $0x8] sm:$0x3f] %vm1405, %v1401
        %v1407 = vld [vmem:[#allocation2] sm:$0xff]
        %v1408 = vld [vmem:[#allocation2 + $0x8] sm:$0x3]
        %v1409 = vld [vmem:[#allocation6] sm:$0xff]
        %v1410 = vld [vmem:[#allocation6 + $0x8] sm:$0xff]
        %v1411 = vld [vmem:[#allocation6 + $0x10] sm:$0x3f]
        %v1412 = vld [vmem:[#allocation6 + $0x18] sm:$0x3f]
        %v1413 = vld [vmem:[#allocation2 + $0x1] sm:$0xff]
        %v1414 = vld [vmem:[#allocation2 + $0x9] sm:$0x3]
        %s1415 = scalar_lea.vmem [#allocation6], 32
        %v1416 = vld [vmem:[%s1415] sm:$0xff]
        %v1417 = vld [vmem:[%s1415 + $0x8] sm:$0xff]
        %v1418 = vld [vmem:[%s1415 + $0x10] sm:$0x3f]
        %v1419 = vld [vmem:[%s1415 + $0x18] sm:$0x3f]
        %vm1420 = vcmask 113664
        %v1422 = vsel %vm1420, %v1413, 0
        %v1425 = vsel %vm1420, %v1414, 0
        %vm1427 = vcmask 1045504
        %v1429 = vsel %vm1427, %v1418, 0
        %v1432 = vsel %vm1427, %v1419, 0
        %1434 = vmatpush.msra.mxu0 0.0
        %1435 = vmatpush.msra.mxu0 0.0
        %1436 = vmatpush.msra.mxu0 0.0
        %1437 = vmatpush.msra.mxu0 0.0
        %1438 = vmatpush.msra.mxu0 0.0
        %1439 = vmatpush.msra.mxu0 0.0
        %1440 = vmatpush.msra.mxu0 0.0
        %1441 = vmatpush.msra.mxu0 0.0
        %1442 = vmatpush.msra.mxu0 0.0
        %1443 = vmatpush.msra.mxu0 0.0
        %1444 = vmatpush.msra.mxu0 0.0
        %1445 = vmatpush.msra.mxu0 0.0
        %1446 = vmatpush.msra.mxu0 0.0
        %1447 = vmatpush.msra.mxu0 0.0
        %1448 = vmatpush.msra.mxu0 %v1429
        %1449 = vmatpush.msra.mxu0 %v1416
        %1450 = vmatmul.f32.gmra.mxu0 %v1422
        %v1451 = vpop.f32.mrf.mxu0
        %v1452 = vadd.f32 0.0, %v1451
        %1453 = vmatmul.f32.gmra.mxu0 %v1425
        %v1454 = vpop.f32.mrf.mxu0
        %v1455 = vadd.f32 0.0, %v1454
        %1456 = vdwg.mxu0
        %1457 = vmatpush.msra.mxu0 0.0
        %1458 = vmatpush.msra.mxu0 0.0
        %1459 = vmatpush.msra.mxu0 0.0
        %1460 = vmatpush.msra.mxu0 0.0
        %1461 = vmatpush.msra.mxu0 0.0
        %1462 = vmatpush.msra.mxu0 0.0
        %1463 = vmatpush.msra.mxu0 0.0
        %1464 = vmatpush.msra.mxu0 0.0
        %1465 = vmatpush.msra.mxu0 0.0
        %1466 = vmatpush.msra.mxu0 0.0
        %1467 = vmatpush.msra.mxu0 0.0
        %1468 = vmatpush.msra.mxu0 0.0
        %1469 = vmatpush.msra.mxu0 0.0
        %1470 = vmatpush.msra.mxu0 0.0
        %1471 = vmatpush.msra.mxu0 %v1432
        %1472 = vmatpush.msra.mxu0 %v1417
        %1473 = vmatmul.f32.gmra.mxu0 %v1422
        %v1474 = vpop.f32.mrf.mxu0
        %v1475 = vadd.f32 0.0, %v1474
        %1476 = vmatmul.f32.gmra.mxu0 %v1425
        %v1477 = vpop.f32.mrf.mxu0
        %v1478 = vadd.f32 0.0, %v1477
        %1479 = vdwg.mxu0
        %v1481 = vsel %vm1420, %v1407, 0
        %v1484 = vsel %vm1420, %v1408, 0
        %v1487 = vsel %vm1427, %v1411, 0
        %v1490 = vsel %vm1427, %v1412, 0
        %1492 = vmatpush.msra.mxu0 0.0
        %1493 = vmatpush.msra.mxu0 0.0
        %1494 = vmatpush.msra.mxu0 0.0
        %1495 = vmatpush.msra.mxu0 0.0
        %1496 = vmatpush.msra.mxu0 0.0
        %1497 = vmatpush.msra.mxu0 0.0
        %1498 = vmatpush.msra.mxu0 0.0
        %1499 = vmatpush.msra.mxu0 0.0
        %1500 = vmatpush.msra.mxu0 0.0
        %1501 = vmatpush.msra.mxu0 0.0
        %1502 = vmatpush.msra.mxu0 0.0
        %1503 = vmatpush.msra.mxu0 0.0
        %1504 = vmatpush.msra.mxu0 0.0
        %1505 = vmatpush.msra.mxu0 0.0
        %1506 = vmatpush.msra.mxu0 %v1487
        %1507 = vmatpush.msra.mxu0 %v1409
        %1508 = vmatmul.f32.gmra.mxu0 %v1481
        %v1509 = vpop.f32.mrf.mxu0
        %v1510 = vadd.f32 %v1452, %v1509
        %1511 = vmatmul.f32.gmra.mxu0 %v1484
        %v1512 = vpop.f32.mrf.mxu0
        %v1513 = vadd.f32 %v1455, %v1512
        %1514 = vdwg.mxu0
        %1515 = vmatpush.msra.mxu0 0.0
        %1516 = vmatpush.msra.mxu0 0.0
        %1517 = vmatpush.msra.mxu0 0.0
        %1518 = vmatpush.msra.mxu0 0.0
        %1519 = vmatpush.msra.mxu0 0.0
        %1520 = vmatpush.msra.mxu0 0.0
        %1521 = vmatpush.msra.mxu0 0.0
        %1522 = vmatpush.msra.mxu0 0.0
        %1523 = vmatpush.msra.mxu0 0.0
        %1524 = vmatpush.msra.mxu0 0.0
        %1525 = vmatpush.msra.mxu0 0.0
        %1526 = vmatpush.msra.mxu0 0.0
        %1527 = vmatpush.msra.mxu0 0.0
        %1528 = vmatpush.msra.mxu0 0.0
        %1529 = vmatpush.msra.mxu0 %v1490
        %1530 = vmatpush.msra.mxu0 %v1410
        %1531 = vmatmul.f32.gmra.mxu0 %v1481
        %v1532 = vpop.f32.mrf.mxu0
        %v1533 = vadd.f32 %v1475, %v1532
        %1534 = vmatmul.f32.gmra.mxu0 %v1484
        %v1535 = vpop.f32.mrf.mxu0
        %v1536 = vadd.f32 %v1478, %v1535
        %1537 = vdwg.mxu0
        %v1538 = vld [vmem:[#allocation2 + $0x2] sm:$0xff]
        %v1539 = vld [vmem:[#allocation2 + $0xa] sm:$0x3]
        %s1540 = scalar_lea.vmem [#allocation6], 64
        %v1541 = vld [vmem:[%s1540] sm:$0xff]
        %v1542 = vld [vmem:[%s1540 + $0x8] sm:$0xff]
        %v1543 = vld [vmem:[%s1540 + $0x10] sm:$0x3f]
        %v1544 = vld [vmem:[%s1540 + $0x18] sm:$0x3f]
        %v1546 = vsel %vm1420, %v1538, 0
        %v1549 = vsel %vm1420, %v1539, 0
        %v1552 = vsel %vm1427, %v1543, 0
        %v1555 = vsel %vm1427, %v1544, 0
        %1557 = vmatpush.msra.mxu0 0.0
        %1558 = vmatpush.msra.mxu0 0.0
        %1559 = vmatpush.msra.mxu0 0.0
        %1560 = vmatpush.msra.mxu0 0.0
        %1561 = vmatpush.msra.mxu0 0.0
        %1562 = vmatpush.msra.mxu0 0.0
        %1563 = vmatpush.msra.mxu0 0.0
        %1564 = vmatpush.msra.mxu0 0.0
        %1565 = vmatpush.msra.mxu0 0.0
        %1566 = vmatpush.msra.mxu0 0.0
        %1567 = vmatpush.msra.mxu0 0.0
        %1568 = vmatpush.msra.mxu0 0.0
        %1569 = vmatpush.msra.mxu0 0.0
        %1570 = vmatpush.msra.mxu0 0.0
        %1571 = vmatpush.msra.mxu0 %v1552
        %1572 = vmatpush.msra.mxu0 %v1541
        %1573 = vmatmul.f32.gmra.mxu0 %v1546
        %v1574 = vpop.f32.mrf.mxu0
        %v1575 = vadd.f32 0.0, %v1574
        %1576 = vmatmul.f32.gmra.mxu0 %v1549
        %v1577 = vpop.f32.mrf.mxu0
        %v1578 = vadd.f32 0.0, %v1577
        %1579 = vdwg.mxu0
        %1580 = vmatpush.msra.mxu0 0.0
        %1581 = vmatpush.msra.mxu0 0.0
        %1582 = vmatpush.msra.mxu0 0.0
        %1583 = vmatpush.msra.mxu0 0.0
        %1584 = vmatpush.msra.mxu0 0.0
        %1585 = vmatpush.msra.mxu0 0.0
        %1586 = vmatpush.msra.mxu0 0.0
        %1587 = vmatpush.msra.mxu0 0.0
        %1588 = vmatpush.msra.mxu0 0.0
        %1589 = vmatpush.msra.mxu0 0.0
        %1590 = vmatpush.msra.mxu0 0.0
        %1591 = vmatpush.msra.mxu0 0.0
        %1592 = vmatpush.msra.mxu0 0.0
        %1593 = vmatpush.msra.mxu0 0.0
        %1594 = vmatpush.msra.mxu0 %v1555
        %1595 = vmatpush.msra.mxu0 %v1542
        %1596 = vmatmul.f32.gmra.mxu0 %v1546
        %v1597 = vpop.f32.mrf.mxu0
        %v1598 = vadd.f32 0.0, %v1597
        %1599 = vmatmul.f32.gmra.mxu0 %v1549
        %v1600 = vpop.f32.mrf.mxu0
        %v1601 = vadd.f32 0.0, %v1600
        %1602 = vdwg.mxu0
        %v1603 = vadd.f32 %v1510, %v1575
        %v1604 = vadd.f32 %v1533, %v1598
        %v1605 = vadd.f32 %v1513, %v1578
        %v1606 = vadd.f32 %v1536, %v1601
        %v1607 = vld [vmem:[#allocation2 + $0x3] sm:$0xff]
        %v1608 = vld [vmem:[#allocation2 + $0xb] sm:$0x3]
        %s1609 = scalar_lea.vmem [#allocation6], 96
        %v1610 = vld [vmem:[%s1609] sm:$0xff]
        %v1611 = vld [vmem:[%s1609 + $0x8] sm:$0xff]
        %v1612 = vld [vmem:[%s1609 + $0x10] sm:$0x3f]
        %v1613 = vld [vmem:[%s1609 + $0x18] sm:$0x3f]
        %v1615 = vsel %vm1420, %v1607, 0
        %v1618 = vsel %vm1420, %v1608, 0
        %v1621 = vsel %vm1427, %v1612, 0
        %v1624 = vsel %vm1427, %v1613, 0
        %1626 = vmatpush.msra.mxu0 0.0
        %1627 = vmatpush.msra.mxu0 0.0
        %1628 = vmatpush.msra.mxu0 0.0
        %1629 = vmatpush.msra.mxu0 0.0
        %1630 = vmatpush.msra.mxu0 0.0
        %1631 = vmatpush.msra.mxu0 0.0
        %1632 = vmatpush.msra.mxu0 0.0
        %1633 = vmatpush.msra.mxu0 0.0
        %1634 = vmatpush.msra.mxu0 0.0
        %1635 = vmatpush.msra.mxu0 0.0
        %1636 = vmatpush.msra.mxu0 0.0
        %1637 = vmatpush.msra.mxu0 0.0
        %1638 = vmatpush.msra.mxu0 0.0
        %1639 = vmatpush.msra.mxu0 0.0
        %1640 = vmatpush.msra.mxu0 %v1621
        %1641 = vmatpush.msra.mxu0 %v1610
        %1642 = vmatmul.f32.gmra.mxu0 %v1615
        %v1643 = vpop.f32.mrf.mxu0
        %v1644 = vadd.f32 0.0, %v1643
        %1645 = vmatmul.f32.gmra.mxu0 %v1618
        %v1646 = vpop.f32.mrf.mxu0
        %v1647 = vadd.f32 0.0, %v1646
        %1648 = vdwg.mxu0
        %1649 = vmatpush.msra.mxu0 0.0
        %1650 = vmatpush.msra.mxu0 0.0
        %1651 = vmatpush.msra.mxu0 0.0
        %1652 = vmatpush.msra.mxu0 0.0
        %1653 = vmatpush.msra.mxu0 0.0
        %1654 = vmatpush.msra.mxu0 0.0
        %1655 = vmatpush.msra.mxu0 0.0
        %1656 = vmatpush.msra.mxu0 0.0
        %1657 = vmatpush.msra.mxu0 0.0
        %1658 = vmatpush.msra.mxu0 0.0
        %1659 = vmatpush.msra.mxu0 0.0
        %1660 = vmatpush.msra.mxu0 0.0
        %1661 = vmatpush.msra.mxu0 0.0
        %1662 = vmatpush.msra.mxu0 0.0
        %1663 = vmatpush.msra.mxu0 %v1624
        %1664 = vmatpush.msra.mxu0 %v1611
        %1665 = vmatmul.f32.gmra.mxu0 %v1615
        %v1666 = vpop.f32.mrf.mxu0
        %v1667 = vadd.f32 0.0, %v1666
        %1668 = vmatmul.f32.gmra.mxu0 %v1618
        %v1669 = vpop.f32.mrf.mxu0
        %v1670 = vadd.f32 0.0, %v1669
        %1671 = vdwg.mxu0
        %v1672 = vadd.f32 %v1603, %v1644
        %v1673 = vadd.f32 %v1604, %v1667
        %v1674 = vadd.f32 %v1605, %v1647
        %v1675 = vadd.f32 %v1606, %v1670
        %v1676 = vld [vmem:[#allocation2 + $0x4] sm:$0xff]
        %v1677 = vld [vmem:[#allocation2 + $0xc] sm:$0x3]
        %s1678 = scalar_lea.vmem [#allocation6], 128
        %v1679 = vld [vmem:[%s1678] sm:$0xff]
        %v1680 = vld [vmem:[%s1678 + $0x8] sm:$0xff]
        %v1681 = vld [vmem:[%s1678 + $0x10] sm:$0x3f]
        %v1682 = vld [vmem:[%s1678 + $0x18] sm:$0x3f]
        %v1684 = vsel %vm1420, %v1676, 0
        %v1687 = vsel %vm1420, %v1677, 0
        %v1690 = vsel %vm1427, %v1681, 0
        %v1693 = vsel %vm1427, %v1682, 0
        %1695 = vmatpush.msra.mxu0 0.0
        %1696 = vmatpush.msra.mxu0 0.0
        %1697 = vmatpush.msra.mxu0 0.0
        %1698 = vmatpush.msra.mxu0 0.0
        %1699 = vmatpush.msra.mxu0 0.0
        %1700 = vmatpush.msra.mxu0 0.0
        %1701 = vmatpush.msra.mxu0 0.0
        %1702 = vmatpush.msra.mxu0 0.0
        %1703 = vmatpush.msra.mxu0 0.0
        %1704 = vmatpush.msra.mxu0 0.0
        %1705 = vmatpush.msra.mxu0 0.0
        %1706 = vmatpush.msra.mxu0 0.0
        %1707 = vmatpush.msra.mxu0 0.0
        %1708 = vmatpush.msra.mxu0 0.0
        %1709 = vmatpush.msra.mxu0 %v1690
        %1710 = vmatpush.msra.mxu0 %v1679
        %1711 = vmatmul.f32.gmra.mxu0 %v1684
        %v1712 = vpop.f32.mrf.mxu0
        %v1713 = vadd.f32 0.0, %v1712
        %1714 = vmatmul.f32.gmra.mxu0 %v1687
        %v1715 = vpop.f32.mrf.mxu0
        %v1716 = vadd.f32 0.0, %v1715
        %1717 = vdwg.mxu0
        %1718 = vmatpush.msra.mxu0 0.0
        %1719 = vmatpush.msra.mxu0 0.0
        %1720 = vmatpush.msra.mxu0 0.0
        %1721 = vmatpush.msra.mxu0 0.0
        %1722 = vmatpush.msra.mxu0 0.0
        %1723 = vmatpush.msra.mxu0 0.0
        %1724 = vmatpush.msra.mxu0 0.0
        %1725 = vmatpush.msra.mxu0 0.0
        %1726 = vmatpush.msra.mxu0 0.0
        %1727 = vmatpush.msra.mxu0 0.0
        %1728 = vmatpush.msra.mxu0 0.0
        %1729 = vmatpush.msra.mxu0 0.0
        %1730 = vmatpush.msra.mxu0 0.0
        %1731 = vmatpush.msra.mxu0 0.0
        %1732 = vmatpush.msra.mxu0 %v1693
        %1733 = vmatpush.msra.mxu0 %v1680
        %1734 = vmatmul.f32.gmra.mxu0 %v1684
        %v1735 = vpop.f32.mrf.mxu0
        %v1736 = vadd.f32 0.0, %v1735
        %1737 = vmatmul.f32.gmra.mxu0 %v1687
        %v1738 = vpop.f32.mrf.mxu0
        %v1739 = vadd.f32 0.0, %v1738
        %1740 = vdwg.mxu0
        %v1741 = vadd.f32 %v1672, %v1713
        %v1742 = vadd.f32 %v1673, %v1736
        %v1743 = vadd.f32 %v1674, %v1716
        %v1744 = vadd.f32 %v1675, %v1739
        %s1745 = scalar_lea.vmem [#allocation6], 160
        %v1746 = vld [vmem:[%s1745] sm:$0xff]
        %v1747 = vld [vmem:[%s1745 + $0x8] sm:$0xff]
        %v1748 = vld [vmem:[%s1745 + $0x10] sm:$0x3f]
        %v1749 = vld [vmem:[%s1745 + $0x18] sm:$0x3f]
        %1750 = vrot.lane.b32.xlu0 %v1407, 114
        %v1751 = vpop.permute.xlu0 %1750
        %1752 = vrot.lane.b32.xlu0 %v1408, 114
        %v1753 = vpop.permute.xlu0 %1752
        %v1754 = vsel %vm1420, %v1751, 0
        %v1756 = vsel %vm1420, %v1753, 0
        %v1759 = vsel %vm1427, %v1748, 0
        %v1762 = vsel %vm1427, %v1749, 0
        %1764 = vmatpush.msra.mxu0 0.0
        %1765 = vmatpush.msra.mxu0 0.0
        %1766 = vmatpush.msra.mxu0 0.0
        %1767 = vmatpush.msra.mxu0 0.0
        %1768 = vmatpush.msra.mxu0 0.0
        %1769 = vmatpush.msra.mxu0 0.0
        %1770 = vmatpush.msra.mxu0 0.0
        %1771 = vmatpush.msra.mxu0 0.0
        %1772 = vmatpush.msra.mxu0 0.0
        %1773 = vmatpush.msra.mxu0 0.0
        %1774 = vmatpush.msra.mxu0 0.0
        %1775 = vmatpush.msra.mxu0 0.0
        %1776 = vmatpush.msra.mxu0 0.0
        %1777 = vmatpush.msra.mxu0 0.0
        %1778 = vmatpush.msra.mxu0 %v1759
        %1779 = vmatpush.msra.mxu0 %v1746
        %1780 = vmatmul.f32.gmra.mxu0 %v1754
        %v1781 = vpop.f32.mrf.mxu0
        %v1782 = vadd.f32 0.0, %v1781
        %1783 = vmatmul.f32.gmra.mxu0 %v1756
        %v1784 = vpop.f32.mrf.mxu0
        %v1785 = vadd.f32 0.0, %v1784
        %1786 = vdwg.mxu0
        %1787 = vmatpush.msra.mxu0 0.0
        %1788 = vmatpush.msra.mxu0 0.0
        %1789 = vmatpush.msra.mxu0 0.0
        %1790 = vmatpush.msra.mxu0 0.0
        %1791 = vmatpush.msra.mxu0 0.0
        %1792 = vmatpush.msra.mxu0 0.0
        %1793 = vmatpush.msra.mxu0 0.0
        %1794 = vmatpush.msra.mxu0 0.0
        %1795 = vmatpush.msra.mxu0 0.0
        %1796 = vmatpush.msra.mxu0 0.0
        %1797 = vmatpush.msra.mxu0 0.0
        %1798 = vmatpush.msra.mxu0 0.0
        %1799 = vmatpush.msra.mxu0 0.0
        %1800 = vmatpush.msra.mxu0 0.0
        %1801 = vmatpush.msra.mxu0 %v1762
        %1802 = vmatpush.msra.mxu0 %v1747
        %1803 = vmatmul.f32.gmra.mxu0 %v1754
        %v1804 = vpop.f32.mrf.mxu0
        %v1805 = vadd.f32 0.0, %v1804
        %1806 = vmatmul.f32.gmra.mxu0 %v1756
        %v1807 = vpop.f32.mrf.mxu0
        %v1808 = vadd.f32 0.0, %v1807
        %1809 = vdwg.mxu0
        %v1810 = vadd.f32 %v1741, %v1782
        %v1811 = vadd.f32 %v1742, %v1805
        %v1812 = vadd.f32 %v1743, %v1785
        %v1813 = vadd.f32 %v1744, %v1808
        %s1814 = scalar_lea.vmem [#allocation6], 192
        %v1815 = vld [vmem:[%s1814] sm:$0xff]
        %v1816 = vld [vmem:[%s1814 + $0x8] sm:$0xff]
        %v1817 = vld [vmem:[%s1814 + $0x10] sm:$0x3f]
        %v1818 = vld [vmem:[%s1814 + $0x18] sm:$0x3f]
        %1819 = vrot.lane.b32.xlu0 %v1413, 114
        %v1820 = vpop.permute.xlu0 %1819
        %1821 = vrot.lane.b32.xlu0 %v1414, 114
        %v1822 = vpop.permute.xlu0 %1821
        %v1823 = vsel %vm1420, %v1820, 0
        %v1825 = vsel %vm1420, %v1822, 0
        %v1828 = vsel %vm1427, %v1817, 0
        %v1831 = vsel %vm1427, %v1818, 0
        %1833 = vmatpush.msra.mxu0 0.0
        %1834 = vmatpush.msra.mxu0 0.0
        %1835 = vmatpush.msra.mxu0 0.0
        %1836 = vmatpush.msra.mxu0 0.0
        %1837 = vmatpush.msra.mxu0 0.0
        %1838 = vmatpush.msra.mxu0 0.0
        %1839 = vmatpush.msra.mxu0 0.0
        %1840 = vmatpush.msra.mxu0 0.0
        %1841 = vmatpush.msra.mxu0 0.0
        %1842 = vmatpush.msra.mxu0 0.0
        %1843 = vmatpush.msra.mxu0 0.0
        %1844 = vmatpush.msra.mxu0 0.0
        %1845 = vmatpush.msra.mxu0 0.0
        %1846 = vmatpush.msra.mxu0 0.0
        %1847 = vmatpush.msra.mxu0 %v1828
        %1848 = vmatpush.msra.mxu0 %v1815
        %1849 = vmatmul.f32.gmra.mxu0 %v1823
        %v1850 = vpop.f32.mrf.mxu0
        %v1851 = vadd.f32 0.0, %v1850
        %1852 = vmatmul.f32.gmra.mxu0 %v1825
        %v1853 = vpop.f32.mrf.mxu0
        %v1854 = vadd.f32 0.0, %v1853
        %1855 = vdwg.mxu0
        %1856 = vmatpush.msra.mxu0 0.0
        %1857 = vmatpush.msra.mxu0 0.0
        %1858 = vmatpush.msra.mxu0 0.0
        %1859 = vmatpush.msra.mxu0 0.0
        %1860 = vmatpush.msra.mxu0 0.0
        %1861 = vmatpush.msra.mxu0 0.0
        %1862 = vmatpush.msra.mxu0 0.0
        %1863 = vmatpush.msra.mxu0 0.0
        %1864 = vmatpush.msra.mxu0 0.0
        %1865 = vmatpush.msra.mxu0 0.0
        %1866 = vmatpush.msra.mxu0 0.0
        %1867 = vmatpush.msra.mxu0 0.0
        %1868 = vmatpush.msra.mxu0 0.0
        %1869 = vmatpush.msra.mxu0 0.0
        %1870 = vmatpush.msra.mxu0 %v1831
        %1871 = vmatpush.msra.mxu0 %v1816
        %1872 = vmatmul.f32.gmra.mxu0 %v1823
        %v1873 = vpop.f32.mrf.mxu0
        %v1874 = vadd.f32 0.0, %v1873
        %1875 = vmatmul.f32.gmra.mxu0 %v1825
        %v1876 = vpop.f32.mrf.mxu0
        %v1877 = vadd.f32 0.0, %v1876
        %1878 = vdwg.mxu0
        %v1879 = vadd.f32 %v1810, %v1851
        %v1880 = vadd.f32 %v1811, %v1874
        %v1881 = vadd.f32 %v1812, %v1854
        %v1882 = vadd.f32 %v1813, %v1877
        %s1883 = scalar_lea.vmem [#allocation6], 224
        %v1884 = vld [vmem:[%s1883] sm:$0xff]
        %v1885 = vld [vmem:[%s1883 + $0x8] sm:$0xff]
        %v1886 = vld [vmem:[%s1883 + $0x10] sm:$0x3f]
        %v1887 = vld [vmem:[%s1883 + $0x18] sm:$0x3f]
        %1888 = vrot.lane.b32.xlu0 %v1538, 114
        %v1889 = vpop.permute.xlu0 %1888
        %1890 = vrot.lane.b32.xlu0 %v1539, 114
        %v1891 = vpop.permute.xlu0 %1890
        %v1892 = vsel %vm1420, %v1889, 0
        %v1894 = vsel %vm1420, %v1891, 0
        %v1897 = vsel %vm1427, %v1886, 0
        %v1900 = vsel %vm1427, %v1887, 0
        %1902 = vmatpush.msra.mxu0 0.0
        %1903 = vmatpush.msra.mxu0 0.0
        %1904 = vmatpush.msra.mxu0 0.0
        %1905 = vmatpush.msra.mxu0 0.0
        %1906 = vmatpush.msra.mxu0 0.0
        %1907 = vmatpush.msra.mxu0 0.0
        %1908 = vmatpush.msra.mxu0 0.0
        %1909 = vmatpush.msra.mxu0 0.0
        %1910 = vmatpush.msra.mxu0 0.0
        %1911 = vmatpush.msra.mxu0 0.0
        %1912 = vmatpush.msra.mxu0 0.0
        %1913 = vmatpush.msra.mxu0 0.0
        %1914 = vmatpush.msra.mxu0 0.0
        %1915 = vmatpush.msra.mxu0 0.0
        %1916 = vmatpush.msra.mxu0 %v1897
        %1917 = vmatpush.msra.mxu0 %v1884
        %1918 = vmatmul.f32.gmra.mxu0 %v1892
        %v1919 = vpop.f32.mrf.mxu0
        %v1920 = vadd.f32 0.0, %v1919
        %1921 = vmatmul.f32.gmra.mxu0 %v1894
        %v1922 = vpop.f32.mrf.mxu0
        %v1923 = vadd.f32 0.0, %v1922
        %1924 = vdwg.mxu0
        %1925 = vmatpush.msra.mxu0 0.0
        %1926 = vmatpush.msra.mxu0 0.0
        %1927 = vmatpush.msra.mxu0 0.0
        %1928 = vmatpush.msra.mxu0 0.0
        %1929 = vmatpush.msra.mxu0 0.0
        %1930 = vmatpush.msra.mxu0 0.0
        %1931 = vmatpush.msra.mxu0 0.0
        %1932 = vmatpush.msra.mxu0 0.0
        %1933 = vmatpush.msra.mxu0 0.0
        %1934 = vmatpush.msra.mxu0 0.0
        %1935 = vmatpush.msra.mxu0 0.0
        %1936 = vmatpush.msra.mxu0 0.0
        %1937 = vmatpush.msra.mxu0 0.0
        %1938 = vmatpush.msra.mxu0 0.0
        %1939 = vmatpush.msra.mxu0 %v1900
        %1940 = vmatpush.msra.mxu0 %v1885
        %1941 = vmatmul.f32.gmra.mxu0 %v1892
        %v1942 = vpop.f32.mrf.mxu0
        %v1943 = vadd.f32 0.0, %v1942
        %1944 = vmatmul.f32.gmra.mxu0 %v1894
        %v1945 = vpop.f32.mrf.mxu0
        %v1946 = vadd.f32 0.0, %v1945
        %1947 = vdwg.mxu0
        %v1948 = vadd.f32 %v1879, %v1920
        %v1949 = vadd.f32 %v1880, %v1943
        %v1950 = vadd.f32 %v1881, %v1923
        %v1951 = vadd.f32 %v1882, %v1946
        %s1952 = scalar_lea.vmem [#allocation6], 256
        %v1953 = vld [vmem:[%s1952] sm:$0xff]
        %v1954 = vld [vmem:[%s1952 + $0x8] sm:$0xff]
        %v1955 = vld [vmem:[%s1952 + $0x10] sm:$0x3f]
        %v1956 = vld [vmem:[%s1952 + $0x18] sm:$0x3f]
        %1957 = vrot.lane.b32.xlu0 %v1607, 114
        %v1958 = vpop.permute.xlu0 %1957
        %1959 = vrot.lane.b32.xlu0 %v1608, 114
        %v1960 = vpop.permute.xlu0 %1959
        %v1961 = vsel %vm1420, %v1958, 0
        %v1963 = vsel %vm1420, %v1960, 0
        %v1966 = vsel %vm1427, %v1955, 0
        %v1969 = vsel %vm1427, %v1956, 0
        %1971 = vmatpush.msra.mxu0 0.0
        %1972 = vmatpush.msra.mxu0 0.0
        %1973 = vmatpush.msra.mxu0 0.0
        %1974 = vmatpush.msra.mxu0 0.0
        %1975 = vmatpush.msra.mxu0 0.0
        %1976 = vmatpush.msra.mxu0 0.0
        %1977 = vmatpush.msra.mxu0 0.0
        %1978 = vmatpush.msra.mxu0 0.0
        %1979 = vmatpush.msra.mxu0 0.0
        %1980 = vmatpush.msra.mxu0 0.0
        %1981 = vmatpush.msra.mxu0 0.0
        %1982 = vmatpush.msra.mxu0 0.0
        %1983 = vmatpush.msra.mxu0 0.0
        %1984 = vmatpush.msra.mxu0 0.0
        %1985 = vmatpush.msra.mxu0 %v1966
        %1986 = vmatpush.msra.mxu0 %v1953
        %1987 = vmatmul.f32.gmra.mxu0 %v1961
        %v1988 = vpop.f32.mrf.mxu0
        %v1989 = vadd.f32 0.0, %v1988
        %1990 = vmatmul.f32.gmra.mxu0 %v1963
        %v1991 = vpop.f32.mrf.mxu0
        %v1992 = vadd.f32 0.0, %v1991
        %1993 = vdwg.mxu0
        %1994 = vmatpush.msra.mxu0 0.0
        %1995 = vmatpush.msra.mxu0 0.0
        %1996 = vmatpush.msra.mxu0 0.0
        %1997 = vmatpush.msra.mxu0 0.0
        %1998 = vmatpush.msra.mxu0 0.0
        %1999 = vmatpush.msra.mxu0 0.0
        %2000 = vmatpush.msra.mxu0 0.0
        %2001 = vmatpush.msra.mxu0 0.0
        %2002 = vmatpush.msra.mxu0 0.0
        %2003 = vmatpush.msra.mxu0 0.0
        %2004 = vmatpush.msra.mxu0 0.0
        %2005 = vmatpush.msra.mxu0 0.0
        %2006 = vmatpush.msra.mxu0 0.0
        %2007 = vmatpush.msra.mxu0 0.0
        %2008 = vmatpush.msra.mxu0 %v1969
        %2009 = vmatpush.msra.mxu0 %v1954
        %2010 = vmatmul.f32.gmra.mxu0 %v1961
        %v2011 = vpop.f32.mrf.mxu0
        %v2012 = vadd.f32 0.0, %v2011
        %2013 = vmatmul.f32.gmra.mxu0 %v1963
        %v2014 = vpop.f32.mrf.mxu0
        %v2015 = vadd.f32 0.0, %v2014
        %2016 = vdwg.mxu0
        %v2017 = vadd.f32 %v1948, %v1989
        %v2018 = vadd.f32 %v1949, %v2012
        %v2019 = vadd.f32 %v1950, %v1992
        %v2020 = vadd.f32 %v1951, %v2015
        %s2021 = scalar_lea.vmem [#allocation6], 288
        %v2022 = vld [vmem:[%s2021] sm:$0xff]
        %v2023 = vld [vmem:[%s2021 + $0x8] sm:$0xff]
        %v2024 = vld [vmem:[%s2021 + $0x10] sm:$0x3f]
        %v2025 = vld [vmem:[%s2021 + $0x18] sm:$0x3f]
        %2026 = vrot.lane.b32.xlu0 %v1676, 114
        %v2027 = vpop.permute.xlu0 %2026
        %2028 = vrot.lane.b32.xlu0 %v1677, 114
        %v2029 = vpop.permute.xlu0 %2028
        %v2030 = vsel %vm1420, %v2027, 0
        %v2032 = vsel %vm1420, %v2029, 0
        %v2035 = vsel %vm1427, %v2024, 0
        %v2038 = vsel %vm1427, %v2025, 0
        %2040 = vmatpush.msra.mxu0 0.0
        %2041 = vmatpush.msra.mxu0 0.0
        %2042 = vmatpush.msra.mxu0 0.0
        %2043 = vmatpush.msra.mxu0 0.0
        %2044 = vmatpush.msra.mxu0 0.0
        %2045 = vmatpush.msra.mxu0 0.0
        %2046 = vmatpush.msra.mxu0 0.0
        %2047 = vmatpush.msra.mxu0 0.0
        %2048 = vmatpush.msra.mxu0 0.0
        %2049 = vmatpush.msra.mxu0 0.0
        %2050 = vmatpush.msra.mxu0 0.0
        %2051 = vmatpush.msra.mxu0 0.0
        %2052 = vmatpush.msra.mxu0 0.0
        %2053 = vmatpush.msra.mxu0 0.0
        %2054 = vmatpush.msra.mxu0 %v2035
        %2055 = vmatpush.msra.mxu0 %v2022
        %2056 = vmatmul.f32.gmra.mxu0 %v2030
        %v2057 = vpop.f32.mrf.mxu0
        %v2058 = vadd.f32 0.0, %v2057
        %2059 = vmatmul.f32.gmra.mxu0 %v2032
        %v2060 = vpop.f32.mrf.mxu0
        %v2061 = vadd.f32 0.0, %v2060
        %2062 = vdwg.mxu0
        %2063 = vmatpush.msra.mxu0 0.0
        %2064 = vmatpush.msra.mxu0 0.0
        %2065 = vmatpush.msra.mxu0 0.0
        %2066 = vmatpush.msra.mxu0 0.0
        %2067 = vmatpush.msra.mxu0 0.0
        %2068 = vmatpush.msra.mxu0 0.0
        %2069 = vmatpush.msra.mxu0 0.0
        %2070 = vmatpush.msra.mxu0 0.0
        %2071 = vmatpush.msra.mxu0 0.0
        %2072 = vmatpush.msra.mxu0 0.0
        %2073 = vmatpush.msra.mxu0 0.0
        %2074 = vmatpush.msra.mxu0 0.0
        %2075 = vmatpush.msra.mxu0 0.0
        %2076 = vmatpush.msra.mxu0 0.0
        %2077 = vmatpush.msra.mxu0 %v2038
        %2078 = vmatpush.msra.mxu0 %v2023
        %2079 = vmatmul.f32.gmra.mxu0 %v2030
        %v2080 = vpop.f32.mrf.mxu0
        %v2081 = vadd.f32 0.0, %v2080
        %2082 = vmatmul.f32.gmra.mxu0 %v2032
        %v2083 = vpop.f32.mrf.mxu0
        %v2084 = vadd.f32 0.0, %v2083
        %2085 = vdwg.mxu0
        %v2086 = vadd.f32 %v2017, %v2058
        %v2087 = vadd.f32 %v2018, %v2081
        %v2088 = vadd.f32 %v2019, %v2061
        %v2089 = vadd.f32 %v2020, %v2084
        %s2090 = scalar_lea.vmem [#allocation6], 320
        %v2091 = vld [vmem:[%s2090] sm:$0xff]
        %v2092 = vld [vmem:[%s2090 + $0x8] sm:$0xff]
        %v2093 = vld [vmem:[%s2090 + $0x10] sm:$0x3f]
        %v2094 = vld [vmem:[%s2090 + $0x18] sm:$0x3f]
        %2095 = vrot.lane.b32.xlu0 %v1407, 100
        %v2096 = vpop.permute.xlu0 %2095
        %2097 = vrot.lane.b32.xlu0 %v1408, 100
        %v2098 = vpop.permute.xlu0 %2097
        %v2099 = vsel %vm1420, %v2096, 0
        %v2101 = vsel %vm1420, %v2098, 0
        %v2104 = vsel %vm1427, %v2093, 0
        %v2107 = vsel %vm1427, %v2094, 0
        %2109 = vmatpush.msra.mxu0 0.0
        %2110 = vmatpush.msra.mxu0 0.0
        %2111 = vmatpush.msra.mxu0 0.0
        %2112 = vmatpush.msra.mxu0 0.0
        %2113 = vmatpush.msra.mxu0 0.0
        %2114 = vmatpush.msra.mxu0 0.0
        %2115 = vmatpush.msra.mxu0 0.0
        %2116 = vmatpush.msra.mxu0 0.0
        %2117 = vmatpush.msra.mxu0 0.0
        %2118 = vmatpush.msra.mxu0 0.0
        %2119 = vmatpush.msra.mxu0 0.0
        %2120 = vmatpush.msra.mxu0 0.0
        %2121 = vmatpush.msra.mxu0 0.0
        %2122 = vmatpush.msra.mxu0 0.0
        %2123 = vmatpush.msra.mxu0 %v2104
        %2124 = vmatpush.msra.mxu0 %v2091
        %2125 = vmatmul.f32.gmra.mxu0 %v2099
        %v2126 = vpop.f32.mrf.mxu0
        %v2127 = vadd.f32 0.0, %v2126
        %2128 = vmatmul.f32.gmra.mxu0 %v2101
        %v2129 = vpop.f32.mrf.mxu0
        %v2130 = vadd.f32 0.0, %v2129
        %2131 = vdwg.mxu0
        %2132 = vmatpush.msra.mxu0 0.0
        %2133 = vmatpush.msra.mxu0 0.0
        %2134 = vmatpush.msra.mxu0 0.0
        %2135 = vmatpush.msra.mxu0 0.0
        %2136 = vmatpush.msra.mxu0 0.0
        %2137 = vmatpush.msra.mxu0 0.0
        %2138 = vmatpush.msra.mxu0 0.0
        %2139 = vmatpush.msra.mxu0 0.0
        %2140 = vmatpush.msra.mxu0 0.0
        %2141 = vmatpush.msra.mxu0 0.0
        %2142 = vmatpush.msra.mxu0 0.0
        %2143 = vmatpush.msra.mxu0 0.0
        %2144 = vmatpush.msra.mxu0 0.0
        %2145 = vmatpush.msra.mxu0 0.0
        %2146 = vmatpush.msra.mxu0 %v2107
        %2147 = vmatpush.msra.mxu0 %v2092
        %2148 = vmatmul.f32.gmra.mxu0 %v2099
        %v2149 = vpop.f32.mrf.mxu0
        %v2150 = vadd.f32 0.0, %v2149
        %2151 = vmatmul.f32.gmra.mxu0 %v2101
        %v2152 = vpop.f32.mrf.mxu0
        %v2153 = vadd.f32 0.0, %v2152
        %2154 = vdwg.mxu0
        %v2155 = vadd.f32 %v2086, %v2127
        %v2156 = vadd.f32 %v2087, %v2150
        %v2157 = vadd.f32 %v2088, %v2130
        %v2158 = vadd.f32 %v2089, %v2153
        %s2159 = scalar_lea.vmem [#allocation6], 352
        %v2160 = vld [vmem:[%s2159] sm:$0xff]
        %v2161 = vld [vmem:[%s2159 + $0x8] sm:$0xff]
        %v2162 = vld [vmem:[%s2159 + $0x10] sm:$0x3f]
        %v2163 = vld [vmem:[%s2159 + $0x18] sm:$0x3f]
        %2164 = vrot.lane.b32.xlu0 %v1413, 100
        %v2165 = vpop.permute.xlu0 %2164
        %2166 = vrot.lane.b32.xlu0 %v1414, 100
        %v2167 = vpop.permute.xlu0 %2166
        %v2168 = vsel %vm1420, %v2165, 0
        %v2170 = vsel %vm1420, %v2167, 0
        %v2173 = vsel %vm1427, %v2162, 0
        %v2176 = vsel %vm1427, %v2163, 0
        %2178 = vmatpush.msra.mxu0 0.0
        %2179 = vmatpush.msra.mxu0 0.0
        %2180 = vmatpush.msra.mxu0 0.0
        %2181 = vmatpush.msra.mxu0 0.0
        %2182 = vmatpush.msra.mxu0 0.0
        %2183 = vmatpush.msra.mxu0 0.0
        %2184 = vmatpush.msra.mxu0 0.0
        %2185 = vmatpush.msra.mxu0 0.0
        %2186 = vmatpush.msra.mxu0 0.0
        %2187 = vmatpush.msra.mxu0 0.0
        %2188 = vmatpush.msra.mxu0 0.0
        %2189 = vmatpush.msra.mxu0 0.0
        %2190 = vmatpush.msra.mxu0 0.0
        %2191 = vmatpush.msra.mxu0 0.0
        %2192 = vmatpush.msra.mxu0 %v2173
        %2193 = vmatpush.msra.mxu0 %v2160
        %2194 = vmatmul.f32.gmra.mxu0 %v2168
        %v2195 = vpop.f32.mrf.mxu0
        %v2196 = vadd.f32 0.0, %v2195
        %2197 = vmatmul.f32.gmra.mxu0 %v2170
        %v2198 = vpop.f32.mrf.mxu0
        %v2199 = vadd.f32 0.0, %v2198
        %2200 = vdwg.mxu0
        %2201 = vmatpush.msra.mxu0 0.0
        %2202 = vmatpush.msra.mxu0 0.0
        %2203 = vmatpush.msra.mxu0 0.0
        %2204 = vmatpush.msra.mxu0 0.0
        %2205 = vmatpush.msra.mxu0 0.0
        %2206 = vmatpush.msra.mxu0 0.0
        %2207 = vmatpush.msra.mxu0 0.0
        %2208 = vmatpush.msra.mxu0 0.0
        %2209 = vmatpush.msra.mxu0 0.0
        %2210 = vmatpush.msra.mxu0 0.0
        %2211 = vmatpush.msra.mxu0 0.0
        %2212 = vmatpush.msra.mxu0 0.0
        %2213 = vmatpush.msra.mxu0 0.0
        %2214 = vmatpush.msra.mxu0 0.0
        %2215 = vmatpush.msra.mxu0 %v2176
        %2216 = vmatpush.msra.mxu0 %v2161
        %2217 = vmatmul.f32.gmra.mxu0 %v2168
        %v2218 = vpop.f32.mrf.mxu0
        %v2219 = vadd.f32 0.0, %v2218
        %2220 = vmatmul.f32.gmra.mxu0 %v2170
        %v2221 = vpop.f32.mrf.mxu0
        %v2222 = vadd.f32 0.0, %v2221
        %2223 = vdwg.mxu0
        %v2224 = vadd.f32 %v2155, %v2196
        %v2225 = vadd.f32 %v2156, %v2219
        %v2226 = vadd.f32 %v2157, %v2199
        %v2227 = vadd.f32 %v2158, %v2222
        %s2228 = scalar_lea.vmem [#allocation6], 384
        %v2229 = vld [vmem:[%s2228] sm:$0xff]
        %v2230 = vld [vmem:[%s2228 + $0x8] sm:$0xff]
        %v2231 = vld [vmem:[%s2228 + $0x10] sm:$0x3f]
        %v2232 = vld [vmem:[%s2228 + $0x18] sm:$0x3f]
        %2233 = vrot.lane.b32.xlu0 %v1538, 100
        %v2234 = vpop.permute.xlu0 %2233
        %2235 = vrot.lane.b32.xlu0 %v1539, 100
        %v2236 = vpop.permute.xlu0 %2235
        %v2237 = vsel %vm1420, %v2234, 0
        %v2239 = vsel %vm1420, %v2236, 0
        %v2242 = vsel %vm1427, %v2231, 0
        %v2245 = vsel %vm1427, %v2232, 0
        %2247 = vmatpush.msra.mxu0 0.0
        %2248 = vmatpush.msra.mxu0 0.0
        %2249 = vmatpush.msra.mxu0 0.0
        %2250 = vmatpush.msra.mxu0 0.0
        %2251 = vmatpush.msra.mxu0 0.0
        %2252 = vmatpush.msra.mxu0 0.0
        %2253 = vmatpush.msra.mxu0 0.0
        %2254 = vmatpush.msra.mxu0 0.0
        %2255 = vmatpush.msra.mxu0 0.0
        %2256 = vmatpush.msra.mxu0 0.0
        %2257 = vmatpush.msra.mxu0 0.0
        %2258 = vmatpush.msra.mxu0 0.0
        %2259 = vmatpush.msra.mxu0 0.0
        %2260 = vmatpush.msra.mxu0 0.0
        %2261 = vmatpush.msra.mxu0 %v2242
        %2262 = vmatpush.msra.mxu0 %v2229
        %2263 = vmatmul.f32.gmra.mxu0 %v2237
        %v2264 = vpop.f32.mrf.mxu0
        %v2265 = vadd.f32 0.0, %v2264
        %2266 = vmatmul.f32.gmra.mxu0 %v2239
        %v2267 = vpop.f32.mrf.mxu0
        %v2268 = vadd.f32 0.0, %v2267
        %2269 = vdwg.mxu0
        %2270 = vmatpush.msra.mxu0 0.0
        %2271 = vmatpush.msra.mxu0 0.0
        %2272 = vmatpush.msra.mxu0 0.0
        %2273 = vmatpush.msra.mxu0 0.0
        %2274 = vmatpush.msra.mxu0 0.0
        %2275 = vmatpush.msra.mxu0 0.0
        %2276 = vmatpush.msra.mxu0 0.0
        %2277 = vmatpush.msra.mxu0 0.0
        %2278 = vmatpush.msra.mxu0 0.0
        %2279 = vmatpush.msra.mxu0 0.0
        %2280 = vmatpush.msra.mxu0 0.0
        %2281 = vmatpush.msra.mxu0 0.0
        %2282 = vmatpush.msra.mxu0 0.0
        %2283 = vmatpush.msra.mxu0 0.0
        %2284 = vmatpush.msra.mxu0 %v2245
        %2285 = vmatpush.msra.mxu0 %v2230
        %2286 = vmatmul.f32.gmra.mxu0 %v2237
        %v2287 = vpop.f32.mrf.mxu0
        %v2288 = vadd.f32 0.0, %v2287
        %2289 = vmatmul.f32.gmra.mxu0 %v2239
        %v2290 = vpop.f32.mrf.mxu0
        %v2291 = vadd.f32 0.0, %v2290
        %2292 = vdwg.mxu0
        %v2293 = vadd.f32 %v2224, %v2265
        %v2294 = vadd.f32 %v2225, %v2288
        %v2295 = vadd.f32 %v2226, %v2268
        %v2296 = vadd.f32 %v2227, %v2291
        %s2297 = scalar_lea.vmem [#allocation6], 416
        %v2298 = vld [vmem:[%s2297] sm:$0xff]
        %v2299 = vld [vmem:[%s2297 + $0x8] sm:$0xff]
        %v2300 = vld [vmem:[%s2297 + $0x10] sm:$0x3f]
        %v2301 = vld [vmem:[%s2297 + $0x18] sm:$0x3f]
        %2302 = vrot.lane.b32.xlu0 %v1607, 100
        %v2303 = vpop.permute.xlu0 %2302
        %2304 = vrot.lane.b32.xlu0 %v1608, 100
        %v2305 = vpop.permute.xlu0 %2304
        %v2306 = vsel %vm1420, %v2303, 0
        %v2308 = vsel %vm1420, %v2305, 0
        %v2311 = vsel %vm1427, %v2300, 0
        %v2314 = vsel %vm1427, %v2301, 0
        %2316 = vmatpush.msra.mxu0 0.0
        %2317 = vmatpush.msra.mxu0 0.0
        %2318 = vmatpush.msra.mxu0 0.0
        %2319 = vmatpush.msra.mxu0 0.0
        %2320 = vmatpush.msra.mxu0 0.0
        %2321 = vmatpush.msra.mxu0 0.0
        %2322 = vmatpush.msra.mxu0 0.0
        %2323 = vmatpush.msra.mxu0 0.0
        %2324 = vmatpush.msra.mxu0 0.0
        %2325 = vmatpush.msra.mxu0 0.0
        %2326 = vmatpush.msra.mxu0 0.0
        %2327 = vmatpush.msra.mxu0 0.0
        %2328 = vmatpush.msra.mxu0 0.0
        %2329 = vmatpush.msra.mxu0 0.0
        %2330 = vmatpush.msra.mxu0 %v2311
        %2331 = vmatpush.msra.mxu0 %v2298
        %2332 = vmatmul.f32.gmra.mxu0 %v2306
        %v2333 = vpop.f32.mrf.mxu0
        %v2334 = vadd.f32 0.0, %v2333
        %2335 = vmatmul.f32.gmra.mxu0 %v2308
        %v2336 = vpop.f32.mrf.mxu0
        %v2337 = vadd.f32 0.0, %v2336
        %2338 = vdwg.mxu0
        %2339 = vmatpush.msra.mxu0 0.0
        %2340 = vmatpush.msra.mxu0 0.0
        %2341 = vmatpush.msra.mxu0 0.0
        %2342 = vmatpush.msra.mxu0 0.0
        %2343 = vmatpush.msra.mxu0 0.0
        %2344 = vmatpush.msra.mxu0 0.0
        %2345 = vmatpush.msra.mxu0 0.0
        %2346 = vmatpush.msra.mxu0 0.0
        %2347 = vmatpush.msra.mxu0 0.0
        %2348 = vmatpush.msra.mxu0 0.0
        %2349 = vmatpush.msra.mxu0 0.0
        %2350 = vmatpush.msra.mxu0 0.0
        %2351 = vmatpush.msra.mxu0 0.0
        %2352 = vmatpush.msra.mxu0 0.0
        %2353 = vmatpush.msra.mxu0 %v2314
        %2354 = vmatpush.msra.mxu0 %v2299
        %2355 = vmatmul.f32.gmra.mxu0 %v2306
        %v2356 = vpop.f32.mrf.mxu0
        %v2357 = vadd.f32 0.0, %v2356
        %2358 = vmatmul.f32.gmra.mxu0 %v2308
        %v2359 = vpop.f32.mrf.mxu0
        %v2360 = vadd.f32 0.0, %v2359
        %2361 = vdwg.mxu0
        %v2362 = vadd.f32 %v2293, %v2334
        %v2363 = vadd.f32 %v2294, %v2357
        %v2364 = vadd.f32 %v2295, %v2337
        %v2365 = vadd.f32 %v2296, %v2360
        %s2366 = scalar_lea.vmem [#allocation6], 448
        %v2367 = vld [vmem:[%s2366] sm:$0xff]
        %v2368 = vld [vmem:[%s2366 + $0x8] sm:$0xff]
        %v2369 = vld [vmem:[%s2366 + $0x10] sm:$0x3f]
        %v2370 = vld [vmem:[%s2366 + $0x18] sm:$0x3f]
        %2371 = vrot.lane.b32.xlu0 %v1676, 100
        %v2372 = vpop.permute.xlu0 %2371
        %2373 = vrot.lane.b32.xlu0 %v1677, 100
        %v2374 = vpop.permute.xlu0 %2373
        %v2375 = vsel %vm1420, %v2372, 0
        %v2377 = vsel %vm1420, %v2374, 0
        %v2380 = vsel %vm1427, %v2369, 0
        %v2383 = vsel %vm1427, %v2370, 0
        %2385 = vmatpush.msra.mxu0 0.0
        %2386 = vmatpush.msra.mxu0 0.0
        %2387 = vmatpush.msra.mxu0 0.0
        %2388 = vmatpush.msra.mxu0 0.0
        %2389 = vmatpush.msra.mxu0 0.0
        %2390 = vmatpush.msra.mxu0 0.0
        %2391 = vmatpush.msra.mxu0 0.0
        %2392 = vmatpush.msra.mxu0 0.0
        %2393 = vmatpush.msra.mxu0 0.0
        %2394 = vmatpush.msra.mxu0 0.0
        %2395 = vmatpush.msra.mxu0 0.0
        %2396 = vmatpush.msra.mxu0 0.0
        %2397 = vmatpush.msra.mxu0 0.0
        %2398 = vmatpush.msra.mxu0 0.0
        %2399 = vmatpush.msra.mxu0 %v2380
        %2400 = vmatpush.msra.mxu0 %v2367
        %2401 = vmatmul.f32.gmra.mxu0 %v2375
        %v2402 = vpop.f32.mrf.mxu0
        %v2403 = vadd.f32 0.0, %v2402
        %2404 = vmatmul.f32.gmra.mxu0 %v2377
        %v2405 = vpop.f32.mrf.mxu0
        %v2406 = vadd.f32 0.0, %v2405
        %2407 = vdwg.mxu0
        %2408 = vmatpush.msra.mxu0 0.0
        %2409 = vmatpush.msra.mxu0 0.0
        %2410 = vmatpush.msra.mxu0 0.0
        %2411 = vmatpush.msra.mxu0 0.0
        %2412 = vmatpush.msra.mxu0 0.0
        %2413 = vmatpush.msra.mxu0 0.0
        %2414 = vmatpush.msra.mxu0 0.0
        %2415 = vmatpush.msra.mxu0 0.0
        %2416 = vmatpush.msra.mxu0 0.0
        %2417 = vmatpush.msra.mxu0 0.0
        %2418 = vmatpush.msra.mxu0 0.0
        %2419 = vmatpush.msra.mxu0 0.0
        %2420 = vmatpush.msra.mxu0 0.0
        %2421 = vmatpush.msra.mxu0 0.0
        %2422 = vmatpush.msra.mxu0 %v2383
        %2423 = vmatpush.msra.mxu0 %v2368
        %2424 = vmatmul.f32.gmra.mxu0 %v2375
        %v2425 = vpop.f32.mrf.mxu0
        %v2426 = vadd.f32 0.0, %v2425
        %2427 = vmatmul.f32.gmra.mxu0 %v2377
        %v2428 = vpop.f32.mrf.mxu0
        %v2429 = vadd.f32 0.0, %v2428
        %2430 = vdwg.mxu0
        %v2431 = vadd.f32 %v2362, %v2403
        %v2432 = vadd.f32 %v2363, %v2426
        %v2433 = vadd.f32 %v2364, %v2406
        %v2434 = vadd.f32 %v2365, %v2429
        %s2435 = scalar_lea.vmem [#allocation6], 480
        %v2436 = vld [vmem:[%s2435] sm:$0xff]
        %v2437 = vld [vmem:[%s2435 + $0x8] sm:$0xff]
        %v2438 = vld [vmem:[%s2435 + $0x10] sm:$0x3f]
        %v2439 = vld [vmem:[%s2435 + $0x18] sm:$0x3f]
        %2440 = vrot.lane.b32.xlu0 %v1407, 86
        %v2441 = vpop.permute.xlu0 %2440
        %2442 = vrot.lane.b32.xlu0 %v1408, 86
        %v2443 = vpop.permute.xlu0 %2442
        %v2444 = vsel %vm1420, %v2441, 0
        %v2446 = vsel %vm1420, %v2443, 0
        %v2449 = vsel %vm1427, %v2438, 0
        %v2452 = vsel %vm1427, %v2439, 0
        %2454 = vmatpush.msra.mxu0 0.0
        %2455 = vmatpush.msra.mxu0 0.0
        %2456 = vmatpush.msra.mxu0 0.0
        %2457 = vmatpush.msra.mxu0 0.0
        %2458 = vmatpush.msra.mxu0 0.0
        %2459 = vmatpush.msra.mxu0 0.0
        %2460 = vmatpush.msra.mxu0 0.0
        %2461 = vmatpush.msra.mxu0 0.0
        %2462 = vmatpush.msra.mxu0 0.0
        %2463 = vmatpush.msra.mxu0 0.0
        %2464 = vmatpush.msra.mxu0 0.0
        %2465 = vmatpush.msra.mxu0 0.0
        %2466 = vmatpush.msra.mxu0 0.0
        %2467 = vmatpush.msra.mxu0 0.0
        %2468 = vmatpush.msra.mxu0 %v2449
        %2469 = vmatpush.msra.mxu0 %v2436
        %2470 = vmatmul.f32.gmra.mxu0 %v2444
        %v2471 = vpop.f32.mrf.mxu0
        %v2472 = vadd.f32 0.0, %v2471
        %2473 = vmatmul.f32.gmra.mxu0 %v2446
        %v2474 = vpop.f32.mrf.mxu0
        %v2475 = vadd.f32 0.0, %v2474
        %2476 = vdwg.mxu0
        %2477 = vmatpush.msra.mxu0 0.0
        %2478 = vmatpush.msra.mxu0 0.0
        %2479 = vmatpush.msra.mxu0 0.0
        %2480 = vmatpush.msra.mxu0 0.0
        %2481 = vmatpush.msra.mxu0 0.0
        %2482 = vmatpush.msra.mxu0 0.0
        %2483 = vmatpush.msra.mxu0 0.0
        %2484 = vmatpush.msra.mxu0 0.0
        %2485 = vmatpush.msra.mxu0 0.0
        %2486 = vmatpush.msra.mxu0 0.0
        %2487 = vmatpush.msra.mxu0 0.0
        %2488 = vmatpush.msra.mxu0 0.0
        %2489 = vmatpush.msra.mxu0 0.0
        %2490 = vmatpush.msra.mxu0 0.0
        %2491 = vmatpush.msra.mxu0 %v2452
        %2492 = vmatpush.msra.mxu0 %v2437
        %2493 = vmatmul.f32.gmra.mxu0 %v2444
        %v2494 = vpop.f32.mrf.mxu0
        %v2495 = vadd.f32 0.0, %v2494
        %2496 = vmatmul.f32.gmra.mxu0 %v2446
        %v2497 = vpop.f32.mrf.mxu0
        %v2498 = vadd.f32 0.0, %v2497
        %2499 = vdwg.mxu0
        %v2500 = vadd.f32 %v2431, %v2472
        %v2501 = vadd.f32 %v2432, %v2495
        %v2502 = vadd.f32 %v2433, %v2475
        %v2503 = vadd.f32 %v2434, %v2498
        %s2504 = scalar_lea.vmem [#allocation6], 512
        %v2505 = vld [vmem:[%s2504] sm:$0xff]
        %v2506 = vld [vmem:[%s2504 + $0x8] sm:$0xff]
        %v2507 = vld [vmem:[%s2504 + $0x10] sm:$0x3f]
        %v2508 = vld [vmem:[%s2504 + $0x18] sm:$0x3f]
        %2509 = vrot.lane.b32.xlu0 %v1413, 86
        %v2510 = vpop.permute.xlu0 %2509
        %2511 = vrot.lane.b32.xlu0 %v1414, 86
        %v2512 = vpop.permute.xlu0 %2511
        %v2513 = vsel %vm1420, %v2510, 0
        %v2515 = vsel %vm1420, %v2512, 0
        %v2518 = vsel %vm1427, %v2507, 0
        %v2521 = vsel %vm1427, %v2508, 0
        %2523 = vmatpush.msra.mxu0 0.0
        %2524 = vmatpush.msra.mxu0 0.0
        %2525 = vmatpush.msra.mxu0 0.0
        %2526 = vmatpush.msra.mxu0 0.0
        %2527 = vmatpush.msra.mxu0 0.0
        %2528 = vmatpush.msra.mxu0 0.0
        %2529 = vmatpush.msra.mxu0 0.0
        %2530 = vmatpush.msra.mxu0 0.0
        %2531 = vmatpush.msra.mxu0 0.0
        %2532 = vmatpush.msra.mxu0 0.0
        %2533 = vmatpush.msra.mxu0 0.0
        %2534 = vmatpush.msra.mxu0 0.0
        %2535 = vmatpush.msra.mxu0 0.0
        %2536 = vmatpush.msra.mxu0 0.0
        %2537 = vmatpush.msra.mxu0 %v2518
        %2538 = vmatpush.msra.mxu0 %v2505
        %2539 = vmatmul.f32.gmra.mxu0 %v2513
        %v2540 = vpop.f32.mrf.mxu0
        %v2541 = vadd.f32 0.0, %v2540
        %2542 = vmatmul.f32.gmra.mxu0 %v2515
        %v2543 = vpop.f32.mrf.mxu0
        %v2544 = vadd.f32 0.0, %v2543
        %2545 = vdwg.mxu0
        %2546 = vmatpush.msra.mxu0 0.0
        %2547 = vmatpush.msra.mxu0 0.0
        %2548 = vmatpush.msra.mxu0 0.0
        %2549 = vmatpush.msra.mxu0 0.0
        %2550 = vmatpush.msra.mxu0 0.0
        %2551 = vmatpush.msra.mxu0 0.0
        %2552 = vmatpush.msra.mxu0 0.0
        %2553 = vmatpush.msra.mxu0 0.0
        %2554 = vmatpush.msra.mxu0 0.0
        %2555 = vmatpush.msra.mxu0 0.0
        %2556 = vmatpush.msra.mxu0 0.0
        %2557 = vmatpush.msra.mxu0 0.0
        %2558 = vmatpush.msra.mxu0 0.0
        %2559 = vmatpush.msra.mxu0 0.0
        %2560 = vmatpush.msra.mxu0 %v2521
        %2561 = vmatpush.msra.mxu0 %v2506
        %2562 = vmatmul.f32.gmra.mxu0 %v2513
        %v2563 = vpop.f32.mrf.mxu0
        %v2564 = vadd.f32 0.0, %v2563
        %2565 = vmatmul.f32.gmra.mxu0 %v2515
        %v2566 = vpop.f32.mrf.mxu0
        %v2567 = vadd.f32 0.0, %v2566
        %2568 = vdwg.mxu0
        %v2569 = vadd.f32 %v2500, %v2541
        %v2570 = vadd.f32 %v2501, %v2564
        %v2571 = vadd.f32 %v2502, %v2544
        %v2572 = vadd.f32 %v2503, %v2567
        %s2573 = scalar_lea.vmem [#allocation6], 544
        %v2574 = vld [vmem:[%s2573] sm:$0xff]
        %v2575 = vld [vmem:[%s2573 + $0x8] sm:$0xff]
        %v2576 = vld [vmem:[%s2573 + $0x10] sm:$0x3f]
        %v2577 = vld [vmem:[%s2573 + $0x18] sm:$0x3f]
        %2578 = vrot.lane.b32.xlu0 %v1538, 86
        %v2579 = vpop.permute.xlu0 %2578
        %2580 = vrot.lane.b32.xlu0 %v1539, 86
        %v2581 = vpop.permute.xlu0 %2580
        %v2582 = vsel %vm1420, %v2579, 0
        %v2584 = vsel %vm1420, %v2581, 0
        %v2587 = vsel %vm1427, %v2576, 0
        %v2590 = vsel %vm1427, %v2577, 0
        %2592 = vmatpush.msra.mxu0 0.0
        %2593 = vmatpush.msra.mxu0 0.0
        %2594 = vmatpush.msra.mxu0 0.0
        %2595 = vmatpush.msra.mxu0 0.0
        %2596 = vmatpush.msra.mxu0 0.0
        %2597 = vmatpush.msra.mxu0 0.0
        %2598 = vmatpush.msra.mxu0 0.0
        %2599 = vmatpush.msra.mxu0 0.0
        %2600 = vmatpush.msra.mxu0 0.0
        %2601 = vmatpush.msra.mxu0 0.0
        %2602 = vmatpush.msra.mxu0 0.0
        %2603 = vmatpush.msra.mxu0 0.0
        %2604 = vmatpush.msra.mxu0 0.0
        %2605 = vmatpush.msra.mxu0 0.0
        %2606 = vmatpush.msra.mxu0 %v2587
        %2607 = vmatpush.msra.mxu0 %v2574
        %2608 = vmatmul.f32.gmra.mxu0 %v2582
        %v2609 = vpop.f32.mrf.mxu0
        %v2610 = vadd.f32 0.0, %v2609
        %2611 = vmatmul.f32.gmra.mxu0 %v2584
        %v2612 = vpop.f32.mrf.mxu0
        %v2613 = vadd.f32 0.0, %v2612
        %2614 = vdwg.mxu0
        %2615 = vmatpush.msra.mxu0 0.0
        %2616 = vmatpush.msra.mxu0 0.0
        %2617 = vmatpush.msra.mxu0 0.0
        %2618 = vmatpush.msra.mxu0 0.0
        %2619 = vmatpush.msra.mxu0 0.0
        %2620 = vmatpush.msra.mxu0 0.0
        %2621 = vmatpush.msra.mxu0 0.0
        %2622 = vmatpush.msra.mxu0 0.0
        %2623 = vmatpush.msra.mxu0 0.0
        %2624 = vmatpush.msra.mxu0 0.0
        %2625 = vmatpush.msra.mxu0 0.0
        %2626 = vmatpush.msra.mxu0 0.0
        %2627 = vmatpush.msra.mxu0 0.0
        %2628 = vmatpush.msra.mxu0 0.0
        %2629 = vmatpush.msra.mxu0 %v2590
        %2630 = vmatpush.msra.mxu0 %v2575
        %2631 = vmatmul.f32.gmra.mxu0 %v2582
        %v2632 = vpop.f32.mrf.mxu0
        %v2633 = vadd.f32 0.0, %v2632
        %2634 = vmatmul.f32.gmra.mxu0 %v2584
        %v2635 = vpop.f32.mrf.mxu0
        %v2636 = vadd.f32 0.0, %v2635
        %2637 = vdwg.mxu0
        %v2638 = vadd.f32 %v2569, %v2610
        %v2639 = vadd.f32 %v2570, %v2633
        %v2640 = vadd.f32 %v2571, %v2613
        %v2641 = vadd.f32 %v2572, %v2636
        %s2642 = scalar_lea.vmem [#allocation6], 576
        %v2643 = vld [vmem:[%s2642] sm:$0xff]
        %v2644 = vld [vmem:[%s2642 + $0x8] sm:$0xff]
        %v2645 = vld [vmem:[%s2642 + $0x10] sm:$0x3f]
        %v2646 = vld [vmem:[%s2642 + $0x18] sm:$0x3f]
        %2647 = vrot.lane.b32.xlu0 %v1607, 86
        %v2648 = vpop.permute.xlu0 %2647
        %2649 = vrot.lane.b32.xlu0 %v1608, 86
        %v2650 = vpop.permute.xlu0 %2649
        %v2651 = vsel %vm1420, %v2648, 0
        %v2653 = vsel %vm1420, %v2650, 0
        %v2656 = vsel %vm1427, %v2645, 0
        %v2659 = vsel %vm1427, %v2646, 0
        %2661 = vmatpush.msra.mxu0 0.0
        %2662 = vmatpush.msra.mxu0 0.0
        %2663 = vmatpush.msra.mxu0 0.0
        %2664 = vmatpush.msra.mxu0 0.0
        %2665 = vmatpush.msra.mxu0 0.0
        %2666 = vmatpush.msra.mxu0 0.0
        %2667 = vmatpush.msra.mxu0 0.0
        %2668 = vmatpush.msra.mxu0 0.0
        %2669 = vmatpush.msra.mxu0 0.0
        %2670 = vmatpush.msra.mxu0 0.0
        %2671 = vmatpush.msra.mxu0 0.0
        %2672 = vmatpush.msra.mxu0 0.0
        %2673 = vmatpush.msra.mxu0 0.0
        %2674 = vmatpush.msra.mxu0 0.0
        %2675 = vmatpush.msra.mxu0 %v2656
        %2676 = vmatpush.msra.mxu0 %v2643
        %2677 = vmatmul.f32.gmra.mxu0 %v2651
        %v2678 = vpop.f32.mrf.mxu0
        %v2679 = vadd.f32 0.0, %v2678
        %2680 = vmatmul.f32.gmra.mxu0 %v2653
        %v2681 = vpop.f32.mrf.mxu0
        %v2682 = vadd.f32 0.0, %v2681
        %2683 = vdwg.mxu0
        %2684 = vmatpush.msra.mxu0 0.0
        %2685 = vmatpush.msra.mxu0 0.0
        %2686 = vmatpush.msra.mxu0 0.0
        %2687 = vmatpush.msra.mxu0 0.0
        %2688 = vmatpush.msra.mxu0 0.0
        %2689 = vmatpush.msra.mxu0 0.0
        %2690 = vmatpush.msra.mxu0 0.0
        %2691 = vmatpush.msra.mxu0 0.0
        %2692 = vmatpush.msra.mxu0 0.0
        %2693 = vmatpush.msra.mxu0 0.0
        %2694 = vmatpush.msra.mxu0 0.0
        %2695 = vmatpush.msra.mxu0 0.0
        %2696 = vmatpush.msra.mxu0 0.0
        %2697 = vmatpush.msra.mxu0 0.0
        %2698 = vmatpush.msra.mxu0 %v2659
        %2699 = vmatpush.msra.mxu0 %v2644
        %2700 = vmatmul.f32.gmra.mxu0 %v2651
        %v2701 = vpop.f32.mrf.mxu0
        %v2702 = vadd.f32 0.0, %v2701
        %2703 = vmatmul.f32.gmra.mxu0 %v2653
        %v2704 = vpop.f32.mrf.mxu0
        %v2705 = vadd.f32 0.0, %v2704
        %2706 = vdwg.mxu0
        %v2707 = vadd.f32 %v2638, %v2679
        %v2708 = vadd.f32 %v2639, %v2702
        %v2709 = vadd.f32 %v2640, %v2682
        %v2710 = vadd.f32 %v2641, %v2705
        %s2711 = scalar_lea.vmem [#allocation6], 608
        %v2712 = vld [vmem:[%s2711] sm:$0xff]
        %v2713 = vld [vmem:[%s2711 + $0x8] sm:$0xff]
        %v2714 = vld [vmem:[%s2711 + $0x10] sm:$0x3f]
        %v2715 = vld [vmem:[%s2711 + $0x18] sm:$0x3f]
        %2716 = vrot.lane.b32.xlu0 %v1676, 86
        %v2717 = vpop.permute.xlu0 %2716
        %2718 = vrot.lane.b32.xlu0 %v1677, 86
        %v2719 = vpop.permute.xlu0 %2718
        %v2720 = vsel %vm1420, %v2717, 0
        %v2722 = vsel %vm1420, %v2719, 0
        %v2725 = vsel %vm1427, %v2714, 0
        %v2728 = vsel %vm1427, %v2715, 0
        %2730 = vmatpush.msra.mxu0 0.0
        %2731 = vmatpush.msra.mxu0 0.0
        %2732 = vmatpush.msra.mxu0 0.0
        %2733 = vmatpush.msra.mxu0 0.0
        %2734 = vmatpush.msra.mxu0 0.0
        %2735 = vmatpush.msra.mxu0 0.0
        %2736 = vmatpush.msra.mxu0 0.0
        %2737 = vmatpush.msra.mxu0 0.0
        %2738 = vmatpush.msra.mxu0 0.0
        %2739 = vmatpush.msra.mxu0 0.0
        %2740 = vmatpush.msra.mxu0 0.0
        %2741 = vmatpush.msra.mxu0 0.0
        %2742 = vmatpush.msra.mxu0 0.0
        %2743 = vmatpush.msra.mxu0 0.0
        %2744 = vmatpush.msra.mxu0 %v2725
        %2745 = vmatpush.msra.mxu0 %v2712
        %2746 = vmatmul.f32.gmra.mxu0 %v2720
        %v2747 = vpop.f32.mrf.mxu0
        %v2748 = vadd.f32 0.0, %v2747
        %2749 = vmatmul.f32.gmra.mxu0 %v2722
        %v2750 = vpop.f32.mrf.mxu0
        %v2751 = vadd.f32 0.0, %v2750
        %2752 = vdwg.mxu0
        %2753 = vmatpush.msra.mxu0 0.0
        %2754 = vmatpush.msra.mxu0 0.0
        %2755 = vmatpush.msra.mxu0 0.0
        %2756 = vmatpush.msra.mxu0 0.0
        %2757 = vmatpush.msra.mxu0 0.0
        %2758 = vmatpush.msra.mxu0 0.0
        %2759 = vmatpush.msra.mxu0 0.0
        %2760 = vmatpush.msra.mxu0 0.0
        %2761 = vmatpush.msra.mxu0 0.0
        %2762 = vmatpush.msra.mxu0 0.0
        %2763 = vmatpush.msra.mxu0 0.0
        %2764 = vmatpush.msra.mxu0 0.0
        %2765 = vmatpush.msra.mxu0 0.0
        %2766 = vmatpush.msra.mxu0 0.0
        %2767 = vmatpush.msra.mxu0 %v2728
        %2768 = vmatpush.msra.mxu0 %v2713
        %2769 = vmatmul.f32.gmra.mxu0 %v2720
        %v2770 = vpop.f32.mrf.mxu0
        %v2771 = vadd.f32 0.0, %v2770
        %2772 = vmatmul.f32.gmra.mxu0 %v2722
        %v2773 = vpop.f32.mrf.mxu0
        %v2774 = vadd.f32 0.0, %v2773
        %2775 = vdwg.mxu0
        %v2776 = vadd.f32 %v2707, %v2748
        %v2777 = vadd.f32 %v2708, %v2771
        %v2778 = vadd.f32 %v2709, %v2751
        %v2779 = vadd.f32 %v2710, %v2774
        %s2780 = scalar_lea.vmem [#allocation6], 640
        %v2781 = vld [vmem:[%s2780] sm:$0xff]
        %v2782 = vld [vmem:[%s2780 + $0x8] sm:$0xff]
        %v2783 = vld [vmem:[%s2780 + $0x10] sm:$0x3f]
        %v2784 = vld [vmem:[%s2780 + $0x18] sm:$0x3f]
        %2785 = vrot.lane.b32.xlu0 %v1407, 72
        %v2786 = vpop.permute.xlu0 %2785
        %2787 = vrot.lane.b32.xlu0 %v1408, 72
        %v2788 = vpop.permute.xlu0 %2787
        %v2789 = vsel %vm1420, %v2786, 0
        %v2791 = vsel %vm1420, %v2788, 0
        %v2794 = vsel %vm1427, %v2783, 0
        %v2797 = vsel %vm1427, %v2784, 0
        %2799 = vmatpush.msra.mxu0 0.0
        %2800 = vmatpush.msra.mxu0 0.0
        %2801 = vmatpush.msra.mxu0 0.0
        %2802 = vmatpush.msra.mxu0 0.0
        %2803 = vmatpush.msra.mxu0 0.0
        %2804 = vmatpush.msra.mxu0 0.0
        %2805 = vmatpush.msra.mxu0 0.0
        %2806 = vmatpush.msra.mxu0 0.0
        %2807 = vmatpush.msra.mxu0 0.0
        %2808 = vmatpush.msra.mxu0 0.0
        %2809 = vmatpush.msra.mxu0 0.0
        %2810 = vmatpush.msra.mxu0 0.0
        %2811 = vmatpush.msra.mxu0 0.0
        %2812 = vmatpush.msra.mxu0 0.0
        %2813 = vmatpush.msra.mxu0 %v2794
        %2814 = vmatpush.msra.mxu0 %v2781
        %2815 = vmatmul.f32.gmra.mxu0 %v2789
        %v2816 = vpop.f32.mrf.mxu0
        %v2817 = vadd.f32 0.0, %v2816
        %2818 = vmatmul.f32.gmra.mxu0 %v2791
        %v2819 = vpop.f32.mrf.mxu0
        %v2820 = vadd.f32 0.0, %v2819
        %2821 = vdwg.mxu0
        %2822 = vmatpush.msra.mxu0 0.0
        %2823 = vmatpush.msra.mxu0 0.0
        %2824 = vmatpush.msra.mxu0 0.0
        %2825 = vmatpush.msra.mxu0 0.0
        %2826 = vmatpush.msra.mxu0 0.0
        %2827 = vmatpush.msra.mxu0 0.0
        %2828 = vmatpush.msra.mxu0 0.0
        %2829 = vmatpush.msra.mxu0 0.0
        %2830 = vmatpush.msra.mxu0 0.0
        %2831 = vmatpush.msra.mxu0 0.0
        %2832 = vmatpush.msra.mxu0 0.0
        %2833 = vmatpush.msra.mxu0 0.0
        %2834 = vmatpush.msra.mxu0 0.0
        %2835 = vmatpush.msra.mxu0 0.0
        %2836 = vmatpush.msra.mxu0 %v2797
        %2837 = vmatpush.msra.mxu0 %v2782
        %2838 = vmatmul.f32.gmra.mxu0 %v2789
        %v2839 = vpop.f32.mrf.mxu0
        %v2840 = vadd.f32 0.0, %v2839
        %2841 = vmatmul.f32.gmra.mxu0 %v2791
        %v2842 = vpop.f32.mrf.mxu0
        %v2843 = vadd.f32 0.0, %v2842
        %2844 = vdwg.mxu0
        %v2845 = vadd.f32 %v2776, %v2817
        %v2846 = vadd.f32 %v2777, %v2840
        %v2847 = vadd.f32 %v2778, %v2820
        %v2848 = vadd.f32 %v2779, %v2843
        %s2849 = scalar_lea.vmem [#allocation6], 672
        %v2850 = vld [vmem:[%s2849] sm:$0xff]
        %v2851 = vld [vmem:[%s2849 + $0x8] sm:$0xff]
        %v2852 = vld [vmem:[%s2849 + $0x10] sm:$0x3f]
        %v2853 = vld [vmem:[%s2849 + $0x18] sm:$0x3f]
        %2854 = vrot.lane.b32.xlu0 %v1413, 72
        %v2855 = vpop.permute.xlu0 %2854
        %2856 = vrot.lane.b32.xlu0 %v1414, 72
        %v2857 = vpop.permute.xlu0 %2856
        %v2858 = vsel %vm1420, %v2855, 0
        %v2860 = vsel %vm1420, %v2857, 0
        %v2863 = vsel %vm1427, %v2852, 0
        %v2866 = vsel %vm1427, %v2853, 0
        %2868 = vmatpush.msra.mxu0 0.0
        %2869 = vmatpush.msra.mxu0 0.0
        %2870 = vmatpush.msra.mxu0 0.0
        %2871 = vmatpush.msra.mxu0 0.0
        %2872 = vmatpush.msra.mxu0 0.0
        %2873 = vmatpush.msra.mxu0 0.0
        %2874 = vmatpush.msra.mxu0 0.0
        %2875 = vmatpush.msra.mxu0 0.0
        %2876 = vmatpush.msra.mxu0 0.0
        %2877 = vmatpush.msra.mxu0 0.0
        %2878 = vmatpush.msra.mxu0 0.0
        %2879 = vmatpush.msra.mxu0 0.0
        %2880 = vmatpush.msra.mxu0 0.0
        %2881 = vmatpush.msra.mxu0 0.0
        %2882 = vmatpush.msra.mxu0 %v2863
        %2883 = vmatpush.msra.mxu0 %v2850
        %2884 = vmatmul.f32.gmra.mxu0 %v2858
        %v2885 = vpop.f32.mrf.mxu0
        %v2886 = vadd.f32 0.0, %v2885
        %2887 = vmatmul.f32.gmra.mxu0 %v2860
        %v2888 = vpop.f32.mrf.mxu0
        %v2889 = vadd.f32 0.0, %v2888
        %2890 = vdwg.mxu0
        %2891 = vmatpush.msra.mxu0 0.0
        %2892 = vmatpush.msra.mxu0 0.0
        %2893 = vmatpush.msra.mxu0 0.0
        %2894 = vmatpush.msra.mxu0 0.0
        %2895 = vmatpush.msra.mxu0 0.0
        %2896 = vmatpush.msra.mxu0 0.0
        %2897 = vmatpush.msra.mxu0 0.0
        %2898 = vmatpush.msra.mxu0 0.0
        %2899 = vmatpush.msra.mxu0 0.0
        %2900 = vmatpush.msra.mxu0 0.0
        %2901 = vmatpush.msra.mxu0 0.0
        %2902 = vmatpush.msra.mxu0 0.0
        %2903 = vmatpush.msra.mxu0 0.0
        %2904 = vmatpush.msra.mxu0 0.0
        %2905 = vmatpush.msra.mxu0 %v2866
        %2906 = vmatpush.msra.mxu0 %v2851
        %2907 = vmatmul.f32.gmra.mxu0 %v2858
        %v2908 = vpop.f32.mrf.mxu0
        %v2909 = vadd.f32 0.0, %v2908
        %2910 = vmatmul.f32.gmra.mxu0 %v2860
        %v2911 = vpop.f32.mrf.mxu0
        %v2912 = vadd.f32 0.0, %v2911
        %2913 = vdwg.mxu0
        %v2914 = vadd.f32 %v2845, %v2886
        %v2915 = vadd.f32 %v2846, %v2909
        %v2916 = vadd.f32 %v2847, %v2889
        %v2917 = vadd.f32 %v2848, %v2912
        %s2918 = scalar_lea.vmem [#allocation6], 704
        %v2919 = vld [vmem:[%s2918] sm:$0xff]
        %v2920 = vld [vmem:[%s2918 + $0x8] sm:$0xff]
        %v2921 = vld [vmem:[%s2918 + $0x10] sm:$0x3f]
        %v2922 = vld [vmem:[%s2918 + $0x18] sm:$0x3f]
        %2923 = vrot.lane.b32.xlu0 %v1538, 72
        %v2924 = vpop.permute.xlu0 %2923
        %2925 = vrot.lane.b32.xlu0 %v1539, 72
        %v2926 = vpop.permute.xlu0 %2925
        %v2927 = vsel %vm1420, %v2924, 0
        %v2929 = vsel %vm1420, %v2926, 0
        %v2932 = vsel %vm1427, %v2921, 0
        %v2935 = vsel %vm1427, %v2922, 0
        %2937 = vmatpush.msra.mxu0 0.0
        %2938 = vmatpush.msra.mxu0 0.0
        %2939 = vmatpush.msra.mxu0 0.0
        %2940 = vmatpush.msra.mxu0 0.0
        %2941 = vmatpush.msra.mxu0 0.0
        %2942 = vmatpush.msra.mxu0 0.0
        %2943 = vmatpush.msra.mxu0 0.0
        %2944 = vmatpush.msra.mxu0 0.0
        %2945 = vmatpush.msra.mxu0 0.0
        %2946 = vmatpush.msra.mxu0 0.0
        %2947 = vmatpush.msra.mxu0 0.0
        %2948 = vmatpush.msra.mxu0 0.0
        %2949 = vmatpush.msra.mxu0 0.0
        %2950 = vmatpush.msra.mxu0 0.0
        %2951 = vmatpush.msra.mxu0 %v2932
        %2952 = vmatpush.msra.mxu0 %v2919
        %2953 = vmatmul.f32.gmra.mxu0 %v2927
        %v2954 = vpop.f32.mrf.mxu0
        %v2955 = vadd.f32 0.0, %v2954
        %2956 = vmatmul.f32.gmra.mxu0 %v2929
        %v2957 = vpop.f32.mrf.mxu0
        %v2958 = vadd.f32 0.0, %v2957
        %2959 = vdwg.mxu0
        %2960 = vmatpush.msra.mxu0 0.0
        %2961 = vmatpush.msra.mxu0 0.0
        %2962 = vmatpush.msra.mxu0 0.0
        %2963 = vmatpush.msra.mxu0 0.0
        %2964 = vmatpush.msra.mxu0 0.0
        %2965 = vmatpush.msra.mxu0 0.0
        %2966 = vmatpush.msra.mxu0 0.0
        %2967 = vmatpush.msra.mxu0 0.0
        %2968 = vmatpush.msra.mxu0 0.0
        %2969 = vmatpush.msra.mxu0 0.0
        %2970 = vmatpush.msra.mxu0 0.0
        %2971 = vmatpush.msra.mxu0 0.0
        %2972 = vmatpush.msra.mxu0 0.0
        %2973 = vmatpush.msra.mxu0 0.0
        %2974 = vmatpush.msra.mxu0 %v2935
        %2975 = vmatpush.msra.mxu0 %v2920
        %2976 = vmatmul.f32.gmra.mxu0 %v2927
        %v2977 = vpop.f32.mrf.mxu0
        %v2978 = vadd.f32 0.0, %v2977
        %2979 = vmatmul.f32.gmra.mxu0 %v2929
        %v2980 = vpop.f32.mrf.mxu0
        %v2981 = vadd.f32 0.0, %v2980
        %2982 = vdwg.mxu0
        %v2983 = vadd.f32 %v2914, %v2955
        %v2984 = vadd.f32 %v2915, %v2978
        %v2985 = vadd.f32 %v2916, %v2958
        %v2986 = vadd.f32 %v2917, %v2981
        %s2987 = scalar_lea.vmem [#allocation6], 736
        %v2988 = vld [vmem:[%s2987] sm:$0xff]
        %v2989 = vld [vmem:[%s2987 + $0x8] sm:$0xff]
        %v2990 = vld [vmem:[%s2987 + $0x10] sm:$0x3f]
        %v2991 = vld [vmem:[%s2987 + $0x18] sm:$0x3f]
        %2992 = vrot.lane.b32.xlu0 %v1607, 72
        %v2993 = vpop.permute.xlu0 %2992
        %2994 = vrot.lane.b32.xlu0 %v1608, 72
        %v2995 = vpop.permute.xlu0 %2994
        %v2996 = vsel %vm1420, %v2993, 0
        %v2998 = vsel %vm1420, %v2995, 0
        %v3001 = vsel %vm1427, %v2990, 0
        %v3004 = vsel %vm1427, %v2991, 0
        %3006 = vmatpush.msra.mxu0 0.0
        %3007 = vmatpush.msra.mxu0 0.0
        %3008 = vmatpush.msra.mxu0 0.0
        %3009 = vmatpush.msra.mxu0 0.0
        %3010 = vmatpush.msra.mxu0 0.0
        %3011 = vmatpush.msra.mxu0 0.0
        %3012 = vmatpush.msra.mxu0 0.0
        %3013 = vmatpush.msra.mxu0 0.0
        %3014 = vmatpush.msra.mxu0 0.0
        %3015 = vmatpush.msra.mxu0 0.0
        %3016 = vmatpush.msra.mxu0 0.0
        %3017 = vmatpush.msra.mxu0 0.0
        %3018 = vmatpush.msra.mxu0 0.0
        %3019 = vmatpush.msra.mxu0 0.0
        %3020 = vmatpush.msra.mxu0 %v3001
        %3021 = vmatpush.msra.mxu0 %v2988
        %3022 = vmatmul.f32.gmra.mxu0 %v2996
        %v3023 = vpop.f32.mrf.mxu0
        %v3024 = vadd.f32 0.0, %v3023
        %3025 = vmatmul.f32.gmra.mxu0 %v2998
        %v3026 = vpop.f32.mrf.mxu0
        %v3027 = vadd.f32 0.0, %v3026
        %3028 = vdwg.mxu0
        %3029 = vmatpush.msra.mxu0 0.0
        %3030 = vmatpush.msra.mxu0 0.0
        %3031 = vmatpush.msra.mxu0 0.0
        %3032 = vmatpush.msra.mxu0 0.0
        %3033 = vmatpush.msra.mxu0 0.0
        %3034 = vmatpush.msra.mxu0 0.0
        %3035 = vmatpush.msra.mxu0 0.0
        %3036 = vmatpush.msra.mxu0 0.0
        %3037 = vmatpush.msra.mxu0 0.0
        %3038 = vmatpush.msra.mxu0 0.0
        %3039 = vmatpush.msra.mxu0 0.0
        %3040 = vmatpush.msra.mxu0 0.0
        %3041 = vmatpush.msra.mxu0 0.0
        %3042 = vmatpush.msra.mxu0 0.0
        %3043 = vmatpush.msra.mxu0 %v3004
        %3044 = vmatpush.msra.mxu0 %v2989
        %3045 = vmatmul.f32.gmra.mxu0 %v2996
        %v3046 = vpop.f32.mrf.mxu0
        %v3047 = vadd.f32 0.0, %v3046
        %3048 = vmatmul.f32.gmra.mxu0 %v2998
        %v3049 = vpop.f32.mrf.mxu0
        %v3050 = vadd.f32 0.0, %v3049
        %3051 = vdwg.mxu0
        %v3052 = vadd.f32 %v2983, %v3024
        %v3053 = vadd.f32 %v2984, %v3047
        %v3054 = vadd.f32 %v2985, %v3027
        %v3055 = vadd.f32 %v2986, %v3050
        %s3056 = scalar_lea.vmem [#allocation6], 768
        %v3057 = vld [vmem:[%s3056] sm:$0xff]
        %v3058 = vld [vmem:[%s3056 + $0x8] sm:$0xff]
        %v3059 = vld [vmem:[%s3056 + $0x10] sm:$0x3f]
        %v3060 = vld [vmem:[%s3056 + $0x18] sm:$0x3f]
        %3061 = vrot.lane.b32.xlu0 %v1676, 72
        %v3062 = vpop.permute.xlu0 %3061
        %3063 = vrot.lane.b32.xlu0 %v1677, 72
        %v3064 = vpop.permute.xlu0 %3063
        %v3065 = vsel %vm1420, %v3062, 0
        %v3067 = vsel %vm1420, %v3064, 0
        %v3070 = vsel %vm1427, %v3059, 0
        %v3073 = vsel %vm1427, %v3060, 0
        %3075 = vmatpush.msra.mxu0 0.0
        %3076 = vmatpush.msra.mxu0 0.0
        %3077 = vmatpush.msra.mxu0 0.0
        %3078 = vmatpush.msra.mxu0 0.0
        %3079 = vmatpush.msra.mxu0 0.0
        %3080 = vmatpush.msra.mxu0 0.0
        %3081 = vmatpush.msra.mxu0 0.0
        %3082 = vmatpush.msra.mxu0 0.0
        %3083 = vmatpush.msra.mxu0 0.0
        %3084 = vmatpush.msra.mxu0 0.0
        %3085 = vmatpush.msra.mxu0 0.0
        %3086 = vmatpush.msra.mxu0 0.0
        %3087 = vmatpush.msra.mxu0 0.0
        %3088 = vmatpush.msra.mxu0 0.0
        %3089 = vmatpush.msra.mxu0 %v3070
        %3090 = vmatpush.msra.mxu0 %v3057
        %3091 = vmatmul.f32.gmra.mxu0 %v3065
        %v3092 = vpop.f32.mrf.mxu0
        %v3093 = vadd.f32 0.0, %v3092
        %3094 = vmatmul.f32.gmra.mxu0 %v3067
        %v3095 = vpop.f32.mrf.mxu0
        %v3096 = vadd.f32 0.0, %v3095
        %3097 = vdwg.mxu0
        %3098 = vmatpush.msra.mxu0 0.0
        %3099 = vmatpush.msra.mxu0 0.0
        %3100 = vmatpush.msra.mxu0 0.0
        %3101 = vmatpush.msra.mxu0 0.0
        %3102 = vmatpush.msra.mxu0 0.0
        %3103 = vmatpush.msra.mxu0 0.0
        %3104 = vmatpush.msra.mxu0 0.0
        %3105 = vmatpush.msra.mxu0 0.0
        %3106 = vmatpush.msra.mxu0 0.0
        %3107 = vmatpush.msra.mxu0 0.0
        %3108 = vmatpush.msra.mxu0 0.0
        %3109 = vmatpush.msra.mxu0 0.0
        %3110 = vmatpush.msra.mxu0 0.0
        %3111 = vmatpush.msra.mxu0 0.0
        %3112 = vmatpush.msra.mxu0 %v3073
        %3113 = vmatpush.msra.mxu0 %v3058
        %3114 = vmatmul.f32.gmra.mxu0 %v3065
        %v3115 = vpop.f32.mrf.mxu0
        %v3116 = vadd.f32 0.0, %v3115
        %3117 = vmatmul.f32.gmra.mxu0 %v3067
        %v3118 = vpop.f32.mrf.mxu0
        %v3119 = vadd.f32 0.0, %v3118
        %3120 = vdwg.mxu0
        %v3121 = vadd.f32 %v3052, %v3093
        %v3122 = vadd.f32 %v3053, %v3116
        %v3123 = vadd.f32 %v3054, %v3096
        %v3124 = vadd.f32 %v3055, %v3119
        %s3125 = scalar_lea.vmem [#allocation6], 800
        %v3126 = vld [vmem:[%s3125] sm:$0xff]
        %v3127 = vld [vmem:[%s3125 + $0x8] sm:$0xff]
        %v3128 = vld [vmem:[%s3125 + $0x10] sm:$0x3f]
        %v3129 = vld [vmem:[%s3125 + $0x18] sm:$0x3f]
        %3130 = vrot.lane.b32.xlu0 %v1407, 58
        %v3131 = vpop.permute.xlu0 %3130
        %3132 = vrot.lane.b32.xlu0 %v1408, 58
        %v3133 = vpop.permute.xlu0 %3132
        %v3134 = vsel %vm1420, %v3131, 0
        %v3136 = vsel %vm1420, %v3133, 0
        %v3139 = vsel %vm1427, %v3128, 0
        %v3142 = vsel %vm1427, %v3129, 0
        %3144 = vmatpush.msra.mxu0 0.0
        %3145 = vmatpush.msra.mxu0 0.0
        %3146 = vmatpush.msra.mxu0 0.0
        %3147 = vmatpush.msra.mxu0 0.0
        %3148 = vmatpush.msra.mxu0 0.0
        %3149 = vmatpush.msra.mxu0 0.0
        %3150 = vmatpush.msra.mxu0 0.0
        %3151 = vmatpush.msra.mxu0 0.0
        %3152 = vmatpush.msra.mxu0 0.0
        %3153 = vmatpush.msra.mxu0 0.0
        %3154 = vmatpush.msra.mxu0 0.0
        %3155 = vmatpush.msra.mxu0 0.0
        %3156 = vmatpush.msra.mxu0 0.0
        %3157 = vmatpush.msra.mxu0 0.0
        %3158 = vmatpush.msra.mxu0 %v3139
        %3159 = vmatpush.msra.mxu0 %v3126
        %3160 = vmatmul.f32.gmra.mxu0 %v3134
        %v3161 = vpop.f32.mrf.mxu0
        %v3162 = vadd.f32 0.0, %v3161
        %3163 = vmatmul.f32.gmra.mxu0 %v3136
        %v3164 = vpop.f32.mrf.mxu0
        %v3165 = vadd.f32 0.0, %v3164
        %3166 = vdwg.mxu0
        %3167 = vmatpush.msra.mxu0 0.0
        %3168 = vmatpush.msra.mxu0 0.0
        %3169 = vmatpush.msra.mxu0 0.0
        %3170 = vmatpush.msra.mxu0 0.0
        %3171 = vmatpush.msra.mxu0 0.0
        %3172 = vmatpush.msra.mxu0 0.0
        %3173 = vmatpush.msra.mxu0 0.0
        %3174 = vmatpush.msra.mxu0 0.0
        %3175 = vmatpush.msra.mxu0 0.0
        %3176 = vmatpush.msra.mxu0 0.0
        %3177 = vmatpush.msra.mxu0 0.0
        %3178 = vmatpush.msra.mxu0 0.0
        %3179 = vmatpush.msra.mxu0 0.0
        %3180 = vmatpush.msra.mxu0 0.0
        %3181 = vmatpush.msra.mxu0 %v3142
        %3182 = vmatpush.msra.mxu0 %v3127
        %3183 = vmatmul.f32.gmra.mxu0 %v3134
        %v3184 = vpop.f32.mrf.mxu0
        %v3185 = vadd.f32 0.0, %v3184
        %3186 = vmatmul.f32.gmra.mxu0 %v3136
        %v3187 = vpop.f32.mrf.mxu0
        %v3188 = vadd.f32 0.0, %v3187
        %3189 = vdwg.mxu0
        %v3190 = vadd.f32 %v3121, %v3162
        %v3191 = vadd.f32 %v3122, %v3185
        %v3192 = vadd.f32 %v3123, %v3165
        %v3193 = vadd.f32 %v3124, %v3188
        %s3194 = scalar_lea.vmem [#allocation6], 832
        %v3195 = vld [vmem:[%s3194] sm:$0xff]
        %v3196 = vld [vmem:[%s3194 + $0x8] sm:$0xff]
        %v3197 = vld [vmem:[%s3194 + $0x10] sm:$0x3f]
        %v3198 = vld [vmem:[%s3194 + $0x18] sm:$0x3f]
        %3199 = vrot.lane.b32.xlu0 %v1413, 58
        %v3200 = vpop.permute.xlu0 %3199
        %3201 = vrot.lane.b32.xlu0 %v1414, 58
        %v3202 = vpop.permute.xlu0 %3201
        %v3203 = vsel %vm1420, %v3200, 0
        %v3205 = vsel %vm1420, %v3202, 0
        %v3208 = vsel %vm1427, %v3197, 0
        %v3211 = vsel %vm1427, %v3198, 0
        %3213 = vmatpush.msra.mxu0 0.0
        %3214 = vmatpush.msra.mxu0 0.0
        %3215 = vmatpush.msra.mxu0 0.0
        %3216 = vmatpush.msra.mxu0 0.0
        %3217 = vmatpush.msra.mxu0 0.0
        %3218 = vmatpush.msra.mxu0 0.0
        %3219 = vmatpush.msra.mxu0 0.0
        %3220 = vmatpush.msra.mxu0 0.0
        %3221 = vmatpush.msra.mxu0 0.0
        %3222 = vmatpush.msra.mxu0 0.0
        %3223 = vmatpush.msra.mxu0 0.0
        %3224 = vmatpush.msra.mxu0 0.0
        %3225 = vmatpush.msra.mxu0 0.0
        %3226 = vmatpush.msra.mxu0 0.0
        %3227 = vmatpush.msra.mxu0 %v3208
        %3228 = vmatpush.msra.mxu0 %v3195
        %3229 = vmatmul.f32.gmra.mxu0 %v3203
        %v3230 = vpop.f32.mrf.mxu0
        %v3231 = vadd.f32 0.0, %v3230
        %3232 = vmatmul.f32.gmra.mxu0 %v3205
        %v3233 = vpop.f32.mrf.mxu0
        %v3234 = vadd.f32 0.0, %v3233
        %3235 = vdwg.mxu0
        %3236 = vmatpush.msra.mxu0 0.0
        %3237 = vmatpush.msra.mxu0 0.0
        %3238 = vmatpush.msra.mxu0 0.0
        %3239 = vmatpush.msra.mxu0 0.0
        %3240 = vmatpush.msra.mxu0 0.0
        %3241 = vmatpush.msra.mxu0 0.0
        %3242 = vmatpush.msra.mxu0 0.0
        %3243 = vmatpush.msra.mxu0 0.0
        %3244 = vmatpush.msra.mxu0 0.0
        %3245 = vmatpush.msra.mxu0 0.0
        %3246 = vmatpush.msra.mxu0 0.0
        %3247 = vmatpush.msra.mxu0 0.0
        %3248 = vmatpush.msra.mxu0 0.0
        %3249 = vmatpush.msra.mxu0 0.0
        %3250 = vmatpush.msra.mxu0 %v3211
        %3251 = vmatpush.msra.mxu0 %v3196
        %3252 = vmatmul.f32.gmra.mxu0 %v3203
        %v3253 = vpop.f32.mrf.mxu0
        %v3254 = vadd.f32 0.0, %v3253
        %3255 = vmatmul.f32.gmra.mxu0 %v3205
        %v3256 = vpop.f32.mrf.mxu0
        %v3257 = vadd.f32 0.0, %v3256
        %3258 = vdwg.mxu0
        %v3259 = vadd.f32 %v3190, %v3231
        %v3260 = vadd.f32 %v3191, %v3254
        %v3261 = vadd.f32 %v3192, %v3234
        %v3262 = vadd.f32 %v3193, %v3257
        %s3263 = scalar_lea.vmem [#allocation6], 864
        %v3264 = vld [vmem:[%s3263] sm:$0xff]
        %v3265 = vld [vmem:[%s3263 + $0x8] sm:$0xff]
        %v3266 = vld [vmem:[%s3263 + $0x10] sm:$0x3f]
        %v3267 = vld [vmem:[%s3263 + $0x18] sm:$0x3f]
        %3268 = vrot.lane.b32.xlu0 %v1538, 58
        %v3269 = vpop.permute.xlu0 %3268
        %3270 = vrot.lane.b32.xlu0 %v1539, 58
        %v3271 = vpop.permute.xlu0 %3270
        %v3272 = vsel %vm1420, %v3269, 0
        %v3274 = vsel %vm1420, %v3271, 0
        %v3277 = vsel %vm1427, %v3266, 0
        %v3280 = vsel %vm1427, %v3267, 0
        %3282 = vmatpush.msra.mxu0 0.0
        %3283 = vmatpush.msra.mxu0 0.0
        %3284 = vmatpush.msra.mxu0 0.0
        %3285 = vmatpush.msra.mxu0 0.0
        %3286 = vmatpush.msra.mxu0 0.0
        %3287 = vmatpush.msra.mxu0 0.0
        %3288 = vmatpush.msra.mxu0 0.0
        %3289 = vmatpush.msra.mxu0 0.0
        %3290 = vmatpush.msra.mxu0 0.0
        %3291 = vmatpush.msra.mxu0 0.0
        %3292 = vmatpush.msra.mxu0 0.0
        %3293 = vmatpush.msra.mxu0 0.0
        %3294 = vmatpush.msra.mxu0 0.0
        %3295 = vmatpush.msra.mxu0 0.0
        %3296 = vmatpush.msra.mxu0 %v3277
        %3297 = vmatpush.msra.mxu0 %v3264
        %3298 = vmatmul.f32.gmra.mxu0 %v3272
        %v3299 = vpop.f32.mrf.mxu0
        %v3300 = vadd.f32 0.0, %v3299
        %3301 = vmatmul.f32.gmra.mxu0 %v3274
        %v3302 = vpop.f32.mrf.mxu0
        %v3303 = vadd.f32 0.0, %v3302
        %3304 = vdwg.mxu0
        %3305 = vmatpush.msra.mxu0 0.0
        %3306 = vmatpush.msra.mxu0 0.0
        %3307 = vmatpush.msra.mxu0 0.0
        %3308 = vmatpush.msra.mxu0 0.0
        %3309 = vmatpush.msra.mxu0 0.0
        %3310 = vmatpush.msra.mxu0 0.0
        %3311 = vmatpush.msra.mxu0 0.0
        %3312 = vmatpush.msra.mxu0 0.0
        %3313 = vmatpush.msra.mxu0 0.0
        %3314 = vmatpush.msra.mxu0 0.0
        %3315 = vmatpush.msra.mxu0 0.0
        %3316 = vmatpush.msra.mxu0 0.0
        %3317 = vmatpush.msra.mxu0 0.0
        %3318 = vmatpush.msra.mxu0 0.0
        %3319 = vmatpush.msra.mxu0 %v3280
        %3320 = vmatpush.msra.mxu0 %v3265
        %3321 = vmatmul.f32.gmra.mxu0 %v3272
        %v3322 = vpop.f32.mrf.mxu0
        %v3323 = vadd.f32 0.0, %v3322
        %3324 = vmatmul.f32.gmra.mxu0 %v3274
        %v3325 = vpop.f32.mrf.mxu0
        %v3326 = vadd.f32 0.0, %v3325
        %3327 = vdwg.mxu0
        %v3328 = vadd.f32 %v3259, %v3300
        %v3329 = vadd.f32 %v3260, %v3323
        %v3330 = vadd.f32 %v3261, %v3303
        %v3331 = vadd.f32 %v3262, %v3326
        %s3332 = scalar_lea.vmem [#allocation6], 896
        %v3333 = vld [vmem:[%s3332] sm:$0xff]
        %v3334 = vld [vmem:[%s3332 + $0x8] sm:$0xff]
        %v3335 = vld [vmem:[%s3332 + $0x10] sm:$0x3f]
        %v3336 = vld [vmem:[%s3332 + $0x18] sm:$0x3f]
        %3337 = vrot.lane.b32.xlu0 %v1607, 58
        %v3338 = vpop.permute.xlu0 %3337
        %3339 = vrot.lane.b32.xlu0 %v1608, 58
        %v3340 = vpop.permute.xlu0 %3339
        %v3341 = vsel %vm1420, %v3338, 0
        %v3343 = vsel %vm1420, %v3340, 0
        %v3346 = vsel %vm1427, %v3335, 0
        %v3349 = vsel %vm1427, %v3336, 0
        %3351 = vmatpush.msra.mxu0 0.0
        %3352 = vmatpush.msra.mxu0 0.0
        %3353 = vmatpush.msra.mxu0 0.0
        %3354 = vmatpush.msra.mxu0 0.0
        %3355 = vmatpush.msra.mxu0 0.0
        %3356 = vmatpush.msra.mxu0 0.0
        %3357 = vmatpush.msra.mxu0 0.0
        %3358 = vmatpush.msra.mxu0 0.0
        %3359 = vmatpush.msra.mxu0 0.0
        %3360 = vmatpush.msra.mxu0 0.0
        %3361 = vmatpush.msra.mxu0 0.0
        %3362 = vmatpush.msra.mxu0 0.0
        %3363 = vmatpush.msra.mxu0 0.0
        %3364 = vmatpush.msra.mxu0 0.0
        %3365 = vmatpush.msra.mxu0 %v3346
        %3366 = vmatpush.msra.mxu0 %v3333
        %3367 = vmatmul.f32.gmra.mxu0 %v3341
        %v3368 = vpop.f32.mrf.mxu0
        %v3369 = vadd.f32 0.0, %v3368
        %3370 = vmatmul.f32.gmra.mxu0 %v3343
        %v3371 = vpop.f32.mrf.mxu0
        %v3372 = vadd.f32 0.0, %v3371
        %3373 = vdwg.mxu0
        %3374 = vmatpush.msra.mxu0 0.0
        %3375 = vmatpush.msra.mxu0 0.0
        %3376 = vmatpush.msra.mxu0 0.0
        %3377 = vmatpush.msra.mxu0 0.0
        %3378 = vmatpush.msra.mxu0 0.0
        %3379 = vmatpush.msra.mxu0 0.0
        %3380 = vmatpush.msra.mxu0 0.0
        %3381 = vmatpush.msra.mxu0 0.0
        %3382 = vmatpush.msra.mxu0 0.0
        %3383 = vmatpush.msra.mxu0 0.0
        %3384 = vmatpush.msra.mxu0 0.0
        %3385 = vmatpush.msra.mxu0 0.0
        %3386 = vmatpush.msra.mxu0 0.0
        %3387 = vmatpush.msra.mxu0 0.0
        %3388 = vmatpush.msra.mxu0 %v3349
        %3389 = vmatpush.msra.mxu0 %v3334
        %3390 = vmatmul.f32.gmra.mxu0 %v3341
        %v3391 = vpop.f32.mrf.mxu0
        %v3392 = vadd.f32 0.0, %v3391
        %3393 = vmatmul.f32.gmra.mxu0 %v3343
        %v3394 = vpop.f32.mrf.mxu0
        %v3395 = vadd.f32 0.0, %v3394
        %3396 = vdwg.mxu0
        %v3397 = vadd.f32 %v3328, %v3369
        %v3398 = vadd.f32 %v3329, %v3392
        %v3399 = vadd.f32 %v3330, %v3372
        %v3400 = vadd.f32 %v3331, %v3395
        %s3401 = scalar_lea.vmem [#allocation6], 928
        %v3402 = vld [vmem:[%s3401] sm:$0xff]
        %v3403 = vld [vmem:[%s3401 + $0x8] sm:$0xff]
        %v3404 = vld [vmem:[%s3401 + $0x10] sm:$0x3f]
        %v3405 = vld [vmem:[%s3401 + $0x18] sm:$0x3f]
        %3406 = vrot.lane.b32.xlu0 %v1676, 58
        %v3407 = vpop.permute.xlu0 %3406
        %3408 = vrot.lane.b32.xlu0 %v1677, 58
        %v3409 = vpop.permute.xlu0 %3408
        %v3410 = vsel %vm1420, %v3407, 0
        %v3412 = vsel %vm1420, %v3409, 0
        %v3415 = vsel %vm1427, %v3404, 0
        %v3418 = vsel %vm1427, %v3405, 0
        %3420 = vmatpush.msra.mxu0 0.0
        %3421 = vmatpush.msra.mxu0 0.0
        %3422 = vmatpush.msra.mxu0 0.0
        %3423 = vmatpush.msra.mxu0 0.0
        %3424 = vmatpush.msra.mxu0 0.0
        %3425 = vmatpush.msra.mxu0 0.0
        %3426 = vmatpush.msra.mxu0 0.0
        %3427 = vmatpush.msra.mxu0 0.0
        %3428 = vmatpush.msra.mxu0 0.0
        %3429 = vmatpush.msra.mxu0 0.0
        %3430 = vmatpush.msra.mxu0 0.0
        %3431 = vmatpush.msra.mxu0 0.0
        %3432 = vmatpush.msra.mxu0 0.0
        %3433 = vmatpush.msra.mxu0 0.0
        %3434 = vmatpush.msra.mxu0 %v3415
        %3435 = vmatpush.msra.mxu0 %v3402
        %3436 = vmatmul.f32.gmra.mxu0 %v3410
        %v3437 = vpop.f32.mrf.mxu0
        %v3438 = vadd.f32 0.0, %v3437
        %3439 = vmatmul.f32.gmra.mxu0 %v3412
        %v3440 = vpop.f32.mrf.mxu0
        %v3441 = vadd.f32 0.0, %v3440
        %3442 = vdwg.mxu0
        %3443 = vmatpush.msra.mxu0 0.0
        %3444 = vmatpush.msra.mxu0 0.0
        %3445 = vmatpush.msra.mxu0 0.0
        %3446 = vmatpush.msra.mxu0 0.0
        %3447 = vmatpush.msra.mxu0 0.0
        %3448 = vmatpush.msra.mxu0 0.0
        %3449 = vmatpush.msra.mxu0 0.0
        %3450 = vmatpush.msra.mxu0 0.0
        %3451 = vmatpush.msra.mxu0 0.0
        %3452 = vmatpush.msra.mxu0 0.0
        %3453 = vmatpush.msra.mxu0 0.0
        %3454 = vmatpush.msra.mxu0 0.0
        %3455 = vmatpush.msra.mxu0 0.0
        %3456 = vmatpush.msra.mxu0 0.0
        %3457 = vmatpush.msra.mxu0 %v3418
        %3458 = vmatpush.msra.mxu0 %v3403
        %3459 = vmatmul.f32.gmra.mxu0 %v3410
        %v3460 = vpop.f32.mrf.mxu0
        %v3461 = vadd.f32 0.0, %v3460
        %3462 = vmatmul.f32.gmra.mxu0 %v3412
        %v3463 = vpop.f32.mrf.mxu0
        %v3464 = vadd.f32 0.0, %v3463
        %3465 = vdwg.mxu0
        %v3466 = vadd.f32 %v3397, %v3438
        %v3467 = vadd.f32 %v3398, %v3461
        %v3468 = vadd.f32 %v3399, %v3441
        %v3469 = vadd.f32 %v3400, %v3464
        %v3470 = vld [vmem:[%s6] sm:$0x3]
        %v3472 = vperm.slane %v3470, 0
        %v3473 = vperm.slane %v3470, 1
        %v3476 = vadd.f32 %v3466, %v3472
        %v3477 = vadd.f32 %v3467, %v3473
        %v3478 = vadd.f32 %v3468, %v3472
        %v3479 = vadd.f32 %v3469, %v3473
        %v3480 = vsub.f32 0.0, %v3476
        %v3481 = vsub.f32 0.0, %v3477
        %v3482 = vsub.f32 0.0, %v3478
        %v3483 = vsub.f32 0.0, %v3479
        %v3484 = vmul.f32 %v3480, 1.442695
        %v3485 = vpow.pop %v3484
        %v3486 = vmul.f32 %v3481, 1.442695
        %v3487 = vpow.pop %v3486
        %v3488 = vmul.f32 %v3482, 1.442695
        %v3489 = vpow.pop %v3488
        %v3490 = vmul.f32 %v3483, 1.442695
        %v3491 = vpow.pop %v3490
        %v3492 = vadd.f32 %v3485, 1.0
        %v3493 = vadd.f32 %v3487, 1.0
        %v3494 = vadd.f32 %v3489, 1.0
        %v3495 = vadd.f32 %v3491, 1.0
        %v3496 = vrcp.pop %v3492
        %v3497 = vmul.f32 %v3492, %v3496
        %v3498 = vsub.f32 1.0, %v3497
        %v3499 = vmul.f32 %v3496, %v3498
        %v3500 = vadd.f32 %v3496, %v3499
        %vm3501 = vweird.f32 %v3492
        %vm3502 = vweird.f32 %v3496
        %vm3503 = vmor %vm3501, %vm3502
        %v3504 = vsel %vm3503, %v3496, %v3500
        %v3505 = vand.u32 2147483647, %v3492
        %vm3506 = vcmp.eq.f32.partialorder %v3505, 8.507059e+37
        %v3507 = vand.u32 %v3492, 2147483648
        %v3508 = vor.u32 1.1754944e-38, %v3507
        %v3509 = vsel %vm3506, %v3508, %v3504
        %v3510 = vmul.f32 1.0, %v3509
        %v3511 = vrcp.pop %v3493
        %v3512 = vmul.f32 %v3493, %v3511
        %v3513 = vsub.f32 1.0, %v3512
        %v3514 = vmul.f32 %v3511, %v3513
        %v3515 = vadd.f32 %v3511, %v3514
        %vm3516 = vweird.f32 %v3493
        %vm3517 = vweird.f32 %v3511
        %vm3518 = vmor %vm3516, %vm3517
        %v3519 = vsel %vm3518, %v3511, %v3515
        %v3520 = vand.u32 2147483647, %v3493
        %vm3521 = vcmp.eq.f32.partialorder %v3520, 8.507059e+37
        %v3522 = vand.u32 %v3493, 2147483648
        %v3523 = vor.u32 1.1754944e-38, %v3522
        %v3524 = vsel %vm3521, %v3523, %v3519
        %v3525 = vmul.f32 1.0, %v3524
        %v3526 = vrcp.pop %v3494
        %v3527 = vmul.f32 %v3494, %v3526
        %v3528 = vsub.f32 1.0, %v3527
        %v3529 = vmul.f32 %v3526, %v3528
        %v3530 = vadd.f32 %v3526, %v3529
        %vm3531 = vweird.f32 %v3494
        %vm3532 = vweird.f32 %v3526
        %vm3533 = vmor %vm3531, %vm3532
        %v3534 = vsel %vm3533, %v3526, %v3530
        %v3535 = vand.u32 2147483647, %v3494
        %vm3536 = vcmp.eq.f32.partialorder %v3535, 8.507059e+37
        %v3537 = vand.u32 %v3494, 2147483648
        %v3538 = vor.u32 1.1754944e-38, %v3537
        %v3539 = vsel %vm3536, %v3538, %v3534
        %v3540 = vmul.f32 1.0, %v3539
        %v3541 = vrcp.pop %v3495
        %v3542 = vmul.f32 %v3495, %v3541
        %v3543 = vsub.f32 1.0, %v3542
        %v3544 = vmul.f32 %v3541, %v3543
        %v3545 = vadd.f32 %v3541, %v3544
        %vm3546 = vweird.f32 %v3495
        %vm3547 = vweird.f32 %v3541
        %vm3548 = vmor %vm3546, %vm3547
        %v3549 = vsel %vm3548, %v3541, %v3545
        %v3550 = vand.u32 2147483647, %v3495
        %vm3551 = vcmp.eq.f32.partialorder %v3550, 8.507059e+37
        %v3552 = vand.u32 %v3495, 2147483648
        %v3553 = vor.u32 1.1754944e-38, %v3552
        %v3554 = vsel %vm3551, %v3553, %v3549
        %v3555 = vmul.f32 1.0, %v3554
        %v3556 = vld [vmem:[%s7] sm:$0x1f]
        %vm3557 = vcmask 80896
        %v3559 = vsel %vm3557, %v3556, 0
        %vm3561 = vcmask 1041408
        %v3563 = vsel %vm3561, %v3540, 0
        %v3566 = vsel %vm3561, %v3555, 0
        %3568 = vmatpush.msra.mxu0 0.0
        %3569 = vmatpush.msra.mxu0 0.0
        %3570 = vmatpush.msra.mxu0 0.0
        %3571 = vmatpush.msra.mxu0 0.0
        %3572 = vmatpush.msra.mxu0 0.0
        %3573 = vmatpush.msra.mxu0 0.0
        %3574 = vmatpush.msra.mxu0 0.0
        %3575 = vmatpush.msra.mxu0 0.0
        %3576 = vmatpush.msra.mxu0 0.0
        %3577 = vmatpush.msra.mxu0 0.0
        %3578 = vmatpush.msra.mxu0 0.0
        %3579 = vmatpush.msra.mxu0 0.0
        %3580 = vmatpush.msra.mxu0 0.0
        %3581 = vmatpush.msra.mxu0 0.0
        %3582 = vmatpush.msra.mxu0 %v3563
        %3583 = vmatpush.msra.mxu0 %v3510
        %3584 = vmatmul.f32.gmra.mxu0 %v3559
        %v3585 = vpop.f32.mrf.mxu0
        %v3586 = vadd.f32 0.0, %v3585
        %3587 = vdwg.mxu0
        %3588 = vmatpush.msra.mxu0 0.0
        %3589 = vmatpush.msra.mxu0 0.0
        %3590 = vmatpush.msra.mxu0 0.0
        %3591 = vmatpush.msra.mxu0 0.0
        %3592 = vmatpush.msra.mxu0 0.0
        %3593 = vmatpush.msra.mxu0 0.0
        %3594 = vmatpush.msra.mxu0 0.0
        %3595 = vmatpush.msra.mxu0 0.0
        %3596 = vmatpush.msra.mxu0 0.0
        %3597 = vmatpush.msra.mxu0 0.0
        %3598 = vmatpush.msra.mxu0 0.0
        %3599 = vmatpush.msra.mxu0 0.0
        %3600 = vmatpush.msra.mxu0 0.0
        %3601 = vmatpush.msra.mxu0 0.0
        %3602 = vmatpush.msra.mxu0 %v3566
        %3603 = vmatpush.msra.mxu0 %v3525
        %3604 = vmatmul.f32.gmra.mxu0 %v3559
        %v3605 = vpop.f32.mrf.mxu0
        %v3606 = vadd.f32 0.0, %v3605
        %3607 = vdwg.mxu0
        %v3608 = vld [vmem:[#allocation8] sm:$0xff]
        %v3609 = vld [vmem:[#allocation8 + $0x8] sm:$0xff]
        %v3610 = vld [vmem:[#allocation8 + $0x10] sm:$0xff]
        %v3611 = vld [vmem:[#allocation8 + $0x18] sm:$0xff]
        %v3612 = vld [vmem:[#allocation8 + $0x20] sm:$0xff]
        %v3613 = vld [vmem:[#allocation8 + $0x28] sm:$0xff]
        %v3614 = vld [vmem:[#allocation8 + $0x30] sm:$0xff]
        %v3615 = vld [vmem:[#allocation8 + $0x38] sm:$0xff]
        %v3616 = vld [vmem:[#allocation8 + $0x40] sm:$0xff]
        %v3617 = vld [vmem:[#allocation8 + $0x48] sm:$0xff]
        %v3618 = vld [vmem:[#allocation8 + $0x50] sm:$0xff]
        %v3619 = vld [vmem:[#allocation8 + $0x58] sm:$0xff]
        %v3620 = vld [vmem:[#allocation8 + $0x60] sm:$0xff]
        %v3621 = vld [vmem:[#allocation8 + $0x68] sm:$0xff]
        %v3622 = vld [vmem:[#allocation8 + $0x70] sm:$0xff]
        %v3623 = vld [vmem:[#allocation8 + $0x78] sm:$0xff]
        %v3624 = vld [vmem:[#allocation8 + $0x80] sm:$0xff]
        %v3625 = vld [vmem:[#allocation8 + $0x88] sm:$0xff]
        %v3626 = vld [vmem:[#allocation8 + $0x90] sm:$0xff]
        %v3627 = vld [vmem:[#allocation8 + $0x98] sm:$0xff]
        %v3629 = vsel %vm687, %v3606, 0
        %3631 = vmatpush.msra.mxu0 %v3623
        %3632 = vmatpush.msra.mxu0 %v3622
        %3633 = vmatpush.msra.mxu0 %v3621
        %3634 = vmatpush.msra.mxu0 %v3620
        %3635 = vmatpush.msra.mxu0 %v3619
        %3636 = vmatpush.msra.mxu0 %v3618
        %3637 = vmatpush.msra.mxu0 %v3617
        %3638 = vmatpush.msra.mxu0 %v3616
        %3639 = vmatpush.msra.mxu0 %v3615
        %3640 = vmatpush.msra.mxu0 %v3614
        %3641 = vmatpush.msra.mxu0 %v3613
        %3642 = vmatpush.msra.mxu0 %v3612
        %3643 = vmatpush.msra.mxu0 %v3611
        %3644 = vmatpush.msra.mxu0 %v3610
        %3645 = vmatpush.msra.mxu0 %v3609
        %3646 = vmatpush.msra.mxu0 %v3608
        %3647 = vmatmul.f32.gmra.mxu0 %v3586
        %v3648 = vpop.f32.mrf.mxu0
        %v3649 = vadd.f32 0.0, %v3648
        %3650 = vdwg.mxu0
        %3651 = vmatpush.msra.mxu0 0.0
        %3652 = vmatpush.msra.mxu0 0.0
        %3653 = vmatpush.msra.mxu0 0.0
        %3654 = vmatpush.msra.mxu0 0.0
        %3655 = vmatpush.msra.mxu0 0.0
        %3656 = vmatpush.msra.mxu0 0.0
        %3657 = vmatpush.msra.mxu0 0.0
        %3658 = vmatpush.msra.mxu0 0.0
        %3659 = vmatpush.msra.mxu0 0.0
        %3660 = vmatpush.msra.mxu0 0.0
        %3661 = vmatpush.msra.mxu0 0.0
        %3662 = vmatpush.msra.mxu0 0.0
        %3663 = vmatpush.msra.mxu0 %v3627
        %3664 = vmatpush.msra.mxu0 %v3626
        %3665 = vmatpush.msra.mxu0 %v3625
        %3666 = vmatpush.msra.mxu0 %v3624
        %3667 = vmatmul.f32.gmra.mxu0 %v3629
        %v3668 = vpop.f32.mrf.mxu0
        %v3669 = vadd.f32 %v3649, %v3668
        %3670 = vdwg.mxu0
        %v3671 = vld [vmem:[#allocation9] sm:$0xff]
        %v3672 = vld [vmem:[#allocation9 + $0x8] sm:$0xff]
        %v3673 = vld [vmem:[#allocation9 + $0x10] sm:$0xff]
        %v3674 = vld [vmem:[#allocation9 + $0x18] sm:$0xff]
        %v3675 = vld [vmem:[#allocation9 + $0x20] sm:$0xff]
        %v3676 = vld [vmem:[#allocation9 + $0x28] sm:$0xff]
        %v3677 = vld [vmem:[#allocation9 + $0x30] sm:$0xff]
        %v3678 = vld [vmem:[#allocation9 + $0x38] sm:$0xff]
        %v3679 = vld [vmem:[#allocation9 + $0x40] sm:$0xff]
        %v3680 = vld [vmem:[#allocation9 + $0x48] sm:$0xff]
        %s3681 = scalar_lea.vmem [#allocation9], 80
        %v3682 = vld [vmem:[%s3681] sm:$0xff]
        %v3683 = vld [vmem:[%s3681 + $0x8] sm:$0xff]
        %v3684 = vld [vmem:[%s3681 + $0x10] sm:$0xff]
        %v3685 = vld [vmem:[%s3681 + $0x18] sm:$0xff]
        %v3686 = vld [vmem:[%s3681 + $0x20] sm:$0xff]
        %v3687 = vld [vmem:[%s3681 + $0x28] sm:$0xff]
        %v3688 = vld [vmem:[%s3681 + $0x30] sm:$0xff]
        %v3689 = vld [vmem:[%s3681 + $0x38] sm:$0xff]
        %v3690 = vld [vmem:[%s3681 + $0x40] sm:$0xff]
        %v3691 = vld [vmem:[%s3681 + $0x48] sm:$0xff]
        %v3693 = vrot.slane %v3669, 1
        %vm3694 = vcmask 654336
        %v3695 = vsel %vm3694, %v3693, 0
        %3697 = vmatpush.msra.mxu0 0.0
        %3698 = vmatpush.msra.mxu0 0.0
        %3699 = vmatpush.msra.mxu0 0.0
        %3700 = vmatpush.msra.mxu0 0.0
        %3701 = vmatpush.msra.mxu0 0.0
        %3702 = vmatpush.msra.mxu0 0.0
        %3703 = vmatpush.msra.mxu0 %v3691
        %3704 = vmatpush.msra.mxu0 %v3690
        %3705 = vmatpush.msra.mxu0 %v3689
        %3706 = vmatpush.msra.mxu0 %v3688
        %3707 = vmatpush.msra.mxu0 %v3687
        %3708 = vmatpush.msra.mxu0 %v3686
        %3709 = vmatpush.msra.mxu0 %v3685
        %3710 = vmatpush.msra.mxu0 %v3684
        %3711 = vmatpush.msra.mxu0 %v3683
        %3712 = vmatpush.msra.mxu0 %v3682
        %3713 = vmatmul.f32.gmra.mxu0 %v3695
        %v3714 = vpop.f32.mrf.mxu0
        %v3715 = vadd.f32 0.0, %v3714
        %3716 = vdwg.mxu0
        %v3717 = vsel %vm3694, %v3669, 0
        %3719 = vmatpush.msra.mxu0 0.0
        %3720 = vmatpush.msra.mxu0 0.0
        %3721 = vmatpush.msra.mxu0 0.0
        %3722 = vmatpush.msra.mxu0 0.0
        %3723 = vmatpush.msra.mxu0 0.0
        %3724 = vmatpush.msra.mxu0 0.0
        %3725 = vmatpush.msra.mxu0 %v3680
        %3726 = vmatpush.msra.mxu0 %v3679
        %3727 = vmatpush.msra.mxu0 %v3678
        %3728 = vmatpush.msra.mxu0 %v3677
        %3729 = vmatpush.msra.mxu0 %v3676
        %3730 = vmatpush.msra.mxu0 %v3675
        %3731 = vmatpush.msra.mxu0 %v3674
        %3732 = vmatpush.msra.mxu0 %v3673
        %3733 = vmatpush.msra.mxu0 %v3672
        %3734 = vmatpush.msra.mxu0 %v3671
        %3735 = vmatmul.f32.gmra.mxu0 %v3717
        %v3736 = vpop.f32.mrf.mxu0
        %v3737 = vadd.f32 %v3715, %v3736
        %3738 = vdwg.mxu0
        %s3739 = scalar_lea.vmem [#allocation9], 160
        %v3740 = vld [vmem:[%s3739] sm:$0xff]
        %v3741 = vld [vmem:[%s3739 + $0x8] sm:$0xff]
        %v3742 = vld [vmem:[%s3739 + $0x10] sm:$0xff]
        %v3743 = vld [vmem:[%s3739 + $0x18] sm:$0xff]
        %v3744 = vld [vmem:[%s3739 + $0x20] sm:$0xff]
        %v3745 = vld [vmem:[%s3739 + $0x28] sm:$0xff]
        %v3746 = vld [vmem:[%s3739 + $0x30] sm:$0xff]
        %v3747 = vld [vmem:[%s3739 + $0x38] sm:$0xff]
        %v3748 = vld [vmem:[%s3739 + $0x40] sm:$0xff]
        %v3749 = vld [vmem:[%s3739 + $0x48] sm:$0xff]
        %v3750 = vrot.slane %v3669, 2
        %v3751 = vsel %vm3694, %v3750, 0
        %3753 = vmatpush.msra.mxu0 0.0
        %3754 = vmatpush.msra.mxu0 0.0
        %3755 = vmatpush.msra.mxu0 0.0
        %3756 = vmatpush.msra.mxu0 0.0
        %3757 = vmatpush.msra.mxu0 0.0
        %3758 = vmatpush.msra.mxu0 0.0
        %3759 = vmatpush.msra.mxu0 %v3749
        %3760 = vmatpush.msra.mxu0 %v3748
        %3761 = vmatpush.msra.mxu0 %v3747
        %3762 = vmatpush.msra.mxu0 %v3746
        %3763 = vmatpush.msra.mxu0 %v3745
        %3764 = vmatpush.msra.mxu0 %v3744
        %3765 = vmatpush.msra.mxu0 %v3743
        %3766 = vmatpush.msra.mxu0 %v3742
        %3767 = vmatpush.msra.mxu0 %v3741
        %3768 = vmatpush.msra.mxu0 %v3740
        %3769 = vmatmul.f32.gmra.mxu0 %v3751
        %v3770 = vpop.f32.mrf.mxu0
        %v3771 = vadd.f32 0.0, %v3770
        %3772 = vdwg.mxu0
        %v3773 = vadd.f32 %v3737, %v3771
        %s3774 = scalar_lea.vmem [#allocation9], 240
        %v3775 = vld [vmem:[%s3774] sm:$0xff]
        %v3776 = vld [vmem:[%s3774 + $0x8] sm:$0xff]
        %v3777 = vld [vmem:[%s3774 + $0x10] sm:$0xff]
        %v3778 = vld [vmem:[%s3774 + $0x18] sm:$0xff]
        %v3779 = vld [vmem:[%s3774 + $0x20] sm:$0xff]
        %v3780 = vld [vmem:[%s3774 + $0x28] sm:$0xff]
        %v3781 = vld [vmem:[%s3774 + $0x30] sm:$0xff]
        %v3782 = vld [vmem:[%s3774 + $0x38] sm:$0xff]
        %v3783 = vld [vmem:[%s3774 + $0x40] sm:$0xff]
        %v3784 = vld [vmem:[%s3774 + $0x48] sm:$0xff]
        %v3785 = vrot.slane %v3669, 3
        %v3786 = vsel %vm3694, %v3785, 0
        %3788 = vmatpush.msra.mxu0 0.0
        %3789 = vmatpush.msra.mxu0 0.0
        %3790 = vmatpush.msra.mxu0 0.0
        %3791 = vmatpush.msra.mxu0 0.0
        %3792 = vmatpush.msra.mxu0 0.0
        %3793 = vmatpush.msra.mxu0 0.0
        %3794 = vmatpush.msra.mxu0 %v3784
        %3795 = vmatpush.msra.mxu0 %v3783
        %3796 = vmatpush.msra.mxu0 %v3782
        %3797 = vmatpush.msra.mxu0 %v3781
        %3798 = vmatpush.msra.mxu0 %v3780
        %3799 = vmatpush.msra.mxu0 %v3779
        %3800 = vmatpush.msra.mxu0 %v3778
        %3801 = vmatpush.msra.mxu0 %v3777
        %3802 = vmatpush.msra.mxu0 %v3776
        %3803 = vmatpush.msra.mxu0 %v3775
        %3804 = vmatmul.f32.gmra.mxu0 %v3786
        %v3805 = vpop.f32.mrf.mxu0
        %v3806 = vadd.f32 0.0, %v3805
        %3807 = vdwg.mxu0
        %v3808 = vadd.f32 %v3773, %v3806
        %s3809 = scalar_lea.vmem [#allocation9], 320
        %v3810 = vld [vmem:[%s3809] sm:$0xff]
        %v3811 = vld [vmem:[%s3809 + $0x8] sm:$0xff]
        %v3812 = vld [vmem:[%s3809 + $0x10] sm:$0xff]
        %v3813 = vld [vmem:[%s3809 + $0x18] sm:$0xff]
        %v3814 = vld [vmem:[%s3809 + $0x20] sm:$0xff]
        %v3815 = vld [vmem:[%s3809 + $0x28] sm:$0xff]
        %v3816 = vld [vmem:[%s3809 + $0x30] sm:$0xff]
        %v3817 = vld [vmem:[%s3809 + $0x38] sm:$0xff]
        %v3818 = vld [vmem:[%s3809 + $0x40] sm:$0xff]
        %v3819 = vld [vmem:[%s3809 + $0x48] sm:$0xff]
        %v3820 = vrot.slane %v3669, 4
        %v3821 = vsel %vm3694, %v3820, 0
        %3823 = vmatpush.msra.mxu0 0.0
        %3824 = vmatpush.msra.mxu0 0.0
        %3825 = vmatpush.msra.mxu0 0.0
        %3826 = vmatpush.msra.mxu0 0.0
        %3827 = vmatpush.msra.mxu0 0.0
        %3828 = vmatpush.msra.mxu0 0.0
        %3829 = vmatpush.msra.mxu0 %v3819
        %3830 = vmatpush.msra.mxu0 %v3818
        %3831 = vmatpush.msra.mxu0 %v3817
        %3832 = vmatpush.msra.mxu0 %v3816
        %3833 = vmatpush.msra.mxu0 %v3815
        %3834 = vmatpush.msra.mxu0 %v3814
        %3835 = vmatpush.msra.mxu0 %v3813
        %3836 = vmatpush.msra.mxu0 %v3812
        %3837 = vmatpush.msra.mxu0 %v3811
        %3838 = vmatpush.msra.mxu0 %v3810
        %3839 = vmatmul.f32.gmra.mxu0 %v3821
        %v3840 = vpop.f32.mrf.mxu0
        %v3841 = vadd.f32 0.0, %v3840
        %3842 = vdwg.mxu0
        %v3843 = vadd.f32 %v3808, %v3841
        %v3844 = vld [vmem:[%s10] sm:$0x1]
        %v3845 = vadd.f32 %v3843, %v3844
        %v3846 = vsub.f32 0.0, %v3845
        %v3847 = vmul.f32 %v3846, 1.442695
        %v3848 = vpow.pop %v3847
        %v3849 = vadd.f32 %v3848, 1.0
        %v3850 = vrcp.pop %v3849
        %v3851 = vmul.f32 %v3849, %v3850
        %v3852 = vsub.f32 1.0, %v3851
        %v3853 = vmul.f32 %v3850, %v3852
        %v3854 = vadd.f32 %v3850, %v3853
        %vm3855 = vweird.f32 %v3849
        %vm3856 = vweird.f32 %v3850
        %vm3857 = vmor %vm3855, %vm3856
        %v3858 = vsel %vm3857, %v3850, %v3854
        %v3859 = vand.u32 2147483647, %v3849
        %vm3860 = vcmp.eq.f32.partialorder %v3859, 8.507059e+37
        %v3861 = vand.u32 %v3849, 2147483648
        %v3862 = vor.u32 1.1754944e-38, %v3861
        %v3863 = vsel %vm3860, %v3862, %v3858
        %v3864 = vmul.f32 1.0, %v3863
        %v3865 = vld [vmem:[#allocation11] sm:$0xff]
        %v3866 = vld [vmem:[#allocation11 + $0x8] sm:$0xff]
        %v3867 = vld [vmem:[#allocation11 + $0x10] sm:$0xff]
        %v3868 = vld [vmem:[#allocation11 + $0x18] sm:$0xff]
        %v3869 = vld [vmem:[#allocation11 + $0x20] sm:$0xff]
        %v3870 = vld [vmem:[#allocation11 + $0x28] sm:$0xff]
        %v3871 = vld [vmem:[#allocation11 + $0x30] sm:$0xff]
        %v3872 = vld [vmem:[#allocation11 + $0x38] sm:$0xff]
        %v3873 = vld [vmem:[#allocation11 + $0x40] sm:$0xff]
        %v3874 = vld [vmem:[#allocation11 + $0x48] sm:$0xff]
        %v3875 = vld [vmem:[#allocation11 + $0x50] sm:$0xff]
        %v3876 = vld [vmem:[#allocation11 + $0x58] sm:$0xff]
        %v3877 = vld [vmem:[#allocation11 + $0x60] sm:$0xff]
        %v3878 = vld [vmem:[#allocation11 + $0x68] sm:$0xff]
        %v3879 = vld [vmem:[#allocation11 + $0x70] sm:$0xff]
        %v3880 = vld [vmem:[#allocation11 + $0x78] sm:$0xff]
        %v3881 = vld [vmem:[%s12] sm:$0x1]
        %3882 = vmatpush.msra.mxu0 %v3880
        %3883 = vmatpush.msra.mxu0 %v3879
        %3884 = vmatpush.msra.mxu0 %v3878
        %3885 = vmatpush.msra.mxu0 %v3877
        %3886 = vmatpush.msra.mxu0 %v3876
        %3887 = vmatpush.msra.mxu0 %v3875
        %3888 = vmatpush.msra.mxu0 %v3874
        %3889 = vmatpush.msra.mxu0 %v3873
        %3890 = vmatpush.msra.mxu0 %v3872
        %3891 = vmatpush.msra.mxu0 %v3871
        %3892 = vmatpush.msra.mxu0 %v3870
        %3893 = vmatpush.msra.mxu0 %v3869
        %3894 = vmatpush.msra.mxu0 %v3868
        %3895 = vmatpush.msra.mxu0 %v3867
        %3896 = vmatpush.msra.mxu0 %v3866
        %3897 = vmatpush.msra.mxu0 %v3865
        %3898 = vmatmul.f32.gmra.mxu0 %v3864
        %v3899 = vpop.f32.mrf.mxu0
        %v3900 = vadd.f32 %v3881, %v3899
        %3901 = vdwg.mxu0
        %v3902 = vsub.f32 0.0, %v3900
        %v3903 = vmul.f32 %v3902, 1.442695
        %v3904 = vpow.pop %v3903
        %v3905 = vadd.f32 %v3904, 1.0
        %v3906 = vrcp.pop %v3905
        %v3907 = vmul.f32 %v3905, %v3906
        %v3908 = vsub.f32 1.0, %v3907
        %v3909 = vmul.f32 %v3906, %v3908
        %v3910 = vadd.f32 %v3906, %v3909
        %vm3911 = vweird.f32 %v3905
        %vm3912 = vweird.f32 %v3906
        %vm3913 = vmor %vm3911, %vm3912
        %v3914 = vsel %vm3913, %v3906, %v3910
        %v3915 = vand.u32 2147483647, %v3905
        %vm3916 = vcmp.eq.f32.partialorder %v3915, 8.507059e+37
        %v3917 = vand.u32 %v3905, 2147483648
        %v3918 = vor.u32 1.1754944e-38, %v3917
        %v3919 = vsel %vm3916, %v3918, %v3914
        %v3920 = vmul.f32 1.0, %v3919
        %v3921 = vld [vmem:[#allocation12] sm:$0xff]
        %v3922 = vld [vmem:[#allocation12 + $0x8] sm:$0xff]
        %v3923 = vld [vmem:[#allocation12 + $0x10] sm:$0xff]
        %v3924 = vld [vmem:[#allocation12 + $0x18] sm:$0xff]
        %v3925 = vld [vmem:[#allocation12 + $0x20] sm:$0xff]
        %v3926 = vld [vmem:[#allocation12 + $0x28] sm:$0xff]
        %v3927 = vld [vmem:[#allocation12 + $0x30] sm:$0xff]
        %v3928 = vld [vmem:[#allocation12 + $0x38] sm:$0xff]
        %v3929 = vld [vmem:[#allocation12 + $0x40] sm:$0xff]
        %v3930 = vld [vmem:[#allocation12 + $0x48] sm:$0xff]
        %v3931 = vld [vmem:[#allocation12 + $0x50] sm:$0xff]
        %v3932 = vld [vmem:[#allocation12 + $0x58] sm:$0xff]
        %v3933 = vld [vmem:[#allocation12 + $0x60] sm:$0xff]
        %v3934 = vld [vmem:[#allocation12 + $0x68] sm:$0xff]
        %v3935 = vld [vmem:[#allocation12 + $0x70] sm:$0xff]
        %v3936 = vld [vmem:[#allocation12 + $0x78] sm:$0xff]
        %v3937 = vld [vmem:[%s14] sm:$0x1]
        %3938 = vmatpush.msra.mxu0 %v3936
        %3939 = vmatpush.msra.mxu0 %v3935
        %3940 = vmatpush.msra.mxu0 %v3934
        %3941 = vmatpush.msra.mxu0 %v3933
        %3942 = vmatpush.msra.mxu0 %v3932
        %3943 = vmatpush.msra.mxu0 %v3931
        %3944 = vmatpush.msra.mxu0 %v3930
        %3945 = vmatpush.msra.mxu0 %v3929
        %3946 = vmatpush.msra.mxu0 %v3928
        %3947 = vmatpush.msra.mxu0 %v3927
        %3948 = vmatpush.msra.mxu0 %v3926
        %3949 = vmatpush.msra.mxu0 %v3925
        %3950 = vmatpush.msra.mxu0 %v3924
        %3951 = vmatpush.msra.mxu0 %v3923
        %3952 = vmatpush.msra.mxu0 %v3922
        %3953 = vmatpush.msra.mxu0 %v3921
        %3954 = vmatmul.f32.gmra.mxu0 %v3920
        %v3955 = vpop.f32.mrf.mxu0
        %v3956 = vadd.f32 %v3937, %v3955
        %3957 = vdwg.mxu0
        %v3958 = vsub.f32 0.0, %v3956
        %v3959 = vmul.f32 %v3958, 1.442695
        %v3960 = vpow.pop %v3959
        %v3961 = vadd.f32 %v3960, 1.0
        %v3962 = vrcp.pop %v3961
        %v3963 = vmul.f32 %v3961, %v3962
        %v3964 = vsub.f32 1.0, %v3963
        %v3965 = vmul.f32 %v3962, %v3964
        %v3966 = vadd.f32 %v3962, %v3965
        %vm3967 = vweird.f32 %v3961
        %vm3968 = vweird.f32 %v3962
        %vm3969 = vmor %vm3967, %vm3968
        %v3970 = vsel %vm3969, %v3962, %v3966
        %v3971 = vand.u32 2147483647, %v3961
        %vm3972 = vcmp.eq.f32.partialorder %v3971, 8.507059e+37
        %v3973 = vand.u32 %v3961, 2147483648
        %v3974 = vor.u32 1.1754944e-38, %v3973
        %v3975 = vsel %vm3972, %v3974, %v3970
        %v3976 = vmul.f32 1.0, %v3975
        %v3977 = vld [vmem:[#allocation14] sm:$0xff]
        %v3978 = vld [vmem:[#allocation14 + $0x8] sm:$0xff]
        %v3979 = vld [vmem:[#allocation14 + $0x10] sm:$0xff]
        %v3980 = vld [vmem:[#allocation14 + $0x18] sm:$0xff]
        %v3981 = vld [vmem:[#allocation14 + $0x20] sm:$0xff]
        %v3982 = vld [vmem:[#allocation14 + $0x28] sm:$0xff]
        %v3983 = vld [vmem:[#allocation14 + $0x30] sm:$0xff]
        %v3984 = vld [vmem:[#allocation14 + $0x38] sm:$0xff]
        %v3985 = vld [vmem:[#allocation14 + $0x40] sm:$0xff]
        %v3986 = vld [vmem:[#allocation14 + $0x48] sm:$0xff]
        %v3987 = vld [vmem:[#allocation14 + $0x50] sm:$0xff]
        %v3988 = vld [vmem:[#allocation14 + $0x58] sm:$0xff]
        %v3989 = vld [vmem:[#allocation14 + $0x60] sm:$0xff]
        %v3990 = vld [vmem:[#allocation14 + $0x68] sm:$0xff]
        %v3991 = vld [vmem:[#allocation14 + $0x70] sm:$0xff]
        %v3992 = vld [vmem:[#allocation14 + $0x78] sm:$0xff]
        %v3993 = vld [vmem:[%s16] sm:$0x1]
        %3994 = vmatpush.msra.mxu0 %v3992
        %3995 = vmatpush.msra.mxu0 %v3991
        %3996 = vmatpush.msra.mxu0 %v3990
        %3997 = vmatpush.msra.mxu0 %v3989
        %3998 = vmatpush.msra.mxu0 %v3988
        %3999 = vmatpush.msra.mxu0 %v3987
        %4000 = vmatpush.msra.mxu0 %v3986
        %4001 = vmatpush.msra.mxu0 %v3985
        %4002 = vmatpush.msra.mxu0 %v3984
        %4003 = vmatpush.msra.mxu0 %v3983
        %4004 = vmatpush.msra.mxu0 %v3982
        %4005 = vmatpush.msra.mxu0 %v3981
        %4006 = vmatpush.msra.mxu0 %v3980
        %4007 = vmatpush.msra.mxu0 %v3979
        %4008 = vmatpush.msra.mxu0 %v3978
        %4009 = vmatpush.msra.mxu0 %v3977
        %4010 = vmatmul.f32.gmra.mxu0 %v3976
        %v4011 = vpop.f32.mrf.mxu0
        %v4012 = vadd.f32 %v3993, %v4011
        %4013 = vdwg.mxu0
        %vm4014 = vcmask 73728
        %4015 = vst.msk [vmem:[%s656] sm:$0x1] %vm4014, %v4012
        %s4016 = sand.u32 %s405, 1
        %s4017 = scalar_lea.sflag [#allocation5], %s4016
        %s4018 = sand.u32 %s405, 1
        %s4019 = scalar_lea.vmem [#allocation15], %s4018
        // Predicated region
        $region117: #{lenet_forward.1} parent=87 // pred_check
          %p4020 = pneg %p415
        $region118: #{lenet_forward.1} parent=87 // pred_check_branch
          %4022 = sbr.rel (%p4020) target = $region120
        $region119: #{lenet_forward.1} parent=87 // pred_region
          %4024 = vsyncadd %s4017, 0
          %s4025 = scalar_lea.hbm %s17, %s35
          %s4027 = sshll.u32 %s4019, 4
          %s4028 = int_to_ptr.vmem [resolvable:$true] %s4027
          %s4029 = sshll.u32 %s4025, 4
          %s4030 = int_to_ptr.hbm [resolvable:$true] %s4029
          %4032 = dma.vmem_to_hbm [thread:$0]  %s4028, 16, %s4030, %s4017
        $region120: #{lenet_forward.1} parent=87 // pred_fallthru
          _
      $region88: #{lenet_forward.1} parent=5 // pred_fallthru
        _
      %p4033 = scmp.le.s32.totalorder 2, %s30
      // Predicated region
      $region121: #{lenet_forward.1} parent=5 // pred_check
        %p4034 = pneg %p4033
      $region122: #{lenet_forward.1} parent=5 // pred_check_branch
        %4036 = sbr.rel (%p4034) target = $region124
      $region123: #{lenet_forward.1} parent=5 // pred_region
        %s4037 = ssub.s32 %s30, 2
        // Predicated region
        $region125: #{lenet_forward.1} parent=123 // pred_check
          %p4038 = pneg %p421
        $region126: #{lenet_forward.1} parent=123 // pred_check_branch
          %4040 = sbr.rel (%p4038) target = $region128
        $region127: #{lenet_forward.1} parent=123 // pred_region
          %s4041 = sand.u32 %s406, 1
          %s4042 = scalar_lea.sflag [#allocation5], %s4041
          %s4043 = sand.u32 %s406, 1
          %s4044 = scalar_lea.vmem [#allocation15], %s4043
          %4046 = dma.done %s4042, 16
        $region128: #{lenet_forward.1} parent=123 // pred_fallthru
          _
      $region124: #{lenet_forward.1} parent=5 // pred_fallthru
        _
    $region6: #{lenet_forward.1} parent=1 // loop_footer
      %s34 = sadd.s32 1, %s30
    $region7: #{lenet_forward.1} parent=1 // loop_footer_branch
      %29 = sbr.rel target = $region3
    $region8: #{lenet_forward.1} parent=1 // loop_exit
      _
    %4047 = vsyncpa [#allocation4], 1
    %s4048 = scalar_lea.sflag [#allocation4], 1
    %4049 = vsyncpa %s4048, 1
    %4050 = vsyncpa [#allocation7], 1
    %4051 = vsyncpa [#allocation10], 1
    %4052 = vsyncpa [#allocation13], 1
    %4053 = vsyncpa [#allocation5], 1
    %s4054 = scalar_lea.sflag [#allocation5], 1
    %4055 = vsyncpa %s4054, 1

</llo_original>
